<compile_context>
chip_gen: v6e
topology: v6e:2x2x1
jax: 0.10.0
libtpu: 0.0.40
codegen_flags: <defaults>
</compile_context>

<pallas_src>
import functools

import jax
import jax.numpy as jnp
from jax.experimental import pallas as pl
from jax.experimental.pallas import tpu as pltpu

K = 5                    # conv kernel size
PAD = 2                  # "same" padding (must equal K // 2 for flat-shift im2col)
HALO = 2 * PAD           # extra rows per side needed for the two chained convs
LANE = 128               # TPU lane width
SUBLANE_BF16 = 16        # bf16 sublane packing granularity


def _round_up(x, m):
    return (x + m - 1) // m * m


def _pick_row_tile(H, Wp, Cp):
    """Largest row tile with ~<=2048 flat lanes and <~40 MiB per-step VMEM."""
    def step_bytes(tr):
        np_t = _round_up((tr + 2 * HALO) * Wp, LANE)
        margin = _round_up(2 * Wp + 2, LANE)
        col = K * K * Cp * np_t * 2                   # bf16 im2col scratch
        ext = Cp * (np_t + 2 * margin) * 2            # bf16 shift-extended image
        io = 2 * 2 * Cp * np_t * 4                    # double-buffered x/out blocks
        return col + ext + io

    tr = max(1, min(H, 2048 // Wp - 2 * HALO))
    while tr > 1 and step_bytes(tr) > 40 * 2**20:
        tr = max(1, tr // 2)
    return tr


def _resblock_kernel(x_ref, w1_ref, b1_ref, w2_ref, b2_ref, mask_ref,
                     o_ref, ext_ref, col_ref, *, wp):
    """One (batch, row-tile) step of the residual block.

    x_ref   : (1, 1, Cp, NP_T) f32   zero-padded input tile (+4-row halos),
                                     flat spatial on lanes, lane-padded
    w1_ref  : (Cp, K*K*Cp)     bf16  conv1 weights, im2col (tap-major) order
    b1_ref  : (Cp, 1)          f32
    w2_ref  : (Cp, K*K*Cp)     bf16
    b2_ref  : (Cp, 1)          f32
    mask_ref: (1, 1, NP_T)     f32   1.0 where h1 is a real interior pixel
    o_ref   : (1, 1, Cp, NP_T) f32   output tile, same flat layout
    ext_ref : (Cp, NP_T+2*M)   bf16  scratch: shift-extended image (M = margin)
    col_ref : (K*K*Cp, NP_T)   bf16  scratch: im2col matrix
    """
    Cp = x_ref.shape[2]
    np_t = x_ref.shape[3]
    margin = (ext_ref.shape[1] - np_t) // 2           # multiple of 128

    # Re-zero only the two thin shift margins; the interior is fully
    # overwritten below every step.  (Not under pl.when(program_id==0):
    # with "parallel" semantics each TensorCore has its own scratch and may
    # never see step 0.)  Both writes are lane-aligned / unmasked.
    zeros_margin = jnp.zeros((Cp, margin), ext_ref.dtype)
    ext_ref[:, :margin] = zeros_margin
    ext_ref[:, margin + np_t:] = zeros_margin

    x = x_ref[0, 0]                                   # (Cp, NP_T) f32
    mask = mask_ref[0]                                # (1, NP_T)  f32

    def conv5x5(w_ref):
        # im2col: tap (kh, kw) == constant lane shift (kh-2)*Wp + (kw-2) in
        # flat-padded coordinates, so each row-block is a plain static
        # lane-offset slice of the extended image.  Stores are full NP_T
        # lanes at sublane offsets that are multiples of the bf16 pack.
        for kh in range(K):
            for kw in range(K):
                t = kh * K + kw
                start = margin + (kh - PAD) * wp + (kw - PAD)
                col_ref[t * Cp:(t + 1) * Cp, :] = ext_ref[:, start:start + np_t]
        # Single fused MXU matmul: bf16 operands, f32 accumulation.
        return jnp.dot(w_ref[...], col_ref[...],
                       preferred_element_type=jnp.float32)   # (Cp, NP_T)

    # ---- conv1 + bias + ReLU; mask forces pad rows/cols (and lane-pad tail)
    #      to zero so conv2 sees proper zero padding ----
    ext_ref[:, margin:margin + np_t] = x.astype(ext_ref.dtype)
    h1 = jnp.maximum(conv5x5(w1_ref) + b1_ref[...], 0.0) * mask

    # ---- conv2 + bias + ReLU ----
    ext_ref[:, margin:margin + np_t] = h1.astype(ext_ref.dtype)
    h2 = jnp.maximum(conv5x5(w2_ref) + b2_ref[...], 0.0)

    # ---- residual add + final ReLU.  Halo rows / pad lanes hold junk; the
    #      wrapper slices them off (do not read the raw tile output). ----
    o_ref[0, 0] = jnp.maximum(h2 + x, 0.0).astype(o_ref.dtype)


@functools.partial(jax.jit, static_argnames=("row_tile",))
def conv2d_resblock(x_nchw, w1_oihw, b1, w2_oihw, b2, *, row_tile=None):
    """x_nchw: (B, C, H, W) float32; weights in PyTorch OIHW layout."""
    assert PAD == K // 2, "flat-shift im2col requires 'same' padding (PAD == K//2)"
    B, Cin, H, W = x_nchw.shape
    Cmid, Cout = w1_oihw.shape[0], w2_oihw.shape[0]
    # The residual add in the module silently requires matching channels.
    assert Cin == Cmid == Cout, "Conv2dResBlock residual needs in_ch == out_ch"
    C = Cin

    # ---- padded sizes ----
    Cp = _round_up(max(C, SUBLANE_BF16), SUBLANE_BF16)    # bf16 sublane pack
    Wp = W + 2 * PAD
    if row_tile is None:
        row_tile = _pick_row_tile(H, Wp, Cp)
    Tr = max(1, min(int(row_tile), H))
    nt = -(-H // Tr)                                      # row tiles per image
    Hrt = nt * Tr                                         # H rounded up to tiles
    rows_t = Tr + 2 * HALO                                # rows per tile incl. halo
    flat = rows_t * Wp                                    # real flat lanes per tile
    np_t = _round_up(flat, LANE)                          # lane-padded tile width
    margin = _round_up(2 * Wp + 2, LANE)                  # ext shift margin
    kkc = K * K * Cp

    # ---- wrapper-side layout glue (plain XLA) ----
    # Extra-padded image: 4 zero rows / 2 zero cols on each side, Cp channels.
    Hext = Hrt + 2 * HALO
    x_ext = jnp.zeros((B, Cp, Hext, Wp), jnp.float32)
    x_ext = x_ext.at[:, :C, HALO:HALO + H, PAD:PAD + W].set(
        x_nchw.astype(jnp.float32))

    # Halo'd row tiles: tile r covers extra-padded rows [r*Tr, r*Tr + Tr + 8).
    row_idx = jnp.arange(nt)[:, None] * Tr + jnp.arange(rows_t)[None, :]
    x_tiles = x_ext[:, :, row_idx, :]                     # (B, Cp, nt, rows_t, Wp)
    x_tiles = jnp.transpose(x_tiles, (0, 2, 1, 3, 4)).reshape(B, nt, Cp, flat)
    x_tiles = jnp.pad(x_tiles, ((0, 0), (0, 0), (0, 0), (0, np_t - flat)))

    # h1 interior mask per tile (zero on pad rows, pad cols and lane-pad tail).
    row_ok = (row_idx >= HALO) & (row_idx < HALO + H)     # (nt, rows_t)
    col_ok = (jnp.arange(Wp) >= PAD) & (jnp.arange(Wp) < PAD + W)
    mask = (row_ok[:, :, None] & col_ok[None, None, :]).astype(jnp.float32)
    mask = mask.reshape(nt, 1, flat)
    mask = jnp.pad(mask, ((0, 0), (0, 0), (0, np_t - flat)))

    # OIHW -> (O, kh, kw, I) -> channel-pad -> (Cp, K*K*Cp): matches im2col
    # row index t*Cp + c.  Zero rows/cols keep the padded channels inert.
    def prep_w(w):
        w = jnp.transpose(w, (0, 2, 3, 1))
        w = jnp.pad(w, ((0, Cp - C), (0, 0), (0, 0), (0, Cp - C)))
        return w.reshape(Cp, kkc).astype(jnp.bfloat16)

    w1f, w2f = prep_w(w1_oihw), prep_w(w2_oihw)
    b1c = jnp.pad(b1.astype(jnp.float32), (0, Cp - C)).reshape(Cp, 1)
    b2c = jnp.pad(b2.astype(jnp.float32), (0, Cp - C)).reshape(Cp, 1)

    # ---- per-step VMEM budget -> explicit scoped-VMEM limit (v7x-safe) ----
    step_bytes = (kkc * np_t * 2 + Cp * (np_t + 2 * margin) * 2
                  + 2 * 2 * Cp * np_t * 4 + 2 * Cp * kkc * 2 + 2 * np_t * 4)
    vmem_limit = int(min(max(2 * step_bytes + (8 << 20), 32 << 20), 64 << 20))

    flops = 2 * (2 * Cp * kkc * np_t) * B * nt
    bytes_accessed = (x_tiles.size * 4 + B * nt * Cp * np_t * 4
                      + (w1f.size + w2f.size) * 2 + mask.size * 4
                      + (b1c.size + b2c.size) * 4)

    kernel = functools.partial(_resblock_kernel, wp=Wp)

    out_tiles = pl.pallas_call(
        kernel,
        out_shape=jax.ShapeDtypeStruct((B, nt, Cp, np_t), jnp.float32),
        grid_spec=pltpu.PrefetchScalarGridSpec(
            num_scalar_prefetch=0,
            grid=(B, nt),
            in_specs=[
                pl.BlockSpec((1, 1, Cp, np_t), lambda b, r: (b, r, 0, 0)),   # x
                pl.BlockSpec((Cp, kkc), lambda b, r: (0, 0)),                # w1
                pl.BlockSpec((Cp, 1), lambda b, r: (0, 0)),                  # b1
                pl.BlockSpec((Cp, kkc), lambda b, r: (0, 0)),                # w2
                pl.BlockSpec((Cp, 1), lambda b, r: (0, 0)),                  # b2
                pl.BlockSpec((1, 1, np_t), lambda b, r: (r, 0, 0)),          # mask
            ],
            out_specs=pl.BlockSpec((1, 1, Cp, np_t), lambda b, r: (b, r, 0, 0)),
            scratch_shapes=[
                pltpu.VMEM((Cp, np_t + 2 * margin), jnp.bfloat16),  # ext image
                pltpu.VMEM((kkc, np_t), jnp.bfloat16),              # im2col
            ],
        ),
        compiler_params=pltpu.CompilerParams(
            dimension_semantics=("parallel", "parallel"),
            vmem_limit_bytes=vmem_limit),
        cost_estimate=pl.CostEstimate(
            flops=int(flops), transcendentals=0,
            bytes_accessed=int(bytes_accessed)),
    )(x_tiles, w1f, b1c, w2f, b2c, mask)

    # Interior extraction (drop channel pad, lane-pad tail, halo rows, pad
    # cols, and row-tile round-up) + NCHW layout -- wrapper glue.
    out = out_tiles[:, :, :C, :flat].reshape(B, nt, C, rows_t, Wp)
    out = out[:, :, :, HALO:HALO + Tr, PAD:PAD + W]        # (B, nt, C, Tr, W)
    out = jnp.transpose(out, (0, 2, 1, 3, 4)).reshape(B, C, Hrt, W)[:, :, :H, :]
    return out


def _reference(x_nchw, w1, b1, w2, b2):
    dn = ("NCHW", "OIHW", "NCHW")
    y = jax.lax.conv_general_dilated(x_nchw, w1, (1, 1),
                                     ((PAD, PAD), (PAD, PAD)),
                                     dimension_numbers=dn)
    y = jax.nn.relu(y + b1[None, :, None, None])
    y = jax.lax.conv_general_dilated(y, w2, (1, 1),
                                     ((PAD, PAD), (PAD, PAD)),
                                     dimension_numbers=dn)
    y = jax.nn.relu(y + b2[None, :, None, None])
    return jax.nn.relu(y + x_nchw)


if __name__ == "__main__":
    # Residual add requires in_channel == out_channel; pick small channels.
    B, C, H, W = 2, 8, 16, 16

    key = jax.random.PRNGKey(0)
    kx, kw1, kb1, kw2, kb2 = jax.random.split(key, 5)
    x = jax.random.normal(kx, (B, C, H, W), jnp.float32)
    # PyTorch Conv2d layout: (out_ch, in_ch, kh, kw)
    w1 = jax.random.normal(kw1, (C, C, K, K), jnp.float32) * 0.05
    b1 = jax.random.normal(kb1, (C,), jnp.float32) * 0.05
    w2 = jax.random.normal(kw2, (C, C, K, K), jnp.float32) * 0.05
    b2 = jax.random.normal(kb2, (C,), jnp.float32) * 0.05

    # row_tile=6 forces 3 row tiles per image (H=16), exercising the halo'd
    # row-tile grid axis and the non-divisible-H path at demo sizes.
    out = conv2d_resblock(x, w1, b1, w2, b2, row_tile=6)
    out = jax.block_until_ready(out)

    ref = _reference(x, w1, b1, w2, b2)
    assert out.shape == (B, C, H, W)
    # Tolerance loosened vs. the f32 reference because the MXU matmuls use
    # bf16 operands (f32 accumulation) and h1 round-trips through bf16.
    assert jnp.allclose(out, ref, atol=5e-2, rtol=5e-2), (
        float(jnp.max(jnp.abs(out - ref))))

    print("KERNEL_OK")
</pallas_src>

<mosaic_0001>
module attributes {stable_mosaic.version = 11 : i64} {
  func.func @_resblock_kernel(%arg0: i32, %arg1: i32, %arg2: memref<1x1x16x384xf32, #tpu.memory_space<vmem>>, %arg3: memref<16x400xbf16, #tpu.memory_space<vmem>>, %arg4: memref<16x1xf32, #tpu.memory_space<vmem>>, %arg5: memref<16x400xbf16, #tpu.memory_space<vmem>>, %arg6: memref<16x1xf32, #tpu.memory_space<vmem>>, %arg7: memref<1x1x384xf32, #tpu.memory_space<vmem>>, %arg8: memref<1x1x16x384xf32, #tpu.memory_space<vmem>>, %arg9: memref<16x640xbf16, #tpu.memory_space<vmem>>, %arg10: memref<400x384xbf16, #tpu.memory_space<vmem>>) attributes {dimension_semantics = [#tpu.dimension_semantics<parallel>, #tpu.dimension_semantics<parallel>], iteration_bounds = array<i64: 2, 3>, scalar_prefetch = 0 : i64, scratch_operands = 2 : i64, tpu.core_type = #tpu.core_type<tc>, window_params = [{transform_indices = @transform_0, window_bounds = array<i64: 1, 1, 16, 384>}, {pipeline_mode = #tpu.pipeline_mode<synchronous>, transform_indices = @transform_1, window_bounds = array<i64: 16, 400>}, {pipeline_mode = #tpu.pipeline_mode<synchronous>, transform_indices = @transform_2, window_bounds = array<i64: 16, 1>}, {pipeline_mode = #tpu.pipeline_mode<synchronous>, transform_indices = @transform_3, window_bounds = array<i64: 16, 400>}, {pipeline_mode = #tpu.pipeline_mode<synchronous>, transform_indices = @transform_4, window_bounds = array<i64: 16, 1>}, {transform_indices = @transform_5, window_bounds = array<i64: 1, 1, 384>}, {transform_indices = @transform_6, window_bounds = array<i64: 1, 1, 16, 384>}]} {
    %cst = arith.constant 0.000000e+00 : bf16
    %0 = vector.broadcast %cst : bf16 to vector<16x128xbf16>
    %c0 = arith.constant 0 : index
    %c0_0 = arith.constant 0 : index
    %1 = vector.load %arg9[%c0, %c0_0] : memref<16x640xbf16, #tpu.memory_space<vmem>>, vector<16x128xbf16>
    tpu.vector_store %arg9[%c0, %c0_0], %0 {strides = array<i32>} : memref<16x640xbf16, #tpu.memory_space<vmem>>, vector<16x128xbf16>,
    %c0_1 = arith.constant 0 : index
    %c512 = arith.constant 512 : index
    %2 = vector.load %arg9[%c0_1, %c512] : memref<16x640xbf16, #tpu.memory_space<vmem>>, vector<16x128xbf16>
    tpu.vector_store %arg9[%c0_1, %c512], %0 {strides = array<i32>} : memref<16x640xbf16, #tpu.memory_space<vmem>>, vector<16x128xbf16>,
    %c0_2 = arith.constant 0 : index
    %c0_3 = arith.constant 0 : index
    %c0_4 = arith.constant 0 : index
    %c0_5 = arith.constant 0 : index
    %3 = vector.load %arg2[%c0_2, %c0_3, %c0_4, %c0_5] : memref<1x1x16x384xf32, #tpu.memory_space<vmem>>, vector<1x1x16x384xf32>
    %4 = vector.shape_cast %3 : vector<1x1x16x384xf32> to vector<16x384xf32>
    %c0_6 = arith.constant 0 : index
    %c0_7 = arith.constant 0 : index
    %c0_8 = arith.constant 0 : index
    %5 = vector.load %arg7[%c0_6, %c0_7, %c0_8] : memref<1x1x384xf32, #tpu.memory_space<vmem>>, vector<1x1x384xf32>
    %6 = vector.shape_cast %5 : vector<1x1x384xf32> to vector<1x384xf32>
    %7 = arith.truncf %4 : vector<16x384xf32> to vector<16x384xbf16>
    %c0_9 = arith.constant 0 : index
    %c128 = arith.constant 128 : index
    %8 = vector.load %arg9[%c0_9, %c128] : memref<16x640xbf16, #tpu.memory_space<vmem>>, vector<16x384xbf16>
    tpu.vector_store %arg9[%c0_9, %c128], %7 {strides = array<i32>} : memref<16x640xbf16, #tpu.memory_space<vmem>>, vector<16x384xbf16>,
    %c0_10 = arith.constant 0 : index
    %c86 = arith.constant 86 : index
    %9 = vector.load %arg9[%c0_10, %c86] : memref<16x640xbf16, #tpu.memory_space<vmem>>, vector<16x384xbf16>
    %c0_11 = arith.constant 0 : index
    %c0_12 = arith.constant 0 : index
    %10 = vector.load %arg10[%c0_11, %c0_12] : memref<400x384xbf16, #tpu.memory_space<vmem>>, vector<16x384xbf16>
    tpu.vector_store %arg10[%c0_11, %c0_12], %9 {strides = array<i32>} : memref<400x384xbf16, #tpu.memory_space<vmem>>, vector<16x384xbf16>,
    %c0_13 = arith.constant 0 : index
    %c87 = arith.constant 87 : index
    %11 = vector.load %arg9[%c0_13, %c87] : memref<16x640xbf16, #tpu.memory_space<vmem>>, vector<16x384xbf16>
    %c16 = arith.constant 16 : index
    %c0_14 = arith.constant 0 : index
    %12 = vector.load %arg10[%c16, %c0_14] : memref<400x384xbf16, #tpu.memory_space<vmem>>, vector<16x384xbf16>
    tpu.vector_store %arg10[%c16, %c0_14], %11 {strides = array<i32>} : memref<400x384xbf16, #tpu.memory_space<vmem>>, vector<16x384xbf16>,
    %c0_15 = arith.constant 0 : index
    %c88 = arith.constant 88 : index
    %13 = vector.load %arg9[%c0_15, %c88] : memref<16x640xbf16, #tpu.memory_space<vmem>>, vector<16x384xbf16>
    %c32 = arith.constant 32 : index
    %c0_16 = arith.constant 0 : index
    %14 = vector.load %arg10[%c32, %c0_16] : memref<400x384xbf16, #tpu.memory_space<vmem>>, vector<16x384xbf16>
    tpu.vector_store %arg10[%c32, %c0_16], %13 {strides = array<i32>} : memref<400x384xbf16, #tpu.memory_space<vmem>>, vector<16x384xbf16>,
    %c0_17 = arith.constant 0 : index
    %c89 = arith.constant 89 : index
    %15 = vector.load %arg9[%c0_17, %c89] : memref<16x640xbf16, #tpu.memory_space<vmem>>, vector<16x384xbf16>
    %c48 = arith.constant 48 : index
    %c0_18 = arith.constant 0 : index
    %16 = vector.load %arg10[%c48, %c0_18] : memref<400x384xbf16, #tpu.memory_space<vmem>>, vector<16x384xbf16>
    tpu.vector_store %arg10[%c48, %c0_18], %15 {strides = array<i32>} : memref<400x384xbf16, #tpu.memory_space<vmem>>, vector<16x384xbf16>,
    %c0_19 = arith.constant 0 : index
    %c90 = arith.constant 90 : index
    %17 = vector.load %arg9[%c0_19, %c90] : memref<16x640xbf16, #tpu.memory_space<vmem>>, vector<16x384xbf16>
    %c64 = arith.constant 64 : index
    %c0_20 = arith.constant 0 : index
    %18 = vector.load %arg10[%c64, %c0_20] : memref<400x384xbf16, #tpu.memory_space<vmem>>, vector<16x384xbf16>
    tpu.vector_store %arg10[%c64, %c0_20], %17 {strides = array<i32>} : memref<400x384xbf16, #tpu.memory_space<vmem>>, vector<16x384xbf16>,
    %c0_21 = arith.constant 0 : index
    %c106 = arith.constant 106 : index
    %19 = vector.load %arg9[%c0_21, %c106] : memref<16x640xbf16, #tpu.memory_space<vmem>>, vector<16x384xbf16>
    %c80 = arith.constant 80 : index
    %c0_22 = arith.constant 0 : index
    %20 = vector.load %arg10[%c80, %c0_22] : memref<400x384xbf16, #tpu.memory_space<vmem>>, vector<16x384xbf16>
    tpu.vector_store %arg10[%c80, %c0_22], %19 {strides = array<i32>} : memref<400x384xbf16, #tpu.memory_space<vmem>>, vector<16x384xbf16>,
    %c0_23 = arith.constant 0 : index
    %c107 = arith.constant 107 : index
    %21 = vector.load %arg9[%c0_23, %c107] : memref<16x640xbf16, #tpu.memory_space<vmem>>, vector<16x384xbf16>
    %c96 = arith.constant 96 : index
    %c0_24 = arith.constant 0 : index
    %22 = vector.load %arg10[%c96, %c0_24] : memref<400x384xbf16, #tpu.memory_space<vmem>>, vector<16x384xbf16>
    tpu.vector_store %arg10[%c96, %c0_24], %21 {strides = array<i32>} : memref<400x384xbf16, #tpu.memory_space<vmem>>, vector<16x384xbf16>,
    %c0_25 = arith.constant 0 : index
    %c108 = arith.constant 108 : index
    %23 = vector.load %arg9[%c0_25, %c108] : memref<16x640xbf16, #tpu.memory_space<vmem>>, vector<16x384xbf16>
    %c112 = arith.constant 112 : index
    %c0_26 = arith.constant 0 : index
    %24 = vector.load %arg10[%c112, %c0_26] : memref<400x384xbf16, #tpu.memory_space<vmem>>, vector<16x384xbf16>
    tpu.vector_store %arg10[%c112, %c0_26], %23 {strides = array<i32>} : memref<400x384xbf16, #tpu.memory_space<vmem>>, vector<16x384xbf16>,
    %c0_27 = arith.constant 0 : index
    %c109 = arith.constant 109 : index
    %25 = vector.load %arg9[%c0_27, %c109] : memref<16x640xbf16, #tpu.memory_space<vmem>>, vector<16x384xbf16>
    %c128_28 = arith.constant 128 : index
    %c0_29 = arith.constant 0 : index
    %26 = vector.load %arg10[%c128_28, %c0_29] : memref<400x384xbf16, #tpu.memory_space<vmem>>, vector<16x384xbf16>
    tpu.vector_store %arg10[%c128_28, %c0_29], %25 {strides = array<i32>} : memref<400x384xbf16, #tpu.memory_space<vmem>>, vector<16x384xbf16>,
    %c0_30 = arith.constant 0 : index
    %c110 = arith.constant 110 : index
    %27 = vector.load %arg9[%c0_30, %c110] : memref<16x640xbf16, #tpu.memory_space<vmem>>, vector<16x384xbf16>
    %c144 = arith.constant 144 : index
    %c0_31 = arith.constant 0 : index
    %28 = vector.load %arg10[%c144, %c0_31] : memref<400x384xbf16, #tpu.memory_space<vmem>>, vector<16x384xbf16>
    tpu.vector_store %arg10[%c144, %c0_31], %27 {strides = array<i32>} : memref<400x384xbf16, #tpu.memory_space<vmem>>, vector<16x384xbf16>,
    %c0_32 = arith.constant 0 : index
    %c126 = arith.constant 126 : index
    %29 = vector.load %arg9[%c0_32, %c126] : memref<16x640xbf16, #tpu.memory_space<vmem>>, vector<16x384xbf16>
    %c160 = arith.constant 160 : index
    %c0_33 = arith.constant 0 : index
    %30 = vector.load %arg10[%c160, %c0_33] : memref<400x384xbf16, #tpu.memory_space<vmem>>, vector<16x384xbf16>
    tpu.vector_store %arg10[%c160, %c0_33], %29 {strides = array<i32>} : memref<400x384xbf16, #tpu.memory_space<vmem>>, vector<16x384xbf16>,
    %c0_34 = arith.constant 0 : index
    %c127 = arith.constant 127 : index
    %31 = vector.load %arg9[%c0_34, %c127] : memref<16x640xbf16, #tpu.memory_space<vmem>>, vector<16x384xbf16>
    %c176 = arith.constant 176 : index
    %c0_35 = arith.constant 0 : index
    %32 = vector.load %arg10[%c176, %c0_35] : memref<400x384xbf16, #tpu.memory_space<vmem>>, vector<16x384xbf16>
    tpu.vector_store %arg10[%c176, %c0_35], %31 {strides = array<i32>} : memref<400x384xbf16, #tpu.memory_space<vmem>>, vector<16x384xbf16>,
    %c0_36 = arith.constant 0 : index
    %c128_37 = arith.constant 128 : index
    %33 = vector.load %arg9[%c0_36, %c128_37] : memref<16x640xbf16, #tpu.memory_space<vmem>>, vector<16x384xbf16>
    %c192 = arith.constant 192 : index
    %c0_38 = arith.constant 0 : index
    %34 = vector.load %arg10[%c192, %c0_38] : memref<400x384xbf16, #tpu.memory_space<vmem>>, vector<16x384xbf16>
    tpu.vector_store %arg10[%c192, %c0_38], %33 {strides = array<i32>} : memref<400x384xbf16, #tpu.memory_space<vmem>>, vector<16x384xbf16>,
    %c0_39 = arith.constant 0 : index
    %c129 = arith.constant 129 : index
    %35 = vector.load %arg9[%c0_39, %c129] : memref<16x640xbf16, #tpu.memory_space<vmem>>, vector<16x384xbf16>
    %c208 = arith.constant 208 : index
    %c0_40 = arith.constant 0 : index
    %36 = vector.load %arg10[%c208, %c0_40] : memref<400x384xbf16, #tpu.memory_space<vmem>>, vector<16x384xbf16>
    tpu.vector_store %arg10[%c208, %c0_40], %35 {strides = array<i32>} : memref<400x384xbf16, #tpu.memory_space<vmem>>, vector<16x384xbf16>,
    %c0_41 = arith.constant 0 : index
    %c130 = arith.constant 130 : index
    %37 = vector.load %arg9[%c0_41, %c130] : memref<16x640xbf16, #tpu.memory_space<vmem>>, vector<16x384xbf16>
    %c224 = arith.constant 224 : index
    %c0_42 = arith.constant 0 : index
    %38 = vector.load %arg10[%c224, %c0_42] : memref<400x384xbf16, #tpu.memory_space<vmem>>, vector<16x384xbf16>
    tpu.vector_store %arg10[%c224, %c0_42], %37 {strides = array<i32>} : memref<400x384xbf16, #tpu.memory_space<vmem>>, vector<16x384xbf16>,
    %c0_43 = arith.constant 0 : index
    %c146 = arith.constant 146 : index
    %39 = vector.load %arg9[%c0_43, %c146] : memref<16x640xbf16, #tpu.memory_space<vmem>>, vector<16x384xbf16>
    %c240 = arith.constant 240 : index
    %c0_44 = arith.constant 0 : index
    %40 = vector.load %arg10[%c240, %c0_44] : memref<400x384xbf16, #tpu.memory_space<vmem>>, vector<16x384xbf16>
    tpu.vector_store %arg10[%c240, %c0_44], %39 {strides = array<i32>} : memref<400x384xbf16, #tpu.memory_space<vmem>>, vector<16x384xbf16>,
    %c0_45 = arith.constant 0 : index
    %c147 = arith.constant 147 : index
    %41 = vector.load %arg9[%c0_45, %c147] : memref<16x640xbf16, #tpu.memory_space<vmem>>, vector<16x384xbf16>
    %c256 = arith.constant 256 : index
    %c0_46 = arith.constant 0 : index
    %42 = vector.load %arg10[%c256, %c0_46] : memref<400x384xbf16, #tpu.memory_space<vmem>>, vector<16x384xbf16>
    tpu.vector_store %arg10[%c256, %c0_46], %41 {strides = array<i32>} : memref<400x384xbf16, #tpu.memory_space<vmem>>, vector<16x384xbf16>,
    %c0_47 = arith.constant 0 : index
    %c148 = arith.constant 148 : index
    %43 = vector.load %arg9[%c0_47, %c148] : memref<16x640xbf16, #tpu.memory_space<vmem>>, vector<16x384xbf16>
    %c272 = arith.constant 272 : index
    %c0_48 = arith.constant 0 : index
    %44 = vector.load %arg10[%c272, %c0_48] : memref<400x384xbf16, #tpu.memory_space<vmem>>, vector<16x384xbf16>
    tpu.vector_store %arg10[%c272, %c0_48], %43 {strides = array<i32>} : memref<400x384xbf16, #tpu.memory_space<vmem>>, vector<16x384xbf16>,
    %c0_49 = arith.constant 0 : index
    %c149 = arith.constant 149 : index
    %45 = vector.load %arg9[%c0_49, %c149] : memref<16x640xbf16, #tpu.memory_space<vmem>>, vector<16x384xbf16>
    %c288 = arith.constant 288 : index
    %c0_50 = arith.constant 0 : index
    %46 = vector.load %arg10[%c288, %c0_50] : memref<400x384xbf16, #tpu.memory_space<vmem>>, vector<16x384xbf16>
    tpu.vector_store %arg10[%c288, %c0_50], %45 {strides = array<i32>} : memref<400x384xbf16, #tpu.memory_space<vmem>>, vector<16x384xbf16>,
    %c0_51 = arith.constant 0 : index
    %c150 = arith.constant 150 : index
    %47 = vector.load %arg9[%c0_51, %c150] : memref<16x640xbf16, #tpu.memory_space<vmem>>, vector<16x384xbf16>
    %c304 = arith.constant 304 : index
    %c0_52 = arith.constant 0 : index
    %48 = vector.load %arg10[%c304, %c0_52] : memref<400x384xbf16, #tpu.memory_space<vmem>>, vector<16x384xbf16>
    tpu.vector_store %arg10[%c304, %c0_52], %47 {strides = array<i32>} : memref<400x384xbf16, #tpu.memory_space<vmem>>, vector<16x384xbf16>,
    %c0_53 = arith.constant 0 : index
    %c166 = arith.constant 166 : index
    %49 = vector.load %arg9[%c0_53, %c166] : memref<16x640xbf16, #tpu.memory_space<vmem>>, vector<16x384xbf16>
    %c320 = arith.constant 320 : index
    %c0_54 = arith.constant 0 : index
    %50 = vector.load %arg10[%c320, %c0_54] : memref<400x384xbf16, #tpu.memory_space<vmem>>, vector<16x384xbf16>
    tpu.vector_store %arg10[%c320, %c0_54], %49 {strides = array<i32>} : memref<400x384xbf16, #tpu.memory_space<vmem>>, vector<16x384xbf16>,
    %c0_55 = arith.constant 0 : index
    %c167 = arith.constant 167 : index
    %51 = vector.load %arg9[%c0_55, %c167] : memref<16x640xbf16, #tpu.memory_space<vmem>>, vector<16x384xbf16>
    %c336 = arith.constant 336 : index
    %c0_56 = arith.constant 0 : index
    %52 = vector.load %arg10[%c336, %c0_56] : memref<400x384xbf16, #tpu.memory_space<vmem>>, vector<16x384xbf16>
    tpu.vector_store %arg10[%c336, %c0_56], %51 {strides = array<i32>} : memref<400x384xbf16, #tpu.memory_space<vmem>>, vector<16x384xbf16>,
    %c0_57 = arith.constant 0 : index
    %c168 = arith.constant 168 : index
    %53 = vector.load %arg9[%c0_57, %c168] : memref<16x640xbf16, #tpu.memory_space<vmem>>, vector<16x384xbf16>
    %c352 = arith.constant 352 : index
    %c0_58 = arith.constant 0 : index
    %54 = vector.load %arg10[%c352, %c0_58] : memref<400x384xbf16, #tpu.memory_space<vmem>>, vector<16x384xbf16>
    tpu.vector_store %arg10[%c352, %c0_58], %53 {strides = array<i32>} : memref<400x384xbf16, #tpu.memory_space<vmem>>, vector<16x384xbf16>,
    %c0_59 = arith.constant 0 : index
    %c169 = arith.constant 169 : index
    %55 = vector.load %arg9[%c0_59, %c169] : memref<16x640xbf16, #tpu.memory_space<vmem>>, vector<16x384xbf16>
    %c368 = arith.constant 368 : index
    %c0_60 = arith.constant 0 : index
    %56 = vector.load %arg10[%c368, %c0_60] : memref<400x384xbf16, #tpu.memory_space<vmem>>, vector<16x384xbf16>
    tpu.vector_store %arg10[%c368, %c0_60], %55 {strides = array<i32>} : memref<400x384xbf16, #tpu.memory_space<vmem>>, vector<16x384xbf16>,
    %c0_61 = arith.constant 0 : index
    %c170 = arith.constant 170 : index
    %57 = vector.load %arg9[%c0_61, %c170] : memref<16x640xbf16, #tpu.memory_space<vmem>>, vector<16x384xbf16>
    %c384 = arith.constant 384 : index
    %c0_62 = arith.constant 0 : index
    %58 = vector.load %arg10[%c384, %c0_62] : memref<400x384xbf16, #tpu.memory_space<vmem>>, vector<16x384xbf16>
    tpu.vector_store %arg10[%c384, %c0_62], %57 {strides = array<i32>} : memref<400x384xbf16, #tpu.memory_space<vmem>>, vector<16x384xbf16>,
    %c0_63 = arith.constant 0 : index
    %c0_64 = arith.constant 0 : index
    %59 = vector.load %arg3[%c0_63, %c0_64] : memref<16x400xbf16, #tpu.memory_space<vmem>>, vector<16x400xbf16>
    %c0_65 = arith.constant 0 : index
    %c0_66 = arith.constant 0 : index
    %60 = vector.load %arg10[%c0_65, %c0_66] : memref<400x384xbf16, #tpu.memory_space<vmem>>, vector<400x384xbf16>
    %cst_67 = arith.constant dense<0.000000e+00> : vector<16x384xf32>
    %61 = tpu.matmul %59, %60, %cst_67 {dimension_numbers = #tpu.dot_dimension_numbers<[1], [0], [0], [1], [0, 0, 1, 1], [], []>} : vector<16x400xbf16>, vector<400x384xbf16>, vector<16x384xf32> -> vector<16x384xf32>
    %c0_68 = arith.constant 0 : index
    %c0_69 = arith.constant 0 : index
    %62 = vector.load %arg4[%c0_68, %c0_69] : memref<16x1xf32, #tpu.memory_space<vmem>>, vector<16x1xf32>
    %63 = vector.broadcast %62 : vector<16x1xf32> to vector<16x384xf32>
    %64 = arith.addf %61, %63 : vector<16x384xf32>
    %cst_70 = arith.constant 0.000000e+00 : f32
    %65 = vector.broadcast %cst_70 : f32 to vector<16x384xf32>
    %66 = arith.maximumf %64, %65 : vector<16x384xf32>
    %67 = vector.broadcast %6 : vector<1x384xf32> to vector<16x384xf32>
    %68 = arith.mulf %66, %67 : vector<16x384xf32>
    %69 = arith.truncf %68 : vector<16x384xf32> to vector<16x384xbf16>
    %c0_71 = arith.constant 0 : index
    %c128_72 = arith.constant 128 : index
    %70 = vector.load %arg9[%c0_71, %c128_72] : memref<16x640xbf16, #tpu.memory_space<vmem>>, vector<16x384xbf16>
    tpu.vector_store %arg9[%c0_71, %c128_72], %69 {strides = array<i32>} : memref<16x640xbf16, #tpu.memory_space<vmem>>, vector<16x384xbf16>,
    %c0_73 = arith.constant 0 : index
    %c86_74 = arith.constant 86 : index
    %71 = vector.load %arg9[%c0_73, %c86_74] : memref<16x640xbf16, #tpu.memory_space<vmem>>, vector<16x384xbf16>
    %c0_75 = arith.constant 0 : index
    %c0_76 = arith.constant 0 : index
    %72 = vector.load %arg10[%c0_75, %c0_76] : memref<400x384xbf16, #tpu.memory_space<vmem>>, vector<16x384xbf16>
    tpu.vector_store %arg10[%c0_75, %c0_76], %71 {strides = array<i32>} : memref<400x384xbf16, #tpu.memory_space<vmem>>, vector<16x384xbf16>,
    %c0_77 = arith.constant 0 : index
    %c87_78 = arith.constant 87 : index
    %73 = vector.load %arg9[%c0_77, %c87_78] : memref<16x640xbf16, #tpu.memory_space<vmem>>, vector<16x384xbf16>
    %c16_79 = arith.constant 16 : index
    %c0_80 = arith.constant 0 : index
    %74 = vector.load %arg10[%c16_79, %c0_80] : memref<400x384xbf16, #tpu.memory_space<vmem>>, vector<16x384xbf16>
    tpu.vector_store %arg10[%c16_79, %c0_80], %73 {strides = array<i32>} : memref<400x384xbf16, #tpu.memory_space<vmem>>, vector<16x384xbf16>,
    %c0_81 = arith.constant 0 : index
    %c88_82 = arith.constant 88 : index
    %75 = vector.load %arg9[%c0_81, %c88_82] : memref<16x640xbf16, #tpu.memory_space<vmem>>, vector<16x384xbf16>
    %c32_83 = arith.constant 32 : index
    %c0_84 = arith.constant 0 : index
    %76 = vector.load %arg10[%c32_83, %c0_84] : memref<400x384xbf16, #tpu.memory_space<vmem>>, vector<16x384xbf16>
    tpu.vector_store %arg10[%c32_83, %c0_84], %75 {strides = array<i32>} : memref<400x384xbf16, #tpu.memory_space<vmem>>, vector<16x384xbf16>,
    %c0_85 = arith.constant 0 : index
    %c89_86 = arith.constant 89 : index
    %77 = vector.load %arg9[%c0_85, %c89_86] : memref<16x640xbf16, #tpu.memory_space<vmem>>, vector<16x384xbf16>
    %c48_87 = arith.constant 48 : index
    %c0_88 = arith.constant 0 : index
    %78 = vector.load %arg10[%c48_87, %c0_88] : memref<400x384xbf16, #tpu.memory_space<vmem>>, vector<16x384xbf16>
    tpu.vector_store %arg10[%c48_87, %c0_88], %77 {strides = array<i32>} : memref<400x384xbf16, #tpu.memory_space<vmem>>, vector<16x384xbf16>,
    %c0_89 = arith.constant 0 : index
    %c90_90 = arith.constant 90 : index
    %79 = vector.load %arg9[%c0_89, %c90_90] : memref<16x640xbf16, #tpu.memory_space<vmem>>, vector<16x384xbf16>
    %c64_91 = arith.constant 64 : index
    %c0_92 = arith.constant 0 : index
    %80 = vector.load %arg10[%c64_91, %c0_92] : memref<400x384xbf16, #tpu.memory_space<vmem>>, vector<16x384xbf16>
    tpu.vector_store %arg10[%c64_91, %c0_92], %79 {strides = array<i32>} : memref<400x384xbf16, #tpu.memory_space<vmem>>, vector<16x384xbf16>,
    %c0_93 = arith.constant 0 : index
    %c106_94 = arith.constant 106 : index
    %81 = vector.load %arg9[%c0_93, %c106_94] : memref<16x640xbf16, #tpu.memory_space<vmem>>, vector<16x384xbf16>
    %c80_95 = arith.constant 80 : index
    %c0_96 = arith.constant 0 : index
    %82 = vector.load %arg10[%c80_95, %c0_96] : memref<400x384xbf16, #tpu.memory_space<vmem>>, vector<16x384xbf16>
    tpu.vector_store %arg10[%c80_95, %c0_96], %81 {strides = array<i32>} : memref<400x384xbf16, #tpu.memory_space<vmem>>, vector<16x384xbf16>,
    %c0_97 = arith.constant 0 : index
    %c107_98 = arith.constant 107 : index
    %83 = vector.load %arg9[%c0_97, %c107_98] : memref<16x640xbf16, #tpu.memory_space<vmem>>, vector<16x384xbf16>
    %c96_99 = arith.constant 96 : index
    %c0_100 = arith.constant 0 : index
    %84 = vector.load %arg10[%c96_99, %c0_100] : memref<400x384xbf16, #tpu.memory_space<vmem>>, vector<16x384xbf16>
    tpu.vector_store %arg10[%c96_99, %c0_100], %83 {strides = array<i32>} : memref<400x384xbf16, #tpu.memory_space<vmem>>, vector<16x384xbf16>,
    %c0_101 = arith.constant 0 : index
    %c108_102 = arith.constant 108 : index
    %85 = vector.load %arg9[%c0_101, %c108_102] : memref<16x640xbf16, #tpu.memory_space<vmem>>, vector<16x384xbf16>
    %c112_103 = arith.constant 112 : index
    %c0_104 = arith.constant 0 : index
    %86 = vector.load %arg10[%c112_103, %c0_104] : memref<400x384xbf16, #tpu.memory_space<vmem>>, vector<16x384xbf16>
    tpu.vector_store %arg10[%c112_103, %c0_104], %85 {strides = array<i32>} : memref<400x384xbf16, #tpu.memory_space<vmem>>, vector<16x384xbf16>,
    %c0_105 = arith.constant 0 : index
    %c109_106 = arith.constant 109 : index
    %87 = vector.load %arg9[%c0_105, %c109_106] : memref<16x640xbf16, #tpu.memory_space<vmem>>, vector<16x384xbf16>
    %c128_107 = arith.constant 128 : index
    %c0_108 = arith.constant 0 : index
    %88 = vector.load %arg10[%c128_107, %c0_108] : memref<400x384xbf16, #tpu.memory_space<vmem>>, vector<16x384xbf16>
    tpu.vector_store %arg10[%c128_107, %c0_108], %87 {strides = array<i32>} : memref<400x384xbf16, #tpu.memory_space<vmem>>, vector<16x384xbf16>,
    %c0_109 = arith.constant 0 : index
    %c110_110 = arith.constant 110 : index
    %89 = vector.load %arg9[%c0_109, %c110_110] : memref<16x640xbf16, #tpu.memory_space<vmem>>, vector<16x384xbf16>
    %c144_111 = arith.constant 144 : index
    %c0_112 = arith.constant 0 : index
    %90 = vector.load %arg10[%c144_111, %c0_112] : memref<400x384xbf16, #tpu.memory_space<vmem>>, vector<16x384xbf16>
    tpu.vector_store %arg10[%c144_111, %c0_112], %89 {strides = array<i32>} : memref<400x384xbf16, #tpu.memory_space<vmem>>, vector<16x384xbf16>,
    %c0_113 = arith.constant 0 : index
    %c126_114 = arith.constant 126 : index
    %91 = vector.load %arg9[%c0_113, %c126_114] : memref<16x640xbf16, #tpu.memory_space<vmem>>, vector<16x384xbf16>
    %c160_115 = arith.constant 160 : index
    %c0_116 = arith.constant 0 : index
    %92 = vector.load %arg10[%c160_115, %c0_116] : memref<400x384xbf16, #tpu.memory_space<vmem>>, vector<16x384xbf16>
    tpu.vector_store %arg10[%c160_115, %c0_116], %91 {strides = array<i32>} : memref<400x384xbf16, #tpu.memory_space<vmem>>, vector<16x384xbf16>,
    %c0_117 = arith.constant 0 : index
    %c127_118 = arith.constant 127 : index
    %93 = vector.load %arg9[%c0_117, %c127_118] : memref<16x640xbf16, #tpu.memory_space<vmem>>, vector<16x384xbf16>
    %c176_119 = arith.constant 176 : index
    %c0_120 = arith.constant 0 : index
    %94 = vector.load %arg10[%c176_119, %c0_120] : memref<400x384xbf16, #tpu.memory_space<vmem>>, vector<16x384xbf16>
    tpu.vector_store %arg10[%c176_119, %c0_120], %93 {strides = array<i32>} : memref<400x384xbf16, #tpu.memory_space<vmem>>, vector<16x384xbf16>,
    %c0_121 = arith.constant 0 : index
    %c128_122 = arith.constant 128 : index
    %95 = vector.load %arg9[%c0_121, %c128_122] : memref<16x640xbf16, #tpu.memory_space<vmem>>, vector<16x384xbf16>
    %c192_123 = arith.constant 192 : index
    %c0_124 = arith.constant 0 : index
    %96 = vector.load %arg10[%c192_123, %c0_124] : memref<400x384xbf16, #tpu.memory_space<vmem>>, vector<16x384xbf16>
    tpu.vector_store %arg10[%c192_123, %c0_124], %95 {strides = array<i32>} : memref<400x384xbf16, #tpu.memory_space<vmem>>, vector<16x384xbf16>,
    %c0_125 = arith.constant 0 : index
    %c129_126 = arith.constant 129 : index
    %97 = vector.load %arg9[%c0_125, %c129_126] : memref<16x640xbf16, #tpu.memory_space<vmem>>, vector<16x384xbf16>
    %c208_127 = arith.constant 208 : index
    %c0_128 = arith.constant 0 : index
    %98 = vector.load %arg10[%c208_127, %c0_128] : memref<400x384xbf16, #tpu.memory_space<vmem>>, vector<16x384xbf16>
    tpu.vector_store %arg10[%c208_127, %c0_128], %97 {strides = array<i32>} : memref<400x384xbf16, #tpu.memory_space<vmem>>, vector<16x384xbf16>,
    %c0_129 = arith.constant 0 : index
    %c130_130 = arith.constant 130 : index
    %99 = vector.load %arg9[%c0_129, %c130_130] : memref<16x640xbf16, #tpu.memory_space<vmem>>, vector<16x384xbf16>
    %c224_131 = arith.constant 224 : index
    %c0_132 = arith.constant 0 : index
    %100 = vector.load %arg10[%c224_131, %c0_132] : memref<400x384xbf16, #tpu.memory_space<vmem>>, vector<16x384xbf16>
    tpu.vector_store %arg10[%c224_131, %c0_132], %99 {strides = array<i32>} : memref<400x384xbf16, #tpu.memory_space<vmem>>, vector<16x384xbf16>,
    %c0_133 = arith.constant 0 : index
    %c146_134 = arith.constant 146 : index
    %101 = vector.load %arg9[%c0_133, %c146_134] : memref<16x640xbf16, #tpu.memory_space<vmem>>, vector<16x384xbf16>
    %c240_135 = arith.constant 240 : index
    %c0_136 = arith.constant 0 : index
    %102 = vector.load %arg10[%c240_135, %c0_136] : memref<400x384xbf16, #tpu.memory_space<vmem>>, vector<16x384xbf16>
    tpu.vector_store %arg10[%c240_135, %c0_136], %101 {strides = array<i32>} : memref<400x384xbf16, #tpu.memory_space<vmem>>, vector<16x384xbf16>,
    %c0_137 = arith.constant 0 : index
    %c147_138 = arith.constant 147 : index
    %103 = vector.load %arg9[%c0_137, %c147_138] : memref<16x640xbf16, #tpu.memory_space<vmem>>, vector<16x384xbf16>
    %c256_139 = arith.constant 256 : index
    %c0_140 = arith.constant 0 : index
    %104 = vector.load %arg10[%c256_139, %c0_140] : memref<400x384xbf16, #tpu.memory_space<vmem>>, vector<16x384xbf16>
    tpu.vector_store %arg10[%c256_139, %c0_140], %103 {strides = array<i32>} : memref<400x384xbf16, #tpu.memory_space<vmem>>, vector<16x384xbf16>,
    %c0_141 = arith.constant 0 : index
    %c148_142 = arith.constant 148 : index
    %105 = vector.load %arg9[%c0_141, %c148_142] : memref<16x640xbf16, #tpu.memory_space<vmem>>, vector<16x384xbf16>
    %c272_143 = arith.constant 272 : index
    %c0_144 = arith.constant 0 : index
    %106 = vector.load %arg10[%c272_143, %c0_144] : memref<400x384xbf16, #tpu.memory_space<vmem>>, vector<16x384xbf16>
    tpu.vector_store %arg10[%c272_143, %c0_144], %105 {strides = array<i32>} : memref<400x384xbf16, #tpu.memory_space<vmem>>, vector<16x384xbf16>,
    %c0_145 = arith.constant 0 : index
    %c149_146 = arith.constant 149 : index
    %107 = vector.load %arg9[%c0_145, %c149_146] : memref<16x640xbf16, #tpu.memory_space<vmem>>, vector<16x384xbf16>
    %c288_147 = arith.constant 288 : index
    %c0_148 = arith.constant 0 : index
    %108 = vector.load %arg10[%c288_147, %c0_148] : memref<400x384xbf16, #tpu.memory_space<vmem>>, vector<16x384xbf16>
    tpu.vector_store %arg10[%c288_147, %c0_148], %107 {strides = array<i32>} : memref<400x384xbf16, #tpu.memory_space<vmem>>, vector<16x384xbf16>,
    %c0_149 = arith.constant 0 : index
    %c150_150 = arith.constant 150 : index
    %109 = vector.load %arg9[%c0_149, %c150_150] : memref<16x640xbf16, #tpu.memory_space<vmem>>, vector<16x384xbf16>
    %c304_151 = arith.constant 304 : index
    %c0_152 = arith.constant 0 : index
    %110 = vector.load %arg10[%c304_151, %c0_152] : memref<400x384xbf16, #tpu.memory_space<vmem>>, vector<16x384xbf16>
    tpu.vector_store %arg10[%c304_151, %c0_152], %109 {strides = array<i32>} : memref<400x384xbf16, #tpu.memory_space<vmem>>, vector<16x384xbf16>,
    %c0_153 = arith.constant 0 : index
    %c166_154 = arith.constant 166 : index
    %111 = vector.load %arg9[%c0_153, %c166_154] : memref<16x640xbf16, #tpu.memory_space<vmem>>, vector<16x384xbf16>
    %c320_155 = arith.constant 320 : index
    %c0_156 = arith.constant 0 : index
    %112 = vector.load %arg10[%c320_155, %c0_156] : memref<400x384xbf16, #tpu.memory_space<vmem>>, vector<16x384xbf16>
    tpu.vector_store %arg10[%c320_155, %c0_156], %111 {strides = array<i32>} : memref<400x384xbf16, #tpu.memory_space<vmem>>, vector<16x384xbf16>,
    %c0_157 = arith.constant 0 : index
    %c167_158 = arith.constant 167 : index
    %113 = vector.load %arg9[%c0_157, %c167_158] : memref<16x640xbf16, #tpu.memory_space<vmem>>, vector<16x384xbf16>
    %c336_159 = arith.constant 336 : index
    %c0_160 = arith.constant 0 : index
    %114 = vector.load %arg10[%c336_159, %c0_160] : memref<400x384xbf16, #tpu.memory_space<vmem>>, vector<16x384xbf16>
    tpu.vector_store %arg10[%c336_159, %c0_160], %113 {strides = array<i32>} : memref<400x384xbf16, #tpu.memory_space<vmem>>, vector<16x384xbf16>,
    %c0_161 = arith.constant 0 : index
    %c168_162 = arith.constant 168 : index
    %115 = vector.load %arg9[%c0_161, %c168_162] : memref<16x640xbf16, #tpu.memory_space<vmem>>, vector<16x384xbf16>
    %c352_163 = arith.constant 352 : index
    %c0_164 = arith.constant 0 : index
    %116 = vector.load %arg10[%c352_163, %c0_164] : memref<400x384xbf16, #tpu.memory_space<vmem>>, vector<16x384xbf16>
    tpu.vector_store %arg10[%c352_163, %c0_164], %115 {strides = array<i32>} : memref<400x384xbf16, #tpu.memory_space<vmem>>, vector<16x384xbf16>,
    %c0_165 = arith.constant 0 : index
    %c169_166 = arith.constant 169 : index
    %117 = vector.load %arg9[%c0_165, %c169_166] : memref<16x640xbf16, #tpu.memory_space<vmem>>, vector<16x384xbf16>
    %c368_167 = arith.constant 368 : index
    %c0_168 = arith.constant 0 : index
    %118 = vector.load %arg10[%c368_167, %c0_168] : memref<400x384xbf16, #tpu.memory_space<vmem>>, vector<16x384xbf16>
    tpu.vector_store %arg10[%c368_167, %c0_168], %117 {strides = array<i32>} : memref<400x384xbf16, #tpu.memory_space<vmem>>, vector<16x384xbf16>,
    %c0_169 = arith.constant 0 : index
    %c170_170 = arith.constant 170 : index
    %119 = vector.load %arg9[%c0_169, %c170_170] : memref<16x640xbf16, #tpu.memory_space<vmem>>, vector<16x384xbf16>
    %c384_171 = arith.constant 384 : index
    %c0_172 = arith.constant 0 : index
    %120 = vector.load %arg10[%c384_171, %c0_172] : memref<400x384xbf16, #tpu.memory_space<vmem>>, vector<16x384xbf16>
    tpu.vector_store %arg10[%c384_171, %c0_172], %119 {strides = array<i32>} : memref<400x384xbf16, #tpu.memory_space<vmem>>, vector<16x384xbf16>,
    %c0_173 = arith.constant 0 : index
    %c0_174 = arith.constant 0 : index
    %121 = vector.load %arg5[%c0_173, %c0_174] : memref<16x400xbf16, #tpu.memory_space<vmem>>, vector<16x400xbf16>
    %c0_175 = arith.constant 0 : index
    %c0_176 = arith.constant 0 : index
    %122 = vector.load %arg10[%c0_175, %c0_176] : memref<400x384xbf16, #tpu.memory_space<vmem>>, vector<400x384xbf16>
    %cst_177 = arith.constant dense<0.000000e+00> : vector<16x384xf32>
    %123 = tpu.matmul %121, %122, %cst_177 {dimension_numbers = #tpu.dot_dimension_numbers<[1], [0], [0], [1], [0, 0, 1, 1], [], []>} : vector<16x400xbf16>, vector<400x384xbf16>, vector<16x384xf32> -> vector<16x384xf32>
    %c0_178 = arith.constant 0 : index
    %c0_179 = arith.constant 0 : index
    %124 = vector.load %arg6[%c0_178, %c0_179] : memref<16x1xf32, #tpu.memory_space<vmem>>, vector<16x1xf32>
    %125 = vector.broadcast %124 : vector<16x1xf32> to vector<16x384xf32>
    %126 = arith.addf %123, %125 : vector<16x384xf32>
    %cst_180 = arith.constant 0.000000e+00 : f32
    %127 = vector.broadcast %cst_180 : f32 to vector<16x384xf32>
    %128 = arith.maximumf %126, %127 : vector<16x384xf32>
    %129 = arith.addf %128, %4 : vector<16x384xf32>
    %cst_181 = arith.constant 0.000000e+00 : f32
    %130 = vector.broadcast %cst_181 : f32 to vector<16x384xf32>
    %131 = arith.maximumf %129, %130 : vector<16x384xf32>
    %c0_182 = arith.constant 0 : index
    %c0_183 = arith.constant 0 : index
    %c0_184 = arith.constant 0 : index
    %c0_185 = arith.constant 0 : index
    %132 = vector.load %arg8[%c0_182, %c0_183, %c0_184, %c0_185] : memref<1x1x16x384xf32, #tpu.memory_space<vmem>>, vector<1x1x16x384xf32>
    %133 = vector.shape_cast %132 : vector<1x1x16x384xf32> to vector<16x384xf32>
    %134 = vector.shape_cast %131 : vector<16x384xf32> to vector<1x1x16x384xf32>
    tpu.vector_store %arg8[%c0_182, %c0_183, %c0_184, %c0_185], %134 {strides = array<i32>} : memref<1x1x16x384xf32, #tpu.memory_space<vmem>>, vector<1x1x16x384xf32>,
    return
  }
  func.func @transform_0(%arg0: i32, %arg1: i32) -> (i32, i32, i32, i32) {
    %c0_i32 = arith.constant 0 : i32
    %c0_i32_0 = arith.constant 0 : i32
    %c0_i32_1 = arith.constant 0 : i32
    return %arg0, %arg1, %c0_i32, %c0_i32_0 : i32, i32, i32, i32
  }
  func.func @transform_1(%arg0: i32, %arg1: i32) -> (i32, i32) {
    %c0_i32 = arith.constant 0 : i32
    %c0_i32_0 = arith.constant 0 : i32
    %c0_i32_1 = arith.constant 0 : i32
    return %c0_i32, %c0_i32_0 : i32, i32
  }
  func.func @transform_2(%arg0: i32, %arg1: i32) -> (i32, i32) {
    %c0_i32 = arith.constant 0 : i32
    %c0_i32_0 = arith.constant 0 : i32
    %c0_i32_1 = arith.constant 0 : i32
    return %c0_i32, %c0_i32_0 : i32, i32
  }
  func.func @transform_3(%arg0: i32, %arg1: i32) -> (i32, i32) {
    %c0_i32 = arith.constant 0 : i32
    %c0_i32_0 = arith.constant 0 : i32
    %c0_i32_1 = arith.constant 0 : i32
    return %c0_i32, %c0_i32_0 : i32, i32
  }
  func.func @transform_4(%arg0: i32, %arg1: i32) -> (i32, i32) {
    %c0_i32 = arith.constant 0 : i32
    %c0_i32_0 = arith.constant 0 : i32
    %c0_i32_1 = arith.constant 0 : i32
    return %c0_i32, %c0_i32_0 : i32, i32
  }
  func.func @transform_5(%arg0: i32, %arg1: i32) -> (i32, i32, i32) {
    %c0_i32 = arith.constant 0 : i32
    %c0_i32_0 = arith.constant 0 : i32
    %c0_i32_1 = arith.constant 0 : i32
    return %arg1, %c0_i32, %c0_i32_0 : i32, i32, i32
  }
  func.func @transform_6(%arg0: i32, %arg1: i32) -> (i32, i32, i32, i32) {
    %c0_i32 = arith.constant 0 : i32
    %c0_i32_0 = arith.constant 0 : i32
    %c0_i32_1 = arith.constant 0 : i32
    return %arg0, %arg1, %c0_i32, %c0_i32_0 : i32, i32, i32, i32
  }
}

</mosaic_0001>

<llo_original>
// kernel: conv2d_resblock.1
$region0: #{conv2d_resblock.1}
  #allocation0 [shape = 'u32[]', space=smem, size = 0x4, offset = 0x4, fixed_abs, tag = 'smem constant byte address 0x4 - core index']
  #allocation1 [shape = 'u32[144,128]{1,0:T(1,128)}', space=vmem, size = 0x12000, scoped, tag = 'internal scratch']
  #allocation2 [shape = 'bf16[16,640]{1,0:T(8,128)(2,1)}', space=vmem, size = 0x5000, scoped, tag = 'scratch operand']
  #allocation3 [shape = 'bf16[400,384]{1,0:T(8,128)(2,1)}', space=vmem, size = 0x4b000, scoped, tag = 'scratch operand']
  %s0 = inlined_call_operand.vmem [shape: f32[2,3,16,384], index: 0, kind: input, shape index: {}]
  %s1 = inlined_call_operand.vmem [shape: bf16[16,400], index: 1, kind: input, shape index: {}]
  %s2 = inlined_call_operand.vmem [shape: f32[16,1], index: 2, kind: input, shape index: {}]
  %s3 = inlined_call_operand.vmem [shape: bf16[16,400], index: 3, kind: input, shape index: {}]
  %s4 = inlined_call_operand.vmem [shape: f32[16,1], index: 4, kind: input, shape index: {}]
  %s5 = inlined_call_operand.vmem [shape: f32[3,1,384], index: 5, kind: input, shape index: {}]
  %s6 = inlined_call_operand.vmem [shape: f32[2,3,16,384], index: 6, kind: output, shape index: {}]
  %s7 = sld [smem:[#allocation0]]
  $region57: #{conv2d_resblock.1} parent=0
    _
  %s9 = ssub.s32 1, %s7
  %s10 = scalar_select 0, %s9, %s7
  loop: start=0, step=1, limit=8
  $region2: #{conv2d_resblock.1} parent=0 // loop_pre_header
    _
  $region3: #{conv2d_resblock.1} parent=0 // loop_header
    %s12 = sphi 0, %s16
    %p13 = scmp.ge.s32.totalorder %s12, 8
    %s19 = sphi 0, %s31
    %s20 = sphi 0, %s27
    %s21 = sphi 0, %s19
    %s22 = sphi 0, %s20
    %s23 = sphi 0, %s21
    %s24 = sphi 0, %s22
    %s36 = sphi 0, %s38
    %s39 = sphi 0, %s36
    %s40 = sphi 0, %s39
    %s56 = sphi 0, %s40
    %s60 = sphi 0, %s60
    %s62 = sphi 0, %s60
    %s63 = sphi 0, %s62
    %s77 = sphi 0, %s63
    %s81 = sphi 0, %s81
    %s83 = sphi 0, %s81
    %s84 = sphi 0, %s83
    %s98 = sphi 0, %s84
    %s102 = sphi 0, %s102
    %s104 = sphi 0, %s102
    %s105 = sphi 0, %s104
    %s119 = sphi 0, %s105
    %s123 = sphi 0, %s123
    %s125 = sphi 0, %s123
    %s126 = sphi 0, %s125
    %s140 = sphi 0, %s126
    %s146 = sphi 0, %s148
    %s149 = sphi 0, %s146
    %s150 = sphi 0, %s149
    %s166 = sphi 0, %s150
    %s174 = sphi 0, %s176
    %s177 = sphi 0, %s174
    %s178 = sphi 0, %s177
    %s194 = sphi 0, %s178
  $region4: #{conv2d_resblock.1} parent=0 // loop_header_branch
    %15 = sbr.rel (%p13) target = $region8
  $region5: #{conv2d_resblock.1} parent=0 // loop_body
    %s17 = ssub.s32 %s12, 1
    %s18 = ssub.s32 %s12, 2
    %s25 = sadd.s32 1, %s20
    %p26 = scmp.ge.s32.totalorder %s25, 3
    %s27 = scalar_select %p26, 0, %s25
    %s28 = sadd.s32 1, %s19
    %s29 = scalar_select %p26, %s28, %s19
    %p30 = scmp.ge.s32.totalorder %s29, 2
    %s31 = scalar_select %p30, 0, %s29
    %s32 = ssub.s32 %s19, %s31
    %s33 = ssub.s32 %s20, %s27
    %s34 = sor.u32 %s32, %s33
    %p35 = scmp.eq.s32.totalorder %s34, 0
    %s37 = sadd.s32 %s36, 1
    %s38 = scalar_select %p35, %s36, %s37
    %p41 = pneg %p35
    %p42 = scmp.eq.s32.totalorder %s12, 5
    %p43 = por %p41, %p42
    %p44 = scmp.ne.s32.totalorder %s36, %s39
    %p45 = scmp.eq.s32.totalorder %s12, 0
    %p46 = por %p44, %p45
    %p47 = scmp.ne.s32.totalorder %s36, %s39
    %p48 = scmp.eq.s32.totalorder %s17, 5
    %p49 = por %p47, %p48
    %p50 = scmp.ne.s32.totalorder %s39, %s40
    %p51 = scmp.eq.s32.totalorder %s17, 0
    %p52 = por %p50, %p51
    %p53 = scmp.ne.s32.totalorder %s39, %s40
    %p54 = scmp.eq.s32.totalorder %s18, 5
    %p55 = por %p53, %p54
    %p57 = scmp.ne.s32.totalorder %s40, %s56
    %p58 = scmp.eq.s32.totalorder %s18, 0
    %p59 = por %p57, %p58
    %s61 = sadd.s32 %s60, 1
    %p64 = scmp.eq.s32.totalorder %s12, 5
    %p65 = scmp.ne.s32.totalorder %s60, %s62
    %p66 = scmp.eq.s32.totalorder %s12, 0
    %p67 = por %p65, %p66
    %p68 = scmp.ne.s32.totalorder %s60, %s62
    %p69 = scmp.eq.s32.totalorder %s17, 5
    %p70 = por %p68, %p69
    %p71 = scmp.ne.s32.totalorder %s62, %s63
    %p72 = scmp.eq.s32.totalorder %s17, 0
    %p73 = por %p71, %p72
    %p74 = scmp.ne.s32.totalorder %s62, %s63
    %p75 = scmp.eq.s32.totalorder %s18, 5
    %p76 = por %p74, %p75
    %p78 = scmp.ne.s32.totalorder %s63, %s77
    %p79 = scmp.eq.s32.totalorder %s18, 0
    %p80 = por %p78, %p79
    %s82 = sadd.s32 %s81, 1
    %p85 = scmp.eq.s32.totalorder %s12, 5
    %p86 = scmp.ne.s32.totalorder %s81, %s83
    %p87 = scmp.eq.s32.totalorder %s12, 0
    %p88 = por %p86, %p87
    %p89 = scmp.ne.s32.totalorder %s81, %s83
    %p90 = scmp.eq.s32.totalorder %s17, 5
    %p91 = por %p89, %p90
    %p92 = scmp.ne.s32.totalorder %s83, %s84
    %p93 = scmp.eq.s32.totalorder %s17, 0
    %p94 = por %p92, %p93
    %p95 = scmp.ne.s32.totalorder %s83, %s84
    %p96 = scmp.eq.s32.totalorder %s18, 5
    %p97 = por %p95, %p96
    %p99 = scmp.ne.s32.totalorder %s84, %s98
    %p100 = scmp.eq.s32.totalorder %s18, 0
    %p101 = por %p99, %p100
    %s103 = sadd.s32 %s102, 1
    %p106 = scmp.eq.s32.totalorder %s12, 5
    %p107 = scmp.ne.s32.totalorder %s102, %s104
    %p108 = scmp.eq.s32.totalorder %s12, 0
    %p109 = por %p107, %p108
    %p110 = scmp.ne.s32.totalorder %s102, %s104
    %p111 = scmp.eq.s32.totalorder %s17, 5
    %p112 = por %p110, %p111
    %p113 = scmp.ne.s32.totalorder %s104, %s105
    %p114 = scmp.eq.s32.totalorder %s17, 0
    %p115 = por %p113, %p114
    %p116 = scmp.ne.s32.totalorder %s104, %s105
    %p117 = scmp.eq.s32.totalorder %s18, 5
    %p118 = por %p116, %p117
    %p120 = scmp.ne.s32.totalorder %s105, %s119
    %p121 = scmp.eq.s32.totalorder %s18, 0
    %p122 = por %p120, %p121
    %s124 = sadd.s32 %s123, 1
    %p127 = scmp.eq.s32.totalorder %s12, 5
    %p128 = scmp.ne.s32.totalorder %s123, %s125
    %p129 = scmp.eq.s32.totalorder %s12, 0
    %p130 = por %p128, %p129
    %p131 = scmp.ne.s32.totalorder %s123, %s125
    %p132 = scmp.eq.s32.totalorder %s17, 5
    %p133 = por %p131, %p132
    %p134 = scmp.ne.s32.totalorder %s125, %s126
    %p135 = scmp.eq.s32.totalorder %s17, 0
    %p136 = por %p134, %p135
    %p137 = scmp.ne.s32.totalorder %s125, %s126
    %p138 = scmp.eq.s32.totalorder %s18, 5
    %p139 = por %p137, %p138
    %p141 = scmp.ne.s32.totalorder %s126, %s140
    %p142 = scmp.eq.s32.totalorder %s18, 0
    %p143 = por %p141, %p142
    %s144 = ssub.s32 %s20, %s27
    %p145 = scmp.eq.s32.totalorder %s144, 0
    %s147 = sadd.s32 %s146, 1
    %s148 = scalar_select %p145, %s146, %s147
    %p151 = pneg %p145
    %p152 = scmp.eq.s32.totalorder %s12, 5
    %p153 = por %p151, %p152
    %p154 = scmp.ne.s32.totalorder %s146, %s149
    %p155 = scmp.eq.s32.totalorder %s12, 0
    %p156 = por %p154, %p155
    %p157 = scmp.ne.s32.totalorder %s146, %s149
    %p158 = scmp.eq.s32.totalorder %s17, 5
    %p159 = por %p157, %p158
    %p160 = scmp.ne.s32.totalorder %s149, %s150
    %p161 = scmp.eq.s32.totalorder %s17, 0
    %p162 = por %p160, %p161
    %p163 = scmp.ne.s32.totalorder %s149, %s150
    %p164 = scmp.eq.s32.totalorder %s18, 5
    %p165 = por %p163, %p164
    %p167 = scmp.ne.s32.totalorder %s150, %s166
    %p168 = scmp.eq.s32.totalorder %s18, 0
    %p169 = por %p167, %p168
    %s170 = ssub.s32 %s19, %s31
    %s171 = ssub.s32 %s20, %s27
    %s172 = sor.u32 %s170, %s171
    %p173 = scmp.eq.s32.totalorder %s172, 0
    %s175 = sadd.s32 %s174, 1
    %s176 = scalar_select %p173, %s174, %s175
    %p179 = pneg %p173
    %p180 = scmp.eq.s32.totalorder %s12, 5
    %p181 = por %p179, %p180
    %p182 = scmp.ne.s32.totalorder %s174, %s177
    %p183 = scmp.eq.s32.totalorder %s12, 0
    %p184 = por %p182, %p183
    %p185 = scmp.ne.s32.totalorder %s174, %s177
    %p186 = scmp.eq.s32.totalorder %s17, 5
    %p187 = por %p185, %p186
    %p188 = scmp.ne.s32.totalorder %s177, %s178
    %p189 = scmp.eq.s32.totalorder %s17, 0
    %p190 = por %p188, %p189
    %p191 = scmp.ne.s32.totalorder %s177, %s178
    %p192 = scmp.eq.s32.totalorder %s18, 5
    %p193 = por %p191, %p192
    %p195 = scmp.ne.s32.totalorder %s178, %s194
    %p196 = scmp.eq.s32.totalorder %s18, 0
    %p197 = por %p195, %p196
    %p198 = scmp.le.s32.totalorder 1, %s12
    %p199 = scmp.lt.s32.totalorder %s12, 7
    %p200 = pnand %p198, %p199
    %p201 = pneg %p200
    // Predicated region
    $region9: #{conv2d_resblock.1} parent=5 // pred_check
      _
    $region10: #{conv2d_resblock.1} parent=5 // pred_check_branch
      %203 = sbr.rel (%p200) target = $region12
    $region11: #{conv2d_resblock.1} parent=5 // pred_region
      %s204 = ssub.s32 %s12, 1
      // Predicated region
      $region13: #{conv2d_resblock.1} parent=11 // pred_check
        %p205 = pneg %p73
      $region14: #{conv2d_resblock.1} parent=11 // pred_check_branch
        %207 = sbr.rel (%p205) target = $region16
      $region15: #{conv2d_resblock.1} parent=11 // pred_region
        _
      $region16: #{conv2d_resblock.1} parent=11 // pred_fallthru
        _
      // Predicated region
      $region17: #{conv2d_resblock.1} parent=11 // pred_check
        %p208 = pneg %p94
      $region18: #{conv2d_resblock.1} parent=11 // pred_check_branch
        %210 = sbr.rel (%p208) target = $region20
      $region19: #{conv2d_resblock.1} parent=11 // pred_region
        _
      $region20: #{conv2d_resblock.1} parent=11 // pred_fallthru
        _
      // Predicated region
      $region21: #{conv2d_resblock.1} parent=11 // pred_check
        %p211 = pneg %p115
      $region22: #{conv2d_resblock.1} parent=11 // pred_check_branch
        %213 = sbr.rel (%p211) target = $region24
      $region23: #{conv2d_resblock.1} parent=11 // pred_region
        _
      $region24: #{conv2d_resblock.1} parent=11 // pred_fallthru
        _
      // Predicated region
      $region25: #{conv2d_resblock.1} parent=11 // pred_check
        %p214 = pneg %p136
      $region26: #{conv2d_resblock.1} parent=11 // pred_check_branch
        %216 = sbr.rel (%p214) target = $region28
      $region27: #{conv2d_resblock.1} parent=11 // pred_region
        _
      $region28: #{conv2d_resblock.1} parent=11 // pred_fallthru
        _
    $region12: #{conv2d_resblock.1} parent=5 // pred_fallthru
      _
    %p217 = scmp.lt.s32.totalorder %s12, 6
    // Predicated region
    $region29: #{conv2d_resblock.1} parent=5 // pred_check
      %p218 = pneg %p217
    $region30: #{conv2d_resblock.1} parent=5 // pred_check_branch
      %220 = sbr.rel (%p218) target = $region32
    $region31: #{conv2d_resblock.1} parent=5 // pred_region
      // Predicated region
      $region33: #{conv2d_resblock.1} parent=31 // pred_check
        %p221 = pneg %p46
      $region34: #{conv2d_resblock.1} parent=31 // pred_check_branch
        %223 = sbr.rel (%p221) target = $region36
      $region35: #{conv2d_resblock.1} parent=31 // pred_region
        %p224 = scmp.lt.s32.totalorder %s19, 1
        %s225 = scalar_select %p224, %s19, 1
        %p226 = scmp.lt.s32.totalorder %s20, 2
        %s227 = scalar_select %p226, %s20, 2
        %s228 = smul.addr %s227, 6
        %s229 = smul.addr %s225, 18
        %s230 = sadd.s32 %s228, %s229
        %s231 = smul.addr %s230, 8
        %s232 = scalar_lea.vmem %s0, %s231
      $region36: #{conv2d_resblock.1} parent=31 // pred_fallthru
        _
      // Predicated region
      $region37: #{conv2d_resblock.1} parent=31 // pred_check
        %p233 = pneg %p156
      $region38: #{conv2d_resblock.1} parent=31 // pred_check_branch
        %235 = sbr.rel (%p233) target = $region40
      $region39: #{conv2d_resblock.1} parent=31 // pred_region
        %p236 = scmp.lt.s32.totalorder %s20, 2
        %s237 = scalar_select %p236, %s20, 2
        %s238 = smul.addr %s237, 3
        %s239 = scalar_lea.vmem %s5, %s238
      $region40: #{conv2d_resblock.1} parent=31 // pred_fallthru
        _
    $region32: #{conv2d_resblock.1} parent=5 // pred_fallthru
      _
    %p240 = scmp.le.s32.totalorder 1, %s12
    %p241 = scmp.lt.s32.totalorder %s12, 7
    %p242 = pnand %p240, %p241
    %p243 = pneg %p242
    // Predicated region
    $region41: #{conv2d_resblock.1} parent=5 // pred_check
      _
    $region42: #{conv2d_resblock.1} parent=5 // pred_check_branch
      %245 = sbr.rel (%p242) target = $region44
    $region43: #{conv2d_resblock.1} parent=5 // pred_region
      %s246 = ssub.s32 %s12, 1
      %p247 = scmp.lt.s32.totalorder %s21, 1
      %s248 = scalar_select %p247, %s21, 1
      %p249 = scmp.lt.s32.totalorder %s22, 2
      %s250 = scalar_select %p249, %s22, 2
      %s251 = smul.addr %s250, 6
      %s252 = smul.addr %s248, 18
      %s253 = sadd.s32 %s251, %s252
      %s254 = smul.addr %s253, 8
      %s255 = scalar_lea.vmem %s0, %s254
      %p256 = pneg %p52
      %p257 = pneg %p49
      %p258 = pneg %p73
      %p259 = pneg %p70
      %p260 = pneg %p94
      %p261 = pneg %p91
      %p262 = pneg %p115
      %p263 = pneg %p112
      %p264 = pneg %p136
      %p265 = pneg %p133
      %p266 = scmp.lt.s32.totalorder %s22, 2
      %s267 = scalar_select %p266, %s22, 2
      %s268 = smul.addr %s267, 3
      %s269 = scalar_lea.vmem %s5, %s268
      %p270 = pneg %p162
      %p271 = pneg %p159
      %p272 = pneg %p190
      %p273 = pneg %p187
      %p274 = scmp.lt.s32.totalorder %s21, 1
      %s275 = scalar_select %p274, %s21, 1
      %p276 = scmp.lt.s32.totalorder %s22, 2
      %s277 = scalar_select %p276, %s22, 2
      %s278 = smul.addr %s277, 6
      %s279 = smul.addr %s275, 18
      %s280 = sadd.s32 %s278, %s279
      %s281 = smul.addr %s280, 8
      %s282 = scalar_lea.vmem %s6, %s281
      %p283 = scmp.lt.s32.totalorder %s21, 1
      %s284 = scalar_select %p283, %s21, 1
      %p285 = scmp.lt.s32.totalorder %s22, 2
      %s286 = scalar_select %p285, %s22, 2
      %s287 = smul.addr %s286, 6
      %s288 = smul.addr %s284, 18
      %s289 = sadd.s32 %s287, %s288
      %s290 = smul.addr %s289, 8
      %s291 = scalar_lea.vmem %s0, %s290
      %p292 = scmp.lt.s32.totalorder %s22, 2
      %s293 = scalar_select %p292, %s22, 2
      %s294 = smul.addr %s293, 3
      %s295 = scalar_lea.vmem %s5, %s294
      %p296 = scmp.lt.s32.totalorder %s21, 1
      %s297 = scalar_select %p296, %s21, 1
      %p298 = scmp.lt.s32.totalorder %s22, 2
      %s299 = scalar_select %p298, %s22, 2
      %s300 = smul.addr %s299, 6
      %s301 = smul.addr %s297, 18
      %s302 = sadd.s32 %s300, %s301
      %s303 = smul.addr %s302, 8
      %s304 = scalar_lea.vmem %s6, %s303
      %306 = vst [vmem:[#allocation2] sm:$0xf] 0
      %307 = vst [vmem:[#allocation2 + $0x14] sm:$0xf] 0
      %308 = vst [vmem:[#allocation2 + $0x10] sm:$0xf] 0
      %309 = vst [vmem:[#allocation2 + $0x24] sm:$0xf] 0
      %v310 = vld [vmem:[%s291] sm:$0xff]
      %v311 = vld [vmem:[%s291 + $0x8] sm:$0xff]
      %v312 = vld [vmem:[%s291 + $0x10] sm:$0xff]
      %v313 = vld [vmem:[%s291 + $0x18] sm:$0xff]
      %v314 = vld [vmem:[%s291 + $0x20] sm:$0xff]
      %v315 = vld [vmem:[%s291 + $0x28] sm:$0xff]
      %v316 = vld [vmem:[%s295] sm:$0x7]
      %v317 = vpack.c.bf16 %v313, %v310
      %v318 = vpack.c.bf16 %v314, %v311
      %v319 = vpack.c.bf16 %v315, %v312
      %v323 = vunpack.c.l.b16 %v317
      %v324 = vunpack.c.l.b16 %v318
      %v325 = vunpack.c.l.b16 %v319
      %v326 = vunpack.c.h.b16 %v317
      %v327 = vunpack.c.h.b16 %v318
      %v328 = vunpack.c.h.b16 %v319
      %v329 = vpack.c.b16 %v324, %v323
      %v330 = vpack.c.b16 %v325, %v325
      %v331 = vpack.c.b16 %v327, %v326
      %v332 = vpack.c.b16 %v328, %v328
      %337 = vst [vmem:[#allocation2 + $0x4] sm:$0xff] %v329
      %338 = vst [vmem:[#allocation2 + $0xc] sm:$0xf] %v330
      %339 = vst [vmem:[#allocation2 + $0x18] sm:$0xff] %v331
      %340 = vst [vmem:[#allocation2 + $0x20] sm:$0xf] %v332
      %v341 = vld [vmem:[#allocation2] sm:$0xff]
      %v342 = vld [vmem:[#allocation2 + $0x8] sm:$0xff]
      %v343 = vld [vmem:[#allocation2 + $0x14] sm:$0xff]
      %v344 = vld [vmem:[#allocation2 + $0x1c] sm:$0xff]
      %349 = vrot.lane.b32.xlu0 %v341, 42
      %v350 = vpop.permute.xlu0 %349
      %351 = vrot.lane.b32.xlu0 %v342, 42
      %v352 = vpop.permute.xlu0 %351
      %353 = vrot.lane.b32.xlu0 %v343, 42
      %v354 = vpop.permute.xlu0 %353
      %355 = vrot.lane.b32.xlu0 %v344, 42
      %v356 = vpop.permute.xlu0 %355
      %v357 = vrot.slane %v350, 4
      %v358 = vrot.slane %v352, 4
      %v359 = vrot.slane %v354, 4
      %v360 = vrot.slane %v356, 4
      %vm361 = vcmask 1043456
      %v362 = vsel %vm361, %v357, %v358
      %vm363 = vcmask 343040
      %v364 = vsel %vm363, %v350, %v362
      %v365 = vsel %vm363, %v352, %v358
      %v366 = vsel %vm361, %v359, %v360
      %v367 = vsel %vm363, %v354, %v366
      %v368 = vsel %vm363, %v356, %v360
      %373 = vst [vmem:[#allocation3] sm:$0xff] %v364
      %374 = vst [vmem:[#allocation3 + $0x8] sm:$0xf] %v365
      %375 = vst [vmem:[#allocation3 + $0xc] sm:$0xff] %v367
      %376 = vst [vmem:[#allocation3 + $0x14] sm:$0xf] %v368
      %v377 = vld [vmem:[#allocation2] sm:$0xff]
      %v378 = vld [vmem:[#allocation2 + $0x8] sm:$0xff]
      %v379 = vld [vmem:[#allocation2 + $0x14] sm:$0xff]
      %v380 = vld [vmem:[#allocation2 + $0x1c] sm:$0xff]
      %385 = vrot.lane.b32.xlu0 %v377, 41
      %v386 = vpop.permute.xlu0 %385
      %387 = vrot.lane.b32.xlu0 %v378, 41
      %v388 = vpop.permute.xlu0 %387
      %389 = vrot.lane.b32.xlu0 %v379, 41
      %v390 = vpop.permute.xlu0 %389
      %391 = vrot.lane.b32.xlu0 %v380, 41
      %v392 = vpop.permute.xlu0 %391
      %v393 = vrot.slane %v386, 4
      %v394 = vrot.slane %v388, 4
      %v395 = vrot.slane %v390, 4
      %v396 = vrot.slane %v392, 4
      %v397 = vsel %vm361, %v393, %v394
      %vm398 = vcmask 334848
      %v399 = vsel %vm398, %v386, %v397
      %v400 = vsel %vm398, %v388, %v394
      %v401 = vsel %vm361, %v395, %v396
      %v402 = vsel %vm398, %v390, %v401
      %v403 = vsel %vm398, %v392, %v396
      %408 = vst [vmem:[#allocation3 + $0x18] sm:$0xff] %v399
      %409 = vst [vmem:[#allocation3 + $0x20] sm:$0xf] %v400
      %410 = vst [vmem:[#allocation3 + $0x24] sm:$0xff] %v402
      %411 = vst [vmem:[#allocation3 + $0x2c] sm:$0xf] %v403
      %v412 = vld [vmem:[#allocation2] sm:$0xff]
      %v413 = vld [vmem:[#allocation2 + $0x8] sm:$0xff]
      %v414 = vld [vmem:[#allocation2 + $0x14] sm:$0xff]
      %v415 = vld [vmem:[#allocation2 + $0x1c] sm:$0xff]
      %420 = vrot.lane.b32.xlu0 %v412, 40
      %v421 = vpop.permute.xlu0 %420
      %422 = vrot.lane.b32.xlu0 %v413, 40
      %v423 = vpop.permute.xlu0 %422
      %424 = vrot.lane.b32.xlu0 %v414, 40
      %v425 = vpop.permute.xlu0 %424
      %426 = vrot.lane.b32.xlu0 %v415, 40
      %v427 = vpop.permute.xlu0 %426
      %v428 = vrot.slane %v421, 4
      %v429 = vrot.slane %v423, 4
      %v430 = vrot.slane %v425, 4
      %v431 = vrot.slane %v427, 4
      %v432 = vsel %vm361, %v428, %v429
      %vm433 = vcmask 326656
      %v434 = vsel %vm433, %v421, %v432
      %v435 = vsel %vm433, %v423, %v429
      %v436 = vsel %vm361, %v430, %v431
      %v437 = vsel %vm433, %v425, %v436
      %v438 = vsel %vm433, %v427, %v431
      %443 = vst [vmem:[#allocation3 + $0x30] sm:$0xff] %v434
      %444 = vst [vmem:[#allocation3 + $0x38] sm:$0xf] %v435
      %445 = vst [vmem:[#allocation3 + $0x3c] sm:$0xff] %v437
      %446 = vst [vmem:[#allocation3 + $0x44] sm:$0xf] %v438
      %v447 = vld [vmem:[#allocation2] sm:$0xff]
      %v448 = vld [vmem:[#allocation2 + $0x8] sm:$0xff]
      %v449 = vld [vmem:[#allocation2 + $0x14] sm:$0xff]
      %v450 = vld [vmem:[#allocation2 + $0x1c] sm:$0xff]
      %455 = vrot.lane.b32.xlu0 %v447, 39
      %v456 = vpop.permute.xlu0 %455
      %457 = vrot.lane.b32.xlu0 %v448, 39
      %v458 = vpop.permute.xlu0 %457
      %459 = vrot.lane.b32.xlu0 %v449, 39
      %v460 = vpop.permute.xlu0 %459
      %461 = vrot.lane.b32.xlu0 %v450, 39
      %v462 = vpop.permute.xlu0 %461
      %v463 = vrot.slane %v456, 4
      %v464 = vrot.slane %v458, 4
      %v465 = vrot.slane %v460, 4
      %v466 = vrot.slane %v462, 4
      %v467 = vsel %vm361, %v463, %v464
      %vm468 = vcmask 318464
      %v469 = vsel %vm468, %v456, %v467
      %v470 = vsel %vm468, %v458, %v464
      %v471 = vsel %vm361, %v465, %v466
      %v472 = vsel %vm468, %v460, %v471
      %v473 = vsel %vm468, %v462, %v466
      %478 = vst [vmem:[#allocation3 + $0x48] sm:$0xff] %v469
      %479 = vst [vmem:[#allocation3 + $0x50] sm:$0xf] %v470
      %480 = vst [vmem:[#allocation3 + $0x54] sm:$0xff] %v472
      %481 = vst [vmem:[#allocation3 + $0x5c] sm:$0xf] %v473
      %v482 = vld [vmem:[#allocation2] sm:$0xff]
      %v483 = vld [vmem:[#allocation2 + $0x8] sm:$0xff]
      %v484 = vld [vmem:[#allocation2 + $0x14] sm:$0xff]
      %v485 = vld [vmem:[#allocation2 + $0x1c] sm:$0xff]
      %490 = vrot.lane.b32.xlu0 %v482, 38
      %v491 = vpop.permute.xlu0 %490
      %492 = vrot.lane.b32.xlu0 %v483, 38
      %v493 = vpop.permute.xlu0 %492
      %494 = vrot.lane.b32.xlu0 %v484, 38
      %v495 = vpop.permute.xlu0 %494
      %496 = vrot.lane.b32.xlu0 %v485, 38
      %v497 = vpop.permute.xlu0 %496
      %v498 = vrot.slane %v491, 4
      %v499 = vrot.slane %v493, 4
      %v500 = vrot.slane %v495, 4
      %v501 = vrot.slane %v497, 4
      %v502 = vsel %vm361, %v498, %v499
      %vm503 = vcmask 310272
      %v504 = vsel %vm503, %v491, %v502
      %v505 = vsel %vm503, %v493, %v499
      %v506 = vsel %vm361, %v500, %v501
      %v507 = vsel %vm503, %v495, %v506
      %v508 = vsel %vm503, %v497, %v501
      %513 = vst [vmem:[#allocation3 + $0x60] sm:$0xff] %v504
      %514 = vst [vmem:[#allocation3 + $0x68] sm:$0xf] %v505
      %515 = vst [vmem:[#allocation3 + $0x6c] sm:$0xff] %v507
      %516 = vst [vmem:[#allocation3 + $0x74] sm:$0xf] %v508
      %v517 = vld [vmem:[#allocation2] sm:$0xff]
      %v518 = vld [vmem:[#allocation2 + $0x8] sm:$0xff]
      %v519 = vld [vmem:[#allocation2 + $0x14] sm:$0xff]
      %v520 = vld [vmem:[#allocation2 + $0x1c] sm:$0xff]
      %525 = vrot.lane.b32.xlu0 %v517, 22
      %v526 = vpop.permute.xlu0 %525
      %527 = vrot.lane.b32.xlu0 %v518, 22
      %v528 = vpop.permute.xlu0 %527
      %529 = vrot.lane.b32.xlu0 %v519, 22
      %v530 = vpop.permute.xlu0 %529
      %531 = vrot.lane.b32.xlu0 %v520, 22
      %v532 = vpop.permute.xlu0 %531
      %v533 = vrot.slane %v526, 4
      %v534 = vrot.slane %v528, 4
      %v535 = vrot.slane %v530, 4
      %v536 = vrot.slane %v532, 4
      %v537 = vsel %vm361, %v533, %v534
      %vm538 = vcmask 179200
      %v539 = vsel %vm538, %v526, %v537
      %v540 = vsel %vm538, %v528, %v534
      %v541 = vsel %vm361, %v535, %v536
      %v542 = vsel %vm538, %v530, %v541
      %v543 = vsel %vm538, %v532, %v536
      %548 = vst [vmem:[#allocation3 + $0x78] sm:$0xff] %v539
      %549 = vst [vmem:[#allocation3 + $0x80] sm:$0xf] %v540
      %550 = vst [vmem:[#allocation3 + $0x84] sm:$0xff] %v542
      %551 = vst [vmem:[#allocation3 + $0x8c] sm:$0xf] %v543
      %v552 = vld [vmem:[#allocation2] sm:$0xff]
      %v553 = vld [vmem:[#allocation2 + $0x8] sm:$0xff]
      %v554 = vld [vmem:[#allocation2 + $0x14] sm:$0xff]
      %v555 = vld [vmem:[#allocation2 + $0x1c] sm:$0xff]
      %560 = vrot.lane.b32.xlu0 %v552, 21
      %v561 = vpop.permute.xlu0 %560
      %562 = vrot.lane.b32.xlu0 %v553, 21
      %v563 = vpop.permute.xlu0 %562
      %564 = vrot.lane.b32.xlu0 %v554, 21
      %v565 = vpop.permute.xlu0 %564
      %566 = vrot.lane.b32.xlu0 %v555, 21
      %v567 = vpop.permute.xlu0 %566
      %v568 = vrot.slane %v561, 4
      %v569 = vrot.slane %v563, 4
      %v570 = vrot.slane %v565, 4
      %v571 = vrot.slane %v567, 4
      %v572 = vsel %vm361, %v568, %v569
      %vm573 = vcmask 171008
      %v574 = vsel %vm573, %v561, %v572
      %v575 = vsel %vm573, %v563, %v569
      %v576 = vsel %vm361, %v570, %v571
      %v577 = vsel %vm573, %v565, %v576
      %v578 = vsel %vm573, %v567, %v571
      %583 = vst [vmem:[#allocation3 + $0x90] sm:$0xff] %v574
      %584 = vst [vmem:[#allocation3 + $0x98] sm:$0xf] %v575
      %585 = vst [vmem:[#allocation3 + $0x9c] sm:$0xff] %v577
      %586 = vst [vmem:[#allocation3 + $0xa4] sm:$0xf] %v578
      %v587 = vld [vmem:[#allocation2] sm:$0xff]
      %v588 = vld [vmem:[#allocation2 + $0x8] sm:$0xff]
      %v589 = vld [vmem:[#allocation2 + $0x14] sm:$0xff]
      %v590 = vld [vmem:[#allocation2 + $0x1c] sm:$0xff]
      %595 = vrot.lane.b32.xlu0 %v587, 20
      %v596 = vpop.permute.xlu0 %595
      %597 = vrot.lane.b32.xlu0 %v588, 20
      %v598 = vpop.permute.xlu0 %597
      %599 = vrot.lane.b32.xlu0 %v589, 20
      %v600 = vpop.permute.xlu0 %599
      %601 = vrot.lane.b32.xlu0 %v590, 20
      %v602 = vpop.permute.xlu0 %601
      %v603 = vrot.slane %v596, 4
      %v604 = vrot.slane %v598, 4
      %v605 = vrot.slane %v600, 4
      %v606 = vrot.slane %v602, 4
      %v607 = vsel %vm361, %v603, %v604
      %vm608 = vcmask 162816
      %v609 = vsel %vm608, %v596, %v607
      %v610 = vsel %vm608, %v598, %v604
      %v611 = vsel %vm361, %v605, %v606
      %v612 = vsel %vm608, %v600, %v611
      %v613 = vsel %vm608, %v602, %v606
      %618 = vst [vmem:[#allocation3 + $0xa8] sm:$0xff] %v609
      %619 = vst [vmem:[#allocation3 + $0xb0] sm:$0xf] %v610
      %620 = vst [vmem:[#allocation3 + $0xb4] sm:$0xff] %v612
      %621 = vst [vmem:[#allocation3 + $0xbc] sm:$0xf] %v613
      %v622 = vld [vmem:[#allocation2] sm:$0xff]
      %v623 = vld [vmem:[#allocation2 + $0x8] sm:$0xff]
      %v624 = vld [vmem:[#allocation2 + $0x14] sm:$0xff]
      %v625 = vld [vmem:[#allocation2 + $0x1c] sm:$0xff]
      %630 = vrot.lane.b32.xlu0 %v622, 19
      %v631 = vpop.permute.xlu0 %630
      %632 = vrot.lane.b32.xlu0 %v623, 19
      %v633 = vpop.permute.xlu0 %632
      %634 = vrot.lane.b32.xlu0 %v624, 19
      %v635 = vpop.permute.xlu0 %634
      %636 = vrot.lane.b32.xlu0 %v625, 19
      %v637 = vpop.permute.xlu0 %636
      %v638 = vrot.slane %v631, 4
      %v639 = vrot.slane %v633, 4
      %v640 = vrot.slane %v635, 4
      %v641 = vrot.slane %v637, 4
      %v642 = vsel %vm361, %v638, %v639
      %vm643 = vcmask 154624
      %v644 = vsel %vm643, %v631, %v642
      %v645 = vsel %vm643, %v633, %v639
      %v646 = vsel %vm361, %v640, %v641
      %v647 = vsel %vm643, %v635, %v646
      %v648 = vsel %vm643, %v637, %v641
      %653 = vst [vmem:[#allocation3 + $0xc0] sm:$0xff] %v644
      %654 = vst [vmem:[#allocation3 + $0xc8] sm:$0xf] %v645
      %655 = vst [vmem:[#allocation3 + $0xcc] sm:$0xff] %v647
      %656 = vst [vmem:[#allocation3 + $0xd4] sm:$0xf] %v648
      %v657 = vld [vmem:[#allocation2] sm:$0xff]
      %v658 = vld [vmem:[#allocation2 + $0x8] sm:$0xff]
      %v659 = vld [vmem:[#allocation2 + $0x14] sm:$0xff]
      %v660 = vld [vmem:[#allocation2 + $0x1c] sm:$0xff]
      %665 = vrot.lane.b32.xlu0 %v657, 18
      %v666 = vpop.permute.xlu0 %665
      %667 = vrot.lane.b32.xlu0 %v658, 18
      %v668 = vpop.permute.xlu0 %667
      %669 = vrot.lane.b32.xlu0 %v659, 18
      %v670 = vpop.permute.xlu0 %669
      %671 = vrot.lane.b32.xlu0 %v660, 18
      %v672 = vpop.permute.xlu0 %671
      %v673 = vrot.slane %v666, 4
      %v674 = vrot.slane %v668, 4
      %v675 = vrot.slane %v670, 4
      %v676 = vrot.slane %v672, 4
      %v677 = vsel %vm361, %v673, %v674
      %vm678 = vcmask 146432
      %v679 = vsel %vm678, %v666, %v677
      %v680 = vsel %vm678, %v668, %v674
      %v681 = vsel %vm361, %v675, %v676
      %v682 = vsel %vm678, %v670, %v681
      %v683 = vsel %vm678, %v672, %v676
      %688 = vst [vmem:[#allocation3 + $0xd8] sm:$0xff] %v679
      %689 = vst [vmem:[#allocation3 + $0xe0] sm:$0xf] %v680
      %690 = vst [vmem:[#allocation3 + $0xe4] sm:$0xff] %v682
      %691 = vst [vmem:[#allocation3 + $0xec] sm:$0xf] %v683
      %v692 = vld [vmem:[#allocation2] sm:$0xff]
      %v693 = vld [vmem:[#allocation2 + $0x8] sm:$0xff]
      %v694 = vld [vmem:[#allocation2 + $0x14] sm:$0xff]
      %v695 = vld [vmem:[#allocation2 + $0x1c] sm:$0xff]
      %700 = vrot.lane.b32.xlu0 %v692, 2
      %v701 = vpop.permute.xlu0 %700
      %702 = vrot.lane.b32.xlu0 %v693, 2
      %v703 = vpop.permute.xlu0 %702
      %704 = vrot.lane.b32.xlu0 %v694, 2
      %v705 = vpop.permute.xlu0 %704
      %706 = vrot.lane.b32.xlu0 %v695, 2
      %v707 = vpop.permute.xlu0 %706
      %v708 = vrot.slane %v701, 4
      %v709 = vrot.slane %v703, 4
      %v710 = vrot.slane %v705, 4
      %v711 = vrot.slane %v707, 4
      %v712 = vsel %vm361, %v708, %v709
      %vm713 = vcmask 15360
      %v714 = vsel %vm713, %v701, %v712
      %v715 = vsel %vm713, %v703, %v709
      %v716 = vsel %vm361, %v710, %v711
      %v717 = vsel %vm713, %v705, %v716
      %v718 = vsel %vm713, %v707, %v711
      %723 = vst [vmem:[#allocation3 + $0xf0] sm:$0xff] %v714
      %724 = vst [vmem:[#allocation3 + $0xf8] sm:$0xf] %v715
      %725 = vst [vmem:[#allocation3 + $0xfc] sm:$0xff] %v717
      %726 = vst [vmem:[#allocation3 + $0x104] sm:$0xf] %v718
      %v727 = vld [vmem:[#allocation2] sm:$0xff]
      %v728 = vld [vmem:[#allocation2 + $0x8] sm:$0xff]
      %v729 = vld [vmem:[#allocation2 + $0x14] sm:$0xff]
      %v730 = vld [vmem:[#allocation2 + $0x1c] sm:$0xff]
      %735 = vrot.lane.b32.xlu0 %v727, 1
      %v736 = vpop.permute.xlu0 %735
      %737 = vrot.lane.b32.xlu0 %v728, 1
      %v738 = vpop.permute.xlu0 %737
      %739 = vrot.lane.b32.xlu0 %v729, 1
      %v740 = vpop.permute.xlu0 %739
      %741 = vrot.lane.b32.xlu0 %v730, 1
      %v742 = vpop.permute.xlu0 %741
      %v743 = vrot.slane %v736, 4
      %v744 = vrot.slane %v738, 4
      %v745 = vrot.slane %v740, 4
      %v746 = vrot.slane %v742, 4
      %v747 = vsel %vm361, %v743, %v744
      %vm748 = vcmask 7168
      %v749 = vsel %vm748, %v736, %v747
      %v750 = vsel %vm748, %v738, %v744
      %v751 = vsel %vm361, %v745, %v746
      %v752 = vsel %vm748, %v740, %v751
      %v753 = vsel %vm748, %v742, %v746
      %758 = vst [vmem:[#allocation3 + $0x108] sm:$0xff] %v749
      %759 = vst [vmem:[#allocation3 + $0x110] sm:$0xf] %v750
      %760 = vst [vmem:[#allocation3 + $0x114] sm:$0xff] %v752
      %761 = vst [vmem:[#allocation3 + $0x11c] sm:$0xf] %v753
      %v762 = vld [vmem:[#allocation2 + $0x4] sm:$0xff]
      %v763 = vld [vmem:[#allocation2 + $0xc] sm:$0xf]
      %v764 = vld [vmem:[#allocation2 + $0x18] sm:$0xff]
      %v765 = vld [vmem:[#allocation2 + $0x20] sm:$0xf]
      %766 = vst [vmem:[#allocation3 + $0x120] sm:$0xff] %v762
      %767 = vst [vmem:[#allocation3 + $0x128] sm:$0xf] %v763
      %768 = vst [vmem:[#allocation3 + $0x12c] sm:$0xff] %v764
      %769 = vst [vmem:[#allocation3 + $0x134] sm:$0xf] %v765
      %v770 = vld [vmem:[#allocation2 + $0x4] sm:$0xff]
      %v771 = vld [vmem:[#allocation2 + $0xc] sm:$0xff]
      %v772 = vld [vmem:[#allocation2 + $0x18] sm:$0xff]
      %v773 = vld [vmem:[#allocation2 + $0x20] sm:$0xff]
      %778 = vrot.lane.b32.xlu0 %v770, 127
      %v779 = vpop.permute.xlu0 %778
      %780 = vrot.lane.b32.xlu0 %v771, 127
      %v781 = vpop.permute.xlu0 %780
      %782 = vrot.lane.b32.xlu0 %v772, 127
      %v783 = vpop.permute.xlu0 %782
      %784 = vrot.lane.b32.xlu0 %v773, 127
      %v785 = vpop.permute.xlu0 %784
      %v786 = vrot.slane %v779, 4
      %v787 = vrot.slane %v781, 4
      %v788 = vrot.slane %v783, 4
      %v789 = vrot.slane %v785, 4
      %v790 = vsel %vm361, %v786, %v787
      %vm791 = vcmask 1039360
      %v792 = vsel %vm791, %v779, %v790
      %v793 = vsel %vm791, %v781, %v787
      %v794 = vsel %vm361, %v788, %v789
      %v795 = vsel %vm791, %v783, %v794
      %v796 = vsel %vm791, %v785, %v789
      %801 = vst [vmem:[#allocation3 + $0x138] sm:$0xff] %v792
      %802 = vst [vmem:[#allocation3 + $0x140] sm:$0xf] %v793
      %803 = vst [vmem:[#allocation3 + $0x144] sm:$0xff] %v795
      %804 = vst [vmem:[#allocation3 + $0x14c] sm:$0xf] %v796
      %v805 = vld [vmem:[#allocation2 + $0x4] sm:$0xff]
      %v806 = vld [vmem:[#allocation2 + $0xc] sm:$0xff]
      %v807 = vld [vmem:[#allocation2 + $0x18] sm:$0xff]
      %v808 = vld [vmem:[#allocation2 + $0x20] sm:$0xff]
      %813 = vrot.lane.b32.xlu0 %v805, 126
      %v814 = vpop.permute.xlu0 %813
      %815 = vrot.lane.b32.xlu0 %v806, 126
      %v816 = vpop.permute.xlu0 %815
      %817 = vrot.lane.b32.xlu0 %v807, 126
      %v818 = vpop.permute.xlu0 %817
      %819 = vrot.lane.b32.xlu0 %v808, 126
      %v820 = vpop.permute.xlu0 %819
      %v821 = vrot.slane %v814, 4
      %v822 = vrot.slane %v816, 4
      %v823 = vrot.slane %v818, 4
      %v824 = vrot.slane %v820, 4
      %v825 = vsel %vm361, %v821, %v822
      %vm826 = vcmask 1031168
      %v827 = vsel %vm826, %v814, %v825
      %v828 = vsel %vm826, %v816, %v822
      %v829 = vsel %vm361, %v823, %v824
      %v830 = vsel %vm826, %v818, %v829
      %v831 = vsel %vm826, %v820, %v824
      %836 = vst [vmem:[#allocation3 + $0x150] sm:$0xff] %v827
      %837 = vst [vmem:[#allocation3 + $0x158] sm:$0xf] %v828
      %838 = vst [vmem:[#allocation3 + $0x15c] sm:$0xff] %v830
      %839 = vst [vmem:[#allocation3 + $0x164] sm:$0xf] %v831
      %v840 = vld [vmem:[#allocation2 + $0x4] sm:$0xff]
      %v841 = vld [vmem:[#allocation2 + $0xc] sm:$0xff]
      %v842 = vld [vmem:[#allocation2 + $0x18] sm:$0xff]
      %v843 = vld [vmem:[#allocation2 + $0x20] sm:$0xff]
      %848 = vrot.lane.b32.xlu0 %v840, 110
      %v849 = vpop.permute.xlu0 %848
      %850 = vrot.lane.b32.xlu0 %v841, 110
      %v851 = vpop.permute.xlu0 %850
      %852 = vrot.lane.b32.xlu0 %v842, 110
      %v853 = vpop.permute.xlu0 %852
      %854 = vrot.lane.b32.xlu0 %v843, 110
      %v855 = vpop.permute.xlu0 %854
      %v856 = vrot.slane %v849, 4
      %v857 = vrot.slane %v851, 4
      %v858 = vrot.slane %v853, 4
      %v859 = vrot.slane %v855, 4
      %v860 = vsel %vm361, %v856, %v857
      %vm861 = vcmask 900096
      %v862 = vsel %vm861, %v849, %v860
      %v863 = vsel %vm861, %v851, %v857
      %v864 = vsel %vm361, %v858, %v859
      %v865 = vsel %vm861, %v853, %v864
      %v866 = vsel %vm861, %v855, %v859
      %871 = vst [vmem:[#allocation3 + $0x168] sm:$0xff] %v862
      %872 = vst [vmem:[#allocation3 + $0x170] sm:$0xf] %v863
      %873 = vst [vmem:[#allocation3 + $0x174] sm:$0xff] %v865
      %874 = vst [vmem:[#allocation3 + $0x17c] sm:$0xf] %v866
      %v875 = vld [vmem:[#allocation2 + $0x4] sm:$0xff]
      %v876 = vld [vmem:[#allocation2 + $0xc] sm:$0xff]
      %v877 = vld [vmem:[#allocation2 + $0x18] sm:$0xff]
      %v878 = vld [vmem:[#allocation2 + $0x20] sm:$0xff]
      %883 = vrot.lane.b32.xlu0 %v875, 109
      %v884 = vpop.permute.xlu0 %883
      %885 = vrot.lane.b32.xlu0 %v876, 109
      %v886 = vpop.permute.xlu0 %885
      %887 = vrot.lane.b32.xlu0 %v877, 109
      %v888 = vpop.permute.xlu0 %887
      %889 = vrot.lane.b32.xlu0 %v878, 109
      %v890 = vpop.permute.xlu0 %889
      %v891 = vrot.slane %v884, 4
      %v892 = vrot.slane %v886, 4
      %v893 = vrot.slane %v888, 4
      %v894 = vrot.slane %v890, 4
      %v895 = vsel %vm361, %v891, %v892
      %vm896 = vcmask 891904
      %v897 = vsel %vm896, %v884, %v895
      %v898 = vsel %vm896, %v886, %v892
      %v899 = vsel %vm361, %v893, %v894
      %v900 = vsel %vm896, %v888, %v899
      %v901 = vsel %vm896, %v890, %v894
      %906 = vst [vmem:[#allocation3 + $0x180] sm:$0xff] %v897
      %907 = vst [vmem:[#allocation3 + $0x188] sm:$0xf] %v898
      %908 = vst [vmem:[#allocation3 + $0x18c] sm:$0xff] %v900
      %909 = vst [vmem:[#allocation3 + $0x194] sm:$0xf] %v901
      %v910 = vld [vmem:[#allocation2 + $0x4] sm:$0xff]
      %v911 = vld [vmem:[#allocation2 + $0xc] sm:$0xff]
      %v912 = vld [vmem:[#allocation2 + $0x18] sm:$0xff]
      %v913 = vld [vmem:[#allocation2 + $0x20] sm:$0xff]
      %918 = vrot.lane.b32.xlu0 %v910, 108
      %v919 = vpop.permute.xlu0 %918
      %920 = vrot.lane.b32.xlu0 %v911, 108
      %v921 = vpop.permute.xlu0 %920
      %922 = vrot.lane.b32.xlu0 %v912, 108
      %v923 = vpop.permute.xlu0 %922
      %924 = vrot.lane.b32.xlu0 %v913, 108
      %v925 = vpop.permute.xlu0 %924
      %v926 = vrot.slane %v919, 4
      %v927 = vrot.slane %v921, 4
      %v928 = vrot.slane %v923, 4
      %v929 = vrot.slane %v925, 4
      %v930 = vsel %vm361, %v926, %v927
      %vm931 = vcmask 883712
      %v932 = vsel %vm931, %v919, %v930
      %v933 = vsel %vm931, %v921, %v927
      %v934 = vsel %vm361, %v928, %v929
      %v935 = vsel %vm931, %v923, %v934
      %v936 = vsel %vm931, %v925, %v929
      %941 = vst [vmem:[#allocation3 + $0x198] sm:$0xff] %v932
      %942 = vst [vmem:[#allocation3 + $0x1a0] sm:$0xf] %v933
      %943 = vst [vmem:[#allocation3 + $0x1a4] sm:$0xff] %v935
      %944 = vst [vmem:[#allocation3 + $0x1ac] sm:$0xf] %v936
      %v945 = vld [vmem:[#allocation2 + $0x4] sm:$0xff]
      %v946 = vld [vmem:[#allocation2 + $0xc] sm:$0xff]
      %v947 = vld [vmem:[#allocation2 + $0x18] sm:$0xff]
      %v948 = vld [vmem:[#allocation2 + $0x20] sm:$0xff]
      %953 = vrot.lane.b32.xlu0 %v945, 107
      %v954 = vpop.permute.xlu0 %953
      %955 = vrot.lane.b32.xlu0 %v946, 107
      %v956 = vpop.permute.xlu0 %955
      %957 = vrot.lane.b32.xlu0 %v947, 107
      %v958 = vpop.permute.xlu0 %957
      %959 = vrot.lane.b32.xlu0 %v948, 107
      %v960 = vpop.permute.xlu0 %959
      %v961 = vrot.slane %v954, 4
      %v962 = vrot.slane %v956, 4
      %v963 = vrot.slane %v958, 4
      %v964 = vrot.slane %v960, 4
      %v965 = vsel %vm361, %v961, %v962
      %vm966 = vcmask 875520
      %v967 = vsel %vm966, %v954, %v965
      %v968 = vsel %vm966, %v956, %v962
      %v969 = vsel %vm361, %v963, %v964
      %v970 = vsel %vm966, %v958, %v969
      %v971 = vsel %vm966, %v960, %v964
      %976 = vst [vmem:[#allocation3 + $0x1b0] sm:$0xff] %v967
      %977 = vst [vmem:[#allocation3 + $0x1b8] sm:$0xf] %v968
      %978 = vst [vmem:[#allocation3 + $0x1bc] sm:$0xff] %v970
      %979 = vst [vmem:[#allocation3 + $0x1c4] sm:$0xf] %v971
      %v980 = vld [vmem:[#allocation2 + $0x4] sm:$0xff]
      %v981 = vld [vmem:[#allocation2 + $0xc] sm:$0xff]
      %v982 = vld [vmem:[#allocation2 + $0x18] sm:$0xff]
      %v983 = vld [vmem:[#allocation2 + $0x20] sm:$0xff]
      %988 = vrot.lane.b32.xlu0 %v980, 106
      %v989 = vpop.permute.xlu0 %988
      %990 = vrot.lane.b32.xlu0 %v981, 106
      %v991 = vpop.permute.xlu0 %990
      %992 = vrot.lane.b32.xlu0 %v982, 106
      %v993 = vpop.permute.xlu0 %992
      %994 = vrot.lane.b32.xlu0 %v983, 106
      %v995 = vpop.permute.xlu0 %994
      %v996 = vrot.slane %v989, 4
      %v997 = vrot.slane %v991, 4
      %v998 = vrot.slane %v993, 4
      %v999 = vrot.slane %v995, 4
      %v1000 = vsel %vm361, %v996, %v997
      %vm1001 = vcmask 867328
      %v1002 = vsel %vm1001, %v989, %v1000
      %v1003 = vsel %vm1001, %v991, %v997
      %v1004 = vsel %vm361, %v998, %v999
      %v1005 = vsel %vm1001, %v993, %v1004
      %v1006 = vsel %vm1001, %v995, %v999
      %1011 = vst [vmem:[#allocation3 + $0x1c8] sm:$0xff] %v1002
      %1012 = vst [vmem:[#allocation3 + $0x1d0] sm:$0xf] %v1003
      %1013 = vst [vmem:[#allocation3 + $0x1d4] sm:$0xff] %v1005
      %1014 = vst [vmem:[#allocation3 + $0x1dc] sm:$0xf] %v1006
      %v1015 = vld [vmem:[#allocation2 + $0x4] sm:$0xff]
      %v1016 = vld [vmem:[#allocation2 + $0xc] sm:$0xff]
      %v1017 = vld [vmem:[#allocation2 + $0x18] sm:$0xff]
      %v1018 = vld [vmem:[#allocation2 + $0x20] sm:$0xff]
      %1023 = vrot.lane.b32.xlu0 %v1015, 90
      %v1024 = vpop.permute.xlu0 %1023
      %1025 = vrot.lane.b32.xlu0 %v1016, 90
      %v1026 = vpop.permute.xlu0 %1025
      %1027 = vrot.lane.b32.xlu0 %v1017, 90
      %v1028 = vpop.permute.xlu0 %1027
      %1029 = vrot.lane.b32.xlu0 %v1018, 90
      %v1030 = vpop.permute.xlu0 %1029
      %v1031 = vrot.slane %v1024, 4
      %v1032 = vrot.slane %v1026, 4
      %v1033 = vrot.slane %v1028, 4
      %v1034 = vrot.slane %v1030, 4
      %v1035 = vsel %vm361, %v1031, %v1032
      %vm1036 = vcmask 736256
      %v1037 = vsel %vm1036, %v1024, %v1035
      %v1038 = vsel %vm1036, %v1026, %v1032
      %v1039 = vsel %vm361, %v1033, %v1034
      %v1040 = vsel %vm1036, %v1028, %v1039
      %v1041 = vsel %vm1036, %v1030, %v1034
      %1046 = vst [vmem:[#allocation3 + $0x1e0] sm:$0xff] %v1037
      %1047 = vst [vmem:[#allocation3 + $0x1e8] sm:$0xf] %v1038
      %1048 = vst [vmem:[#allocation3 + $0x1ec] sm:$0xff] %v1040
      %1049 = vst [vmem:[#allocation3 + $0x1f4] sm:$0xf] %v1041
      %v1050 = vld [vmem:[#allocation2 + $0x4] sm:$0xff]
      %v1051 = vld [vmem:[#allocation2 + $0xc] sm:$0xff]
      %v1052 = vld [vmem:[#allocation2 + $0x18] sm:$0xff]
      %v1053 = vld [vmem:[#allocation2 + $0x20] sm:$0xff]
      %1058 = vrot.lane.b32.xlu0 %v1050, 89
      %v1059 = vpop.permute.xlu0 %1058
      %1060 = vrot.lane.b32.xlu0 %v1051, 89
      %v1061 = vpop.permute.xlu0 %1060
      %1062 = vrot.lane.b32.xlu0 %v1052, 89
      %v1063 = vpop.permute.xlu0 %1062
      %1064 = vrot.lane.b32.xlu0 %v1053, 89
      %v1065 = vpop.permute.xlu0 %1064
      %v1066 = vrot.slane %v1059, 4
      %v1067 = vrot.slane %v1061, 4
      %v1068 = vrot.slane %v1063, 4
      %v1069 = vrot.slane %v1065, 4
      %v1070 = vsel %vm361, %v1066, %v1067
      %vm1071 = vcmask 728064
      %v1072 = vsel %vm1071, %v1059, %v1070
      %v1073 = vsel %vm1071, %v1061, %v1067
      %v1074 = vsel %vm361, %v1068, %v1069
      %v1075 = vsel %vm1071, %v1063, %v1074
      %v1076 = vsel %vm1071, %v1065, %v1069
      %1081 = vst [vmem:[#allocation3 + $0x1f8] sm:$0xff] %v1072
      %1082 = vst [vmem:[#allocation3 + $0x200] sm:$0xf] %v1073
      %1083 = vst [vmem:[#allocation3 + $0x204] sm:$0xff] %v1075
      %1084 = vst [vmem:[#allocation3 + $0x20c] sm:$0xf] %v1076
      %v1085 = vld [vmem:[#allocation2 + $0x4] sm:$0xff]
      %v1086 = vld [vmem:[#allocation2 + $0xc] sm:$0xff]
      %v1087 = vld [vmem:[#allocation2 + $0x18] sm:$0xff]
      %v1088 = vld [vmem:[#allocation2 + $0x20] sm:$0xff]
      %1093 = vrot.lane.b32.xlu0 %v1085, 88
      %v1094 = vpop.permute.xlu0 %1093
      %1095 = vrot.lane.b32.xlu0 %v1086, 88
      %v1096 = vpop.permute.xlu0 %1095
      %1097 = vrot.lane.b32.xlu0 %v1087, 88
      %v1098 = vpop.permute.xlu0 %1097
      %1099 = vrot.lane.b32.xlu0 %v1088, 88
      %v1100 = vpop.permute.xlu0 %1099
      %v1101 = vrot.slane %v1094, 4
      %v1102 = vrot.slane %v1096, 4
      %v1103 = vrot.slane %v1098, 4
      %v1104 = vrot.slane %v1100, 4
      %v1105 = vsel %vm361, %v1101, %v1102
      %vm1106 = vcmask 719872
      %v1107 = vsel %vm1106, %v1094, %v1105
      %v1108 = vsel %vm1106, %v1096, %v1102
      %v1109 = vsel %vm361, %v1103, %v1104
      %v1110 = vsel %vm1106, %v1098, %v1109
      %v1111 = vsel %vm1106, %v1100, %v1104
      %1116 = vst [vmem:[#allocation3 + $0x210] sm:$0xff] %v1107
      %1117 = vst [vmem:[#allocation3 + $0x218] sm:$0xf] %v1108
      %1118 = vst [vmem:[#allocation3 + $0x21c] sm:$0xff] %v1110
      %1119 = vst [vmem:[#allocation3 + $0x224] sm:$0xf] %v1111
      %v1120 = vld [vmem:[#allocation2 + $0x4] sm:$0xff]
      %v1121 = vld [vmem:[#allocation2 + $0xc] sm:$0xff]
      %v1122 = vld [vmem:[#allocation2 + $0x18] sm:$0xff]
      %v1123 = vld [vmem:[#allocation2 + $0x20] sm:$0xff]
      %1128 = vrot.lane.b32.xlu0 %v1120, 87
      %v1129 = vpop.permute.xlu0 %1128
      %1130 = vrot.lane.b32.xlu0 %v1121, 87
      %v1131 = vpop.permute.xlu0 %1130
      %1132 = vrot.lane.b32.xlu0 %v1122, 87
      %v1133 = vpop.permute.xlu0 %1132
      %1134 = vrot.lane.b32.xlu0 %v1123, 87
      %v1135 = vpop.permute.xlu0 %1134
      %v1136 = vrot.slane %v1129, 4
      %v1137 = vrot.slane %v1131, 4
      %v1138 = vrot.slane %v1133, 4
      %v1139 = vrot.slane %v1135, 4
      %v1140 = vsel %vm361, %v1136, %v1137
      %vm1141 = vcmask 711680
      %v1142 = vsel %vm1141, %v1129, %v1140
      %v1143 = vsel %vm1141, %v1131, %v1137
      %v1144 = vsel %vm361, %v1138, %v1139
      %v1145 = vsel %vm1141, %v1133, %v1144
      %v1146 = vsel %vm1141, %v1135, %v1139
      %1151 = vst [vmem:[#allocation3 + $0x228] sm:$0xff] %v1142
      %1152 = vst [vmem:[#allocation3 + $0x230] sm:$0xf] %v1143
      %1153 = vst [vmem:[#allocation3 + $0x234] sm:$0xff] %v1145
      %1154 = vst [vmem:[#allocation3 + $0x23c] sm:$0xf] %v1146
      %v1155 = vld [vmem:[#allocation2 + $0x4] sm:$0xff]
      %v1156 = vld [vmem:[#allocation2 + $0xc] sm:$0xff]
      %v1157 = vld [vmem:[#allocation2 + $0x18] sm:$0xff]
      %v1158 = vld [vmem:[#allocation2 + $0x20] sm:$0xff]
      %1163 = vrot.lane.b32.xlu0 %v1155, 86
      %v1164 = vpop.permute.xlu0 %1163
      %1165 = vrot.lane.b32.xlu0 %v1156, 86
      %v1166 = vpop.permute.xlu0 %1165
      %1167 = vrot.lane.b32.xlu0 %v1157, 86
      %v1168 = vpop.permute.xlu0 %1167
      %1169 = vrot.lane.b32.xlu0 %v1158, 86
      %v1170 = vpop.permute.xlu0 %1169
      %v1171 = vrot.slane %v1164, 4
      %v1172 = vrot.slane %v1166, 4
      %v1173 = vrot.slane %v1168, 4
      %v1174 = vrot.slane %v1170, 4
      %v1175 = vsel %vm361, %v1171, %v1172
      %vm1176 = vcmask 703488
      %v1177 = vsel %vm1176, %v1164, %v1175
      %v1178 = vsel %vm1176, %v1166, %v1172
      %v1179 = vsel %vm361, %v1173, %v1174
      %v1180 = vsel %vm1176, %v1168, %v1179
      %v1181 = vsel %vm1176, %v1170, %v1174
      %1186 = vst [vmem:[#allocation3 + $0x240] sm:$0xff] %v1177
      %1187 = vst [vmem:[#allocation3 + $0x248] sm:$0xf] %v1178
      %1188 = vst [vmem:[#allocation3 + $0x24c] sm:$0xff] %v1180
      %1189 = vst [vmem:[#allocation3 + $0x254] sm:$0xf] %v1181
      %v1190 = vld [vmem:[%s1] sm:$0xff]
      %v1191 = vld [vmem:[%s1 + $0x8] sm:$0xff]
      %v1192 = vld [vmem:[%s1 + $0x10] sm:$0xff]
      %v1193 = vld [vmem:[%s1 + $0x18] sm:$0xff]
      %v1194 = vld [vmem:[#allocation3] sm:$0xff]
      %v1195 = vld [vmem:[#allocation3 + $0x8] sm:$0xf]
      %v1196 = vld [vmem:[#allocation3 + $0xc] sm:$0xff]
      %v1197 = vld [vmem:[#allocation3 + $0x14] sm:$0xf]
      %v1198 = vld [vmem:[#allocation3 + $0x18] sm:$0xff]
      %v1199 = vld [vmem:[#allocation3 + $0x20] sm:$0xf]
      %v1200 = vld [vmem:[#allocation3 + $0x24] sm:$0xff]
      %v1201 = vld [vmem:[#allocation3 + $0x2c] sm:$0xf]
      %v1202 = vld [vmem:[#allocation3 + $0x30] sm:$0xff]
      %v1203 = vld [vmem:[#allocation3 + $0x38] sm:$0xf]
      %v1204 = vld [vmem:[#allocation3 + $0x3c] sm:$0xff]
      %v1205 = vld [vmem:[#allocation3 + $0x44] sm:$0xf]
      %v1206 = vld [vmem:[#allocation3 + $0x48] sm:$0xff]
      %v1207 = vld [vmem:[#allocation3 + $0x50] sm:$0xf]
      %v1208 = vld [vmem:[#allocation3 + $0x54] sm:$0xff]
      %v1209 = vld [vmem:[#allocation3 + $0x5c] sm:$0xf]
      %v1210 = vld [vmem:[#allocation3 + $0x60] sm:$0xff]
      %v1211 = vld [vmem:[#allocation3 + $0x68] sm:$0xf]
      %v1212 = vld [vmem:[#allocation3 + $0x6c] sm:$0xff]
      %v1213 = vld [vmem:[#allocation3 + $0x74] sm:$0xf]
      %v1214 = vld [vmem:[#allocation3 + $0x78] sm:$0xff]
      %v1215 = vld [vmem:[#allocation3 + $0x80] sm:$0xf]
      %v1216 = vld [vmem:[#allocation3 + $0x84] sm:$0xff]
      %v1217 = vld [vmem:[#allocation3 + $0x8c] sm:$0xf]
      %v1218 = vld [vmem:[#allocation3 + $0x90] sm:$0xff]
      %v1219 = vld [vmem:[#allocation3 + $0x98] sm:$0xf]
      %v1220 = vld [vmem:[#allocation3 + $0x9c] sm:$0xff]
      %v1221 = vld [vmem:[#allocation3 + $0xa4] sm:$0xf]
      %v1222 = vld [vmem:[#allocation3 + $0xa8] sm:$0xff]
      %v1223 = vld [vmem:[#allocation3 + $0xb0] sm:$0xf]
      %v1224 = vld [vmem:[#allocation3 + $0xb4] sm:$0xff]
      %v1225 = vld [vmem:[#allocation3 + $0xbc] sm:$0xf]
      %v1226 = vld [vmem:[#allocation3 + $0xc0] sm:$0xff]
      %v1227 = vld [vmem:[#allocation3 + $0xc8] sm:$0xf]
      %v1228 = vld [vmem:[#allocation3 + $0xcc] sm:$0xff]
      %v1229 = vld [vmem:[#allocation3 + $0xd4] sm:$0xf]
      %v1230 = vld [vmem:[#allocation3 + $0xd8] sm:$0xff]
      %v1231 = vld [vmem:[#allocation3 + $0xe0] sm:$0xf]
      %v1232 = vld [vmem:[#allocation3 + $0xe4] sm:$0xff]
      %v1233 = vld [vmem:[#allocation3 + $0xec] sm:$0xf]
      %v1234 = vld [vmem:[#allocation3 + $0xf0] sm:$0xff]
      %v1235 = vld [vmem:[#allocation3 + $0xf8] sm:$0xf]
      %v1236 = vld [vmem:[#allocation3 + $0xfc] sm:$0xff]
      %v1237 = vld [vmem:[#allocation3 + $0x104] sm:$0xf]
      %v1238 = vld [vmem:[#allocation3 + $0x108] sm:$0xff]
      %v1239 = vld [vmem:[#allocation3 + $0x110] sm:$0xf]
      %v1240 = vld [vmem:[#allocation3 + $0x114] sm:$0xff]
      %v1241 = vld [vmem:[#allocation3 + $0x11c] sm:$0xf]
      %v1242 = vld [vmem:[#allocation3 + $0x120] sm:$0xff]
      %v1243 = vld [vmem:[#allocation3 + $0x128] sm:$0xf]
      %v1244 = vld [vmem:[#allocation3 + $0x12c] sm:$0xff]
      %v1245 = vld [vmem:[#allocation3 + $0x134] sm:$0xf]
      %v1246 = vld [vmem:[#allocation3 + $0x138] sm:$0xff]
      %v1247 = vld [vmem:[#allocation3 + $0x140] sm:$0xf]
      %v1248 = vld [vmem:[#allocation3 + $0x144] sm:$0xff]
      %v1249 = vld [vmem:[#allocation3 + $0x14c] sm:$0xf]
      %v1250 = vld [vmem:[#allocation3 + $0x150] sm:$0xff]
      %v1251 = vld [vmem:[#allocation3 + $0x158] sm:$0xf]
      %v1252 = vld [vmem:[#allocation3 + $0x15c] sm:$0xff]
      %v1253 = vld [vmem:[#allocation3 + $0x164] sm:$0xf]
      %v1254 = vld [vmem:[#allocation3 + $0x168] sm:$0xff]
      %v1255 = vld [vmem:[#allocation3 + $0x170] sm:$0xf]
      %v1256 = vld [vmem:[#allocation3 + $0x174] sm:$0xff]
      %v1257 = vld [vmem:[#allocation3 + $0x17c] sm:$0xf]
      %v1258 = vld [vmem:[#allocation3 + $0x180] sm:$0xff]
      %v1259 = vld [vmem:[#allocation3 + $0x188] sm:$0xf]
      %v1260 = vld [vmem:[#allocation3 + $0x18c] sm:$0xff]
      %v1261 = vld [vmem:[#allocation3 + $0x194] sm:$0xf]
      %v1262 = vld [vmem:[#allocation3 + $0x198] sm:$0xff]
      %v1263 = vld [vmem:[#allocation3 + $0x1a0] sm:$0xf]
      %v1264 = vld [vmem:[#allocation3 + $0x1a4] sm:$0xff]
      %v1265 = vld [vmem:[#allocation3 + $0x1ac] sm:$0xf]
      %v1266 = vld [vmem:[#allocation3 + $0x1b0] sm:$0xff]
      %v1267 = vld [vmem:[#allocation3 + $0x1b8] sm:$0xf]
      %v1268 = vld [vmem:[#allocation3 + $0x1bc] sm:$0xff]
      %v1269 = vld [vmem:[#allocation3 + $0x1c4] sm:$0xf]
      %v1270 = vld [vmem:[#allocation3 + $0x1c8] sm:$0xff]
      %v1271 = vld [vmem:[#allocation3 + $0x1d0] sm:$0xf]
      %v1272 = vld [vmem:[#allocation3 + $0x1d4] sm:$0xff]
      %v1273 = vld [vmem:[#allocation3 + $0x1dc] sm:$0xf]
      %v1274 = vld [vmem:[#allocation3 + $0x1e0] sm:$0xff]
      %v1275 = vld [vmem:[#allocation3 + $0x1e8] sm:$0xf]
      %v1276 = vld [vmem:[#allocation3 + $0x1ec] sm:$0xff]
      %v1277 = vld [vmem:[#allocation3 + $0x1f4] sm:$0xf]
      %v1278 = vld [vmem:[#allocation3 + $0x1f8] sm:$0xff]
      %v1279 = vld [vmem:[#allocation3 + $0x200] sm:$0xf]
      %v1280 = vld [vmem:[#allocation3 + $0x204] sm:$0xff]
      %v1281 = vld [vmem:[#allocation3 + $0x20c] sm:$0xf]
      %v1282 = vld [vmem:[#allocation3 + $0x210] sm:$0xff]
      %v1283 = vld [vmem:[#allocation3 + $0x218] sm:$0xf]
      %v1284 = vld [vmem:[#allocation3 + $0x21c] sm:$0xff]
      %v1285 = vld [vmem:[#allocation3 + $0x224] sm:$0xf]
      %v1286 = vld [vmem:[#allocation3 + $0x228] sm:$0xff]
      %v1287 = vld [vmem:[#allocation3 + $0x230] sm:$0xf]
      %v1288 = vld [vmem:[#allocation3 + $0x234] sm:$0xff]
      %v1289 = vld [vmem:[#allocation3 + $0x23c] sm:$0xf]
      %v1290 = vld [vmem:[#allocation3 + $0x240] sm:$0xff]
      %v1291 = vld [vmem:[#allocation3 + $0x248] sm:$0xf]
      %v1292 = vld [vmem:[#allocation3 + $0x24c] sm:$0xff]
      %v1293 = vld [vmem:[#allocation3 + $0x254] sm:$0xf]
      %v1294 = vld [vmem:[%s2] sm:$0xff]
      %v1295 = vld [vmem:[%s2 + $0x8] sm:$0xff]
      %1297 = vset.pattern.permute.xlu0 0
      %1298 = vperm.xlu0 %1297, %v1294
      %v1299 = vpop.permute.xlu0 %1298
      %1302 = vset.pattern.permute.xlu0 0
      %1303 = vperm.xlu0 %1302, %v1295
      %v1304 = vpop.permute.xlu0 %1303
      %v1310 = vunpack.c.l.b16 %v1190
      %v1311 = vunpack.c.h.b16 %v1190
      %v1312 = vunpack.c.l.b16 %v1191
      %v1313 = vunpack.c.h.b16 %v1191
      %v1314 = vunpack.c.l.b16 %v1192
      %v1315 = vunpack.c.h.b16 %v1192
      %v1316 = vunpack.c.l.b16 %v1193
      %v1317 = vunpack.c.h.b16 %v1193
      %v1318 = vpack.c.b16 %v1314, %v1310
      %v1319 = vpack.c.b16 %v1315, %v1311
      %v1320 = vpack.c.b16 %v1316, %v1312
      %v1321 = vpack.c.b16 %v1317, %v1313
      %v1425 = vunpack.c.l.b16 %v1194
      %v1426 = vunpack.c.h.b16 %v1194
      %v1427 = vunpack.c.l.b16 %v1195
      %v1428 = vunpack.c.l.b16 %v1196
      %v1429 = vunpack.c.h.b16 %v1196
      %v1430 = vunpack.c.l.b16 %v1197
      %v1431 = vunpack.c.l.b16 %v1198
      %v1432 = vunpack.c.h.b16 %v1198
      %v1433 = vunpack.c.l.b16 %v1199
      %v1434 = vunpack.c.l.b16 %v1200
      %v1435 = vunpack.c.h.b16 %v1200
      %v1436 = vunpack.c.l.b16 %v1201
      %v1437 = vunpack.c.l.b16 %v1202
      %v1438 = vunpack.c.h.b16 %v1202
      %v1439 = vunpack.c.l.b16 %v1203
      %v1440 = vunpack.c.l.b16 %v1204
      %v1441 = vunpack.c.h.b16 %v1204
      %v1442 = vunpack.c.l.b16 %v1205
      %v1443 = vunpack.c.l.b16 %v1206
      %v1444 = vunpack.c.h.b16 %v1206
      %v1445 = vunpack.c.l.b16 %v1207
      %v1446 = vunpack.c.l.b16 %v1208
      %v1447 = vunpack.c.h.b16 %v1208
      %v1448 = vunpack.c.l.b16 %v1209
      %v1449 = vunpack.c.l.b16 %v1210
      %v1450 = vunpack.c.h.b16 %v1210
      %v1451 = vunpack.c.l.b16 %v1211
      %v1452 = vunpack.c.l.b16 %v1212
      %v1453 = vunpack.c.h.b16 %v1212
      %v1454 = vunpack.c.l.b16 %v1213
      %v1455 = vunpack.c.l.b16 %v1214
      %v1456 = vunpack.c.h.b16 %v1214
      %v1457 = vunpack.c.l.b16 %v1215
      %v1458 = vunpack.c.l.b16 %v1216
      %v1459 = vunpack.c.h.b16 %v1216
      %v1460 = vunpack.c.l.b16 %v1217
      %v1461 = vunpack.c.l.b16 %v1218
      %v1462 = vunpack.c.h.b16 %v1218
      %v1463 = vunpack.c.l.b16 %v1219
      %v1464 = vunpack.c.l.b16 %v1220
      %v1465 = vunpack.c.h.b16 %v1220
      %v1466 = vunpack.c.l.b16 %v1221
      %v1467 = vunpack.c.l.b16 %v1222
      %v1468 = vunpack.c.h.b16 %v1222
      %v1469 = vunpack.c.l.b16 %v1223
      %v1470 = vunpack.c.l.b16 %v1224
      %v1471 = vunpack.c.h.b16 %v1224
      %v1472 = vunpack.c.l.b16 %v1225
      %v1473 = vunpack.c.l.b16 %v1226
      %v1474 = vunpack.c.h.b16 %v1226
      %v1475 = vunpack.c.l.b16 %v1227
      %v1476 = vunpack.c.l.b16 %v1228
      %v1477 = vunpack.c.h.b16 %v1228
      %v1478 = vunpack.c.l.b16 %v1229
      %v1479 = vunpack.c.l.b16 %v1230
      %v1480 = vunpack.c.h.b16 %v1230
      %v1481 = vunpack.c.l.b16 %v1231
      %v1482 = vunpack.c.l.b16 %v1232
      %v1483 = vunpack.c.h.b16 %v1232
      %v1484 = vunpack.c.l.b16 %v1233
      %v1485 = vunpack.c.l.b16 %v1234
      %v1486 = vunpack.c.h.b16 %v1234
      %v1487 = vunpack.c.l.b16 %v1235
      %v1488 = vunpack.c.l.b16 %v1236
      %v1489 = vunpack.c.h.b16 %v1236
      %v1490 = vunpack.c.l.b16 %v1237
      %v1491 = vunpack.c.l.b16 %v1238
      %v1492 = vunpack.c.h.b16 %v1238
      %v1493 = vunpack.c.l.b16 %v1239
      %v1494 = vunpack.c.l.b16 %v1240
      %v1495 = vunpack.c.h.b16 %v1240
      %v1496 = vunpack.c.l.b16 %v1241
      %v1497 = vunpack.c.l.b16 %v1242
      %v1498 = vunpack.c.h.b16 %v1242
      %v1499 = vunpack.c.l.b16 %v1243
      %v1500 = vunpack.c.l.b16 %v1244
      %v1501 = vunpack.c.h.b16 %v1244
      %v1502 = vunpack.c.l.b16 %v1245
      %v1503 = vunpack.c.l.b16 %v1246
      %v1504 = vunpack.c.h.b16 %v1246
      %v1505 = vunpack.c.l.b16 %v1247
      %v1506 = vunpack.c.l.b16 %v1248
      %v1507 = vunpack.c.h.b16 %v1248
      %v1508 = vunpack.c.l.b16 %v1249
      %v1509 = vunpack.c.l.b16 %v1250
      %v1510 = vunpack.c.h.b16 %v1250
      %v1511 = vunpack.c.l.b16 %v1251
      %v1512 = vunpack.c.l.b16 %v1252
      %v1513 = vunpack.c.h.b16 %v1252
      %v1514 = vunpack.c.l.b16 %v1253
      %v1515 = vunpack.c.l.b16 %v1254
      %v1516 = vunpack.c.h.b16 %v1254
      %v1517 = vunpack.c.l.b16 %v1255
      %v1518 = vunpack.c.l.b16 %v1256
      %v1519 = vunpack.c.h.b16 %v1256
      %v1520 = vunpack.c.l.b16 %v1257
      %v1521 = vunpack.c.l.b16 %v1258
      %v1522 = vunpack.c.h.b16 %v1258
      %v1523 = vunpack.c.l.b16 %v1259
      %v1524 = vunpack.c.l.b16 %v1260
      %v1525 = vunpack.c.h.b16 %v1260
      %v1526 = vunpack.c.l.b16 %v1261
      %v1527 = vunpack.c.l.b16 %v1262
      %v1528 = vunpack.c.h.b16 %v1262
      %v1529 = vunpack.c.l.b16 %v1263
      %v1530 = vunpack.c.l.b16 %v1264
      %v1531 = vunpack.c.h.b16 %v1264
      %v1532 = vunpack.c.l.b16 %v1265
      %v1533 = vunpack.c.l.b16 %v1266
      %v1534 = vunpack.c.h.b16 %v1266
      %v1535 = vunpack.c.l.b16 %v1267
      %v1536 = vunpack.c.l.b16 %v1268
      %v1537 = vunpack.c.h.b16 %v1268
      %v1538 = vunpack.c.l.b16 %v1269
      %v1539 = vunpack.c.l.b16 %v1270
      %v1540 = vunpack.c.h.b16 %v1270
      %v1541 = vunpack.c.l.b16 %v1271
      %v1542 = vunpack.c.l.b16 %v1272
      %v1543 = vunpack.c.h.b16 %v1272
      %v1544 = vunpack.c.l.b16 %v1273
      %v1545 = vunpack.c.l.b16 %v1274
      %v1546 = vunpack.c.h.b16 %v1274
      %v1547 = vunpack.c.l.b16 %v1275
      %v1548 = vunpack.c.l.b16 %v1276
      %v1549 = vunpack.c.h.b16 %v1276
      %v1550 = vunpack.c.l.b16 %v1277
      %v1551 = vunpack.c.l.b16 %v1278
      %v1552 = vunpack.c.h.b16 %v1278
      %v1553 = vunpack.c.l.b16 %v1279
      %v1554 = vunpack.c.l.b16 %v1280
      %v1555 = vunpack.c.h.b16 %v1280
      %v1556 = vunpack.c.l.b16 %v1281
      %v1557 = vunpack.c.l.b16 %v1282
      %v1558 = vunpack.c.h.b16 %v1282
      %v1559 = vunpack.c.l.b16 %v1283
      %v1560 = vunpack.c.l.b16 %v1284
      %v1561 = vunpack.c.h.b16 %v1284
      %v1562 = vunpack.c.l.b16 %v1285
      %v1563 = vunpack.c.l.b16 %v1286
      %v1564 = vunpack.c.h.b16 %v1286
      %v1565 = vunpack.c.l.b16 %v1287
      %v1566 = vunpack.c.l.b16 %v1288
      %v1567 = vunpack.c.h.b16 %v1288
      %v1568 = vunpack.c.l.b16 %v1289
      %v1569 = vunpack.c.l.b16 %v1290
      %v1570 = vunpack.c.h.b16 %v1290
      %v1571 = vunpack.c.l.b16 %v1291
      %v1572 = vunpack.c.l.b16 %v1292
      %v1573 = vunpack.c.h.b16 %v1292
      %v1574 = vunpack.c.l.b16 %v1293
      %v1575 = vpack.c.b16 %v1428, %v1425
      %v1576 = vpack.c.b16 %v1429, %v1426
      %v1577 = vpack.c.b16 %v1430, %v1427
      %v1578 = vpack.c.b16 %v1434, %v1431
      %v1579 = vpack.c.b16 %v1435, %v1432
      %v1580 = vpack.c.b16 %v1436, %v1433
      %v1581 = vpack.c.b16 %v1440, %v1437
      %v1582 = vpack.c.b16 %v1441, %v1438
      %v1583 = vpack.c.b16 %v1442, %v1439
      %v1584 = vpack.c.b16 %v1446, %v1443
      %v1585 = vpack.c.b16 %v1447, %v1444
      %v1586 = vpack.c.b16 %v1448, %v1445
      %v1587 = vpack.c.b16 %v1452, %v1449
      %v1588 = vpack.c.b16 %v1453, %v1450
      %v1589 = vpack.c.b16 %v1454, %v1451
      %v1590 = vpack.c.b16 %v1458, %v1455
      %v1591 = vpack.c.b16 %v1459, %v1456
      %v1592 = vpack.c.b16 %v1460, %v1457
      %v1593 = vpack.c.b16 %v1464, %v1461
      %v1594 = vpack.c.b16 %v1465, %v1462
      %v1595 = vpack.c.b16 %v1466, %v1463
      %v1596 = vpack.c.b16 %v1470, %v1467
      %v1597 = vpack.c.b16 %v1471, %v1468
      %v1598 = vpack.c.b16 %v1472, %v1469
      %v1599 = vpack.c.b16 %v1476, %v1473
      %v1600 = vpack.c.b16 %v1477, %v1474
      %v1601 = vpack.c.b16 %v1478, %v1475
      %v1602 = vpack.c.b16 %v1482, %v1479
      %v1603 = vpack.c.b16 %v1483, %v1480
      %v1604 = vpack.c.b16 %v1484, %v1481
      %v1605 = vpack.c.b16 %v1488, %v1485
      %v1606 = vpack.c.b16 %v1489, %v1486
      %v1607 = vpack.c.b16 %v1490, %v1487
      %v1608 = vpack.c.b16 %v1494, %v1491
      %v1609 = vpack.c.b16 %v1495, %v1492
      %v1610 = vpack.c.b16 %v1496, %v1493
      %v1611 = vpack.c.b16 %v1500, %v1497
      %v1612 = vpack.c.b16 %v1501, %v1498
      %v1613 = vpack.c.b16 %v1502, %v1499
      %v1614 = vpack.c.b16 %v1506, %v1503
      %v1615 = vpack.c.b16 %v1507, %v1504
      %v1616 = vpack.c.b16 %v1508, %v1505
      %v1617 = vpack.c.b16 %v1512, %v1509
      %v1618 = vpack.c.b16 %v1513, %v1510
      %v1619 = vpack.c.b16 %v1514, %v1511
      %v1620 = vpack.c.b16 %v1518, %v1515
      %v1621 = vpack.c.b16 %v1519, %v1516
      %v1622 = vpack.c.b16 %v1520, %v1517
      %v1623 = vpack.c.b16 %v1524, %v1521
      %v1624 = vpack.c.b16 %v1525, %v1522
      %v1625 = vpack.c.b16 %v1526, %v1523
      %v1626 = vpack.c.b16 %v1530, %v1527
      %v1627 = vpack.c.b16 %v1531, %v1528
      %v1628 = vpack.c.b16 %v1532, %v1529
      %v1629 = vpack.c.b16 %v1536, %v1533
      %v1630 = vpack.c.b16 %v1537, %v1534
      %v1631 = vpack.c.b16 %v1538, %v1535
      %v1632 = vpack.c.b16 %v1542, %v1539
      %v1633 = vpack.c.b16 %v1543, %v1540
      %v1634 = vpack.c.b16 %v1544, %v1541
      %v1635 = vpack.c.b16 %v1548, %v1545
      %v1636 = vpack.c.b16 %v1549, %v1546
      %v1637 = vpack.c.b16 %v1550, %v1547
      %v1638 = vpack.c.b16 %v1554, %v1551
      %v1639 = vpack.c.b16 %v1555, %v1552
      %v1640 = vpack.c.b16 %v1556, %v1553
      %v1641 = vpack.c.b16 %v1560, %v1557
      %v1642 = vpack.c.b16 %v1561, %v1558
      %v1643 = vpack.c.b16 %v1562, %v1559
      %v1644 = vpack.c.b16 %v1566, %v1563
      %v1645 = vpack.c.b16 %v1567, %v1564
      %v1646 = vpack.c.b16 %v1568, %v1565
      %v1647 = vpack.c.b16 %v1572, %v1569
      %v1648 = vpack.c.b16 %v1573, %v1570
      %v1649 = vpack.c.b16 %v1574, %v1571
      %vm1725 = vcmask 130048
      %v1727 = vsel %vm1725, %v1321, 0
      %1729 = vmatprep.subr.bf16.mxu0 %v1597
      %1730 = vmatpush1.bf16.msra.mxu0 %v1596
      %1731 = vmatprep.subr.bf16.mxu0 %v1594
      %1732 = vmatpush1.bf16.msra.mxu0 %v1593
      %1733 = vmatprep.subr.bf16.mxu0 %v1591
      %1734 = vmatpush1.bf16.msra.mxu0 %v1590
      %1735 = vmatprep.subr.bf16.mxu0 %v1588
      %1736 = vmatpush1.bf16.msra.mxu0 %v1587
      %1737 = vmatprep.subr.bf16.mxu0 %v1585
      %1738 = vmatpush1.bf16.msra.mxu0 %v1584
      %1739 = vmatprep.subr.bf16.mxu0 %v1582
      %1740 = vmatpush1.bf16.msra.mxu0 %v1581
      %1741 = vmatprep.subr.bf16.mxu0 %v1579
      %1742 = vmatpush1.bf16.msra.mxu0 %v1578
      %1743 = vmatprep.subr.bf16.mxu0 %v1576
      %1744 = vmatpush1.bf16.msra.mxu0 %v1575
      %1745 = vmatprep.subr.bf16.mxu0 %v1621
      %1746 = vmatpush2.bf16.msra.mxu0 %v1620
      %1747 = vmatprep.subr.bf16.mxu0 %v1618
      %1748 = vmatpush2.bf16.msra.mxu0 %v1617
      %1749 = vmatprep.subr.bf16.mxu0 %v1615
      %1750 = vmatpush2.bf16.msra.mxu0 %v1614
      %1751 = vmatprep.subr.bf16.mxu0 %v1612
      %1752 = vmatpush2.bf16.msra.mxu0 %v1611
      %1753 = vmatprep.subr.bf16.mxu0 %v1609
      %1754 = vmatpush2.bf16.msra.mxu0 %v1608
      %1755 = vmatprep.subr.bf16.mxu0 %v1606
      %1756 = vmatpush2.bf16.msra.mxu0 %v1605
      %1757 = vmatprep.subr.bf16.mxu0 %v1603
      %1758 = vmatpush2.bf16.msra.mxu0 %v1602
      %1759 = vmatprep.subr.bf16.mxu0 %v1600
      %1760 = vmatpush2.bf16.msra.mxu0 %v1599
      %1761 = vmatprep.mubr.bf16.mxu0 %v1319
      %1762 = vmatmul.mubr.bf16.gmra.mxu0 %v1318
      %v1763 = vpop.f32.mrf.mxu0
      %v1764 = vadd.f32 %v1299, %v1763
      %v1765 = vpop.f32.mrf.mxu0
      %v1766 = vadd.f32 %v1299, %v1765
      %v1767 = vpop.f32.mrf.mxu0
      %v1768 = vadd.f32 %v1304, %v1767
      %v1769 = vpop.f32.mrf.mxu0
      %v1770 = vadd.f32 %v1304, %v1769
      %1771 = vdwg.mxu0
      %1772 = vmatprep.subr.bf16.mxu0 %v1645
      %1773 = vmatpush1.bf16.msra.mxu0 %v1644
      %1774 = vmatprep.subr.bf16.mxu0 %v1642
      %1775 = vmatpush1.bf16.msra.mxu0 %v1641
      %1776 = vmatprep.subr.bf16.mxu0 %v1639
      %1777 = vmatpush1.bf16.msra.mxu0 %v1638
      %1778 = vmatprep.subr.bf16.mxu0 %v1636
      %1779 = vmatpush1.bf16.msra.mxu0 %v1635
      %1780 = vmatprep.subr.bf16.mxu0 %v1633
      %1781 = vmatpush1.bf16.msra.mxu0 %v1632
      %1782 = vmatprep.subr.bf16.mxu0 %v1630
      %1783 = vmatpush1.bf16.msra.mxu0 %v1629
      %1784 = vmatprep.subr.bf16.mxu0 %v1627
      %1785 = vmatpush1.bf16.msra.mxu0 %v1626
      %1786 = vmatprep.subr.bf16.mxu0 %v1624
      %1787 = vmatpush1.bf16.msra.mxu0 %v1623
      %1788 = vmatprep.subr.bf16.mxu0 0
      %1789 = vmatpush2.bf16.msra.mxu0 0
      %1790 = vmatprep.subr.bf16.mxu0 0
      %1791 = vmatpush2.bf16.msra.mxu0 0
      %1792 = vmatprep.subr.bf16.mxu0 0
      %1793 = vmatpush2.bf16.msra.mxu0 0
      %1794 = vmatprep.subr.bf16.mxu0 0
      %1795 = vmatpush2.bf16.msra.mxu0 0
      %1796 = vmatprep.subr.bf16.mxu0 0
      %1797 = vmatpush2.bf16.msra.mxu0 0
      %1798 = vmatprep.subr.bf16.mxu0 0
      %1799 = vmatpush2.bf16.msra.mxu0 0
      %1800 = vmatprep.subr.bf16.mxu0 0
      %1801 = vmatpush2.bf16.msra.mxu0 0
      %1802 = vmatprep.subr.bf16.mxu0 %v1648
      %1803 = vmatpush2.bf16.msra.mxu0 %v1647
      %1804 = vmatprep.mubr.bf16.mxu0 %v1727
      %1805 = vmatmul.mubr.bf16.gmra.mxu0 %v1320
      %v1806 = vpop.f32.mrf.mxu0
      %v1807 = vadd.f32 %v1764, %v1806
      %v1808 = vpop.f32.mrf.mxu0
      %v1809 = vadd.f32 %v1766, %v1808
      %v1810 = vpop.f32.mrf.mxu0
      %v1811 = vadd.f32 %v1768, %v1810
      %v1812 = vpop.f32.mrf.mxu0
      %v1813 = vadd.f32 %v1770, %v1812
      %1814 = vdwg.mxu0
      %1815 = vmatprep.subr.bf16.mxu0 0
      %1816 = vmatpush1.bf16.msra.mxu0 %v1598
      %1817 = vmatprep.subr.bf16.mxu0 0
      %1818 = vmatpush1.bf16.msra.mxu0 %v1595
      %1819 = vmatprep.subr.bf16.mxu0 0
      %1820 = vmatpush1.bf16.msra.mxu0 %v1592
      %1821 = vmatprep.subr.bf16.mxu0 0
      %1822 = vmatpush1.bf16.msra.mxu0 %v1589
      %1823 = vmatprep.subr.bf16.mxu0 0
      %1824 = vmatpush1.bf16.msra.mxu0 %v1586
      %1825 = vmatprep.subr.bf16.mxu0 0
      %1826 = vmatpush1.bf16.msra.mxu0 %v1583
      %1827 = vmatprep.subr.bf16.mxu0 0
      %1828 = vmatpush1.bf16.msra.mxu0 %v1580
      %1829 = vmatprep.subr.bf16.mxu0 0
      %1830 = vmatpush1.bf16.msra.mxu0 %v1577
      %1831 = vmatprep.subr.bf16.mxu0 0
      %1832 = vmatpush2.bf16.msra.mxu0 %v1622
      %1833 = vmatprep.subr.bf16.mxu0 0
      %1834 = vmatpush2.bf16.msra.mxu0 %v1619
      %1835 = vmatprep.subr.bf16.mxu0 0
      %1836 = vmatpush2.bf16.msra.mxu0 %v1616
      %1837 = vmatprep.subr.bf16.mxu0 0
      %1838 = vmatpush2.bf16.msra.mxu0 %v1613
      %1839 = vmatprep.subr.bf16.mxu0 0
      %1840 = vmatpush2.bf16.msra.mxu0 %v1610
      %1841 = vmatprep.subr.bf16.mxu0 0
      %1842 = vmatpush2.bf16.msra.mxu0 %v1607
      %1843 = vmatprep.subr.bf16.mxu0 0
      %1844 = vmatpush2.bf16.msra.mxu0 %v1604
      %1845 = vmatprep.subr.bf16.mxu0 0
      %1846 = vmatpush2.bf16.msra.mxu0 %v1601
      %1847 = vmatprep.mubr.bf16.mxu0 %v1319
      %1848 = vmatmul.mubr.bf16.gmra.mxu0 %v1318
      %v1849 = vpop.f32.mrf.mxu0
      %v1850 = vadd.f32 %v1299, %v1849
      %v1851 = vpop.f32.mrf.mxu0
      %v1852 = vpop.f32.mrf.mxu0
      %v1853 = vadd.f32 %v1304, %v1852
      %v1854 = vpop.f32.mrf.mxu0
      %1855 = vdwg.mxu0
      %1856 = vmatprep.subr.bf16.mxu0 0
      %1857 = vmatpush1.bf16.msra.mxu0 %v1646
      %1858 = vmatprep.subr.bf16.mxu0 0
      %1859 = vmatpush1.bf16.msra.mxu0 %v1643
      %1860 = vmatprep.subr.bf16.mxu0 0
      %1861 = vmatpush1.bf16.msra.mxu0 %v1640
      %1862 = vmatprep.subr.bf16.mxu0 0
      %1863 = vmatpush1.bf16.msra.mxu0 %v1637
      %1864 = vmatprep.subr.bf16.mxu0 0
      %1865 = vmatpush1.bf16.msra.mxu0 %v1634
      %1866 = vmatprep.subr.bf16.mxu0 0
      %1867 = vmatpush1.bf16.msra.mxu0 %v1631
      %1868 = vmatprep.subr.bf16.mxu0 0
      %1869 = vmatpush1.bf16.msra.mxu0 %v1628
      %1870 = vmatprep.subr.bf16.mxu0 0
      %1871 = vmatpush1.bf16.msra.mxu0 %v1625
      %1872 = vmatprep.subr.bf16.mxu0 0
      %1873 = vmatpush2.bf16.msra.mxu0 0
      %1874 = vmatprep.subr.bf16.mxu0 0
      %1875 = vmatpush2.bf16.msra.mxu0 0
      %1876 = vmatprep.subr.bf16.mxu0 0
      %1877 = vmatpush2.bf16.msra.mxu0 0
      %1878 = vmatprep.subr.bf16.mxu0 0
      %1879 = vmatpush2.bf16.msra.mxu0 0
      %1880 = vmatprep.subr.bf16.mxu0 0
      %1881 = vmatpush2.bf16.msra.mxu0 0
      %1882 = vmatprep.subr.bf16.mxu0 0
      %1883 = vmatpush2.bf16.msra.mxu0 0
      %1884 = vmatprep.subr.bf16.mxu0 0
      %1885 = vmatpush2.bf16.msra.mxu0 0
      %1886 = vmatprep.subr.bf16.mxu0 0
      %1887 = vmatpush2.bf16.msra.mxu0 %v1649
      %1888 = vmatprep.mubr.bf16.mxu0 %v1727
      %1889 = vmatmul.mubr.bf16.gmra.mxu0 %v1320
      %v1890 = vpop.f32.mrf.mxu0
      %v1891 = vadd.f32 %v1850, %v1890
      %v1892 = vpop.f32.mrf.mxu0
      %v1893 = vpop.f32.mrf.mxu0
      %v1894 = vadd.f32 %v1853, %v1893
      %v1895 = vpop.f32.mrf.mxu0
      %1896 = vdwg.mxu0
      %v1897 = vmax.f32 %v1807, 0.0
      %v1898 = vmax.f32 %v1809, 0.0
      %v1899 = vmax.f32 %v1891, 0.0
      %v1900 = vmax.f32 %v1811, 0.0
      %v1901 = vmax.f32 %v1813, 0.0
      %v1902 = vmax.f32 %v1894, 0.0
      %v1904 = vlaneseq
      %v1905 = vshrl.u32 %v1904, 7
      %v1906 = vsub.s32 0, %v1905
      %v1907 = vrot.slane %v316, %v1906
      %v1908 = vlaneseq
      %v1909 = vshrl.u32 %v1908, 7
      %v1910 = vsub.s32 1, %v1909
      %v1911 = vrot.slane %v316, %v1910
      %v1912 = vlaneseq
      %v1913 = vshrl.u32 %v1912, 7
      %v1914 = vsub.s32 2, %v1913
      %v1915 = vrot.slane %v316, %v1914
      %v1919 = vmul.f32 %v1897, %v1907
      %v1920 = vmul.f32 %v1898, %v1911
      %v1921 = vmul.f32 %v1899, %v1915
      %v1922 = vmul.f32 %v1900, %v1907
      %v1923 = vmul.f32 %v1901, %v1911
      %v1924 = vmul.f32 %v1902, %v1915
      %v1925 = vpack.c.bf16 %v1922, %v1919
      %v1926 = vpack.c.bf16 %v1923, %v1920
      %v1927 = vpack.c.bf16 %v1924, %v1921
      %v1931 = vunpack.c.l.b16 %v1925
      %v1932 = vunpack.c.l.b16 %v1926
      %v1933 = vunpack.c.l.b16 %v1927
      %v1934 = vunpack.c.h.b16 %v1925
      %v1935 = vunpack.c.h.b16 %v1926
      %v1936 = vunpack.c.h.b16 %v1927
      %v1937 = vpack.c.b16 %v1932, %v1931
      %v1938 = vpack.c.b16 %v1933, %v1933
      %v1939 = vpack.c.b16 %v1935, %v1934
      %v1940 = vpack.c.b16 %v1936, %v1936
      %1945 = vst [vmem:[#allocation2 + $0x4] sm:$0xff] %v1937
      %1946 = vst [vmem:[#allocation2 + $0xc] sm:$0xf] %v1938
      %1947 = vst [vmem:[#allocation2 + $0x18] sm:$0xff] %v1939
      %1948 = vst [vmem:[#allocation2 + $0x20] sm:$0xf] %v1940
      %v1949 = vld [vmem:[#allocation2] sm:$0xff]
      %v1950 = vld [vmem:[#allocation2 + $0x8] sm:$0xff]
      %v1951 = vld [vmem:[#allocation2 + $0x14] sm:$0xff]
      %v1952 = vld [vmem:[#allocation2 + $0x1c] sm:$0xff]
      %1957 = vrot.lane.b32.xlu0 %v1949, 42
      %v1958 = vpop.permute.xlu0 %1957
      %1959 = vrot.lane.b32.xlu0 %v1950, 42
      %v1960 = vpop.permute.xlu0 %1959
      %1961 = vrot.lane.b32.xlu0 %v1951, 42
      %v1962 = vpop.permute.xlu0 %1961
      %1963 = vrot.lane.b32.xlu0 %v1952, 42
      %v1964 = vpop.permute.xlu0 %1963
      %v1965 = vrot.slane %v1958, 4
      %v1966 = vrot.slane %v1960, 4
      %v1967 = vrot.slane %v1962, 4
      %v1968 = vrot.slane %v1964, 4
      %v1969 = vsel %vm361, %v1965, %v1966
      %v1970 = vsel %vm363, %v1958, %v1969
      %v1971 = vsel %vm363, %v1960, %v1966
      %v1972 = vsel %vm361, %v1967, %v1968
      %v1973 = vsel %vm363, %v1962, %v1972
      %v1974 = vsel %vm363, %v1964, %v1968
      %1979 = vst [vmem:[#allocation3] sm:$0xff] %v1970
      %1980 = vst [vmem:[#allocation3 + $0x8] sm:$0xf] %v1971
      %1981 = vst [vmem:[#allocation3 + $0xc] sm:$0xff] %v1973
      %1982 = vst [vmem:[#allocation3 + $0x14] sm:$0xf] %v1974
      %v1983 = vld [vmem:[#allocation2] sm:$0xff]
      %v1984 = vld [vmem:[#allocation2 + $0x8] sm:$0xff]
      %v1985 = vld [vmem:[#allocation2 + $0x14] sm:$0xff]
      %v1986 = vld [vmem:[#allocation2 + $0x1c] sm:$0xff]
      %1991 = vrot.lane.b32.xlu0 %v1983, 41
      %v1992 = vpop.permute.xlu0 %1991
      %1993 = vrot.lane.b32.xlu0 %v1984, 41
      %v1994 = vpop.permute.xlu0 %1993
      %1995 = vrot.lane.b32.xlu0 %v1985, 41
      %v1996 = vpop.permute.xlu0 %1995
      %1997 = vrot.lane.b32.xlu0 %v1986, 41
      %v1998 = vpop.permute.xlu0 %1997
      %v1999 = vrot.slane %v1992, 4
      %v2000 = vrot.slane %v1994, 4
      %v2001 = vrot.slane %v1996, 4
      %v2002 = vrot.slane %v1998, 4
      %v2003 = vsel %vm361, %v1999, %v2000
      %v2004 = vsel %vm398, %v1992, %v2003
      %v2005 = vsel %vm398, %v1994, %v2000
      %v2006 = vsel %vm361, %v2001, %v2002
      %v2007 = vsel %vm398, %v1996, %v2006
      %v2008 = vsel %vm398, %v1998, %v2002
      %2013 = vst [vmem:[#allocation3 + $0x18] sm:$0xff] %v2004
      %2014 = vst [vmem:[#allocation3 + $0x20] sm:$0xf] %v2005
      %2015 = vst [vmem:[#allocation3 + $0x24] sm:$0xff] %v2007
      %2016 = vst [vmem:[#allocation3 + $0x2c] sm:$0xf] %v2008
      %v2017 = vld [vmem:[#allocation2] sm:$0xff]
      %v2018 = vld [vmem:[#allocation2 + $0x8] sm:$0xff]
      %v2019 = vld [vmem:[#allocation2 + $0x14] sm:$0xff]
      %v2020 = vld [vmem:[#allocation2 + $0x1c] sm:$0xff]
      %2025 = vrot.lane.b32.xlu0 %v2017, 40
      %v2026 = vpop.permute.xlu0 %2025
      %2027 = vrot.lane.b32.xlu0 %v2018, 40
      %v2028 = vpop.permute.xlu0 %2027
      %2029 = vrot.lane.b32.xlu0 %v2019, 40
      %v2030 = vpop.permute.xlu0 %2029
      %2031 = vrot.lane.b32.xlu0 %v2020, 40
      %v2032 = vpop.permute.xlu0 %2031
      %v2033 = vrot.slane %v2026, 4
      %v2034 = vrot.slane %v2028, 4
      %v2035 = vrot.slane %v2030, 4
      %v2036 = vrot.slane %v2032, 4
      %v2037 = vsel %vm361, %v2033, %v2034
      %v2038 = vsel %vm433, %v2026, %v2037
      %v2039 = vsel %vm433, %v2028, %v2034
      %v2040 = vsel %vm361, %v2035, %v2036
      %v2041 = vsel %vm433, %v2030, %v2040
      %v2042 = vsel %vm433, %v2032, %v2036
      %2047 = vst [vmem:[#allocation3 + $0x30] sm:$0xff] %v2038
      %2048 = vst [vmem:[#allocation3 + $0x38] sm:$0xf] %v2039
      %2049 = vst [vmem:[#allocation3 + $0x3c] sm:$0xff] %v2041
      %2050 = vst [vmem:[#allocation3 + $0x44] sm:$0xf] %v2042
      %v2051 = vld [vmem:[#allocation2] sm:$0xff]
      %v2052 = vld [vmem:[#allocation2 + $0x8] sm:$0xff]
      %v2053 = vld [vmem:[#allocation2 + $0x14] sm:$0xff]
      %v2054 = vld [vmem:[#allocation2 + $0x1c] sm:$0xff]
      %2059 = vrot.lane.b32.xlu0 %v2051, 39
      %v2060 = vpop.permute.xlu0 %2059
      %2061 = vrot.lane.b32.xlu0 %v2052, 39
      %v2062 = vpop.permute.xlu0 %2061
      %2063 = vrot.lane.b32.xlu0 %v2053, 39
      %v2064 = vpop.permute.xlu0 %2063
      %2065 = vrot.lane.b32.xlu0 %v2054, 39
      %v2066 = vpop.permute.xlu0 %2065
      %v2067 = vrot.slane %v2060, 4
      %v2068 = vrot.slane %v2062, 4
      %v2069 = vrot.slane %v2064, 4
      %v2070 = vrot.slane %v2066, 4
      %v2071 = vsel %vm361, %v2067, %v2068
      %v2072 = vsel %vm468, %v2060, %v2071
      %v2073 = vsel %vm468, %v2062, %v2068
      %v2074 = vsel %vm361, %v2069, %v2070
      %v2075 = vsel %vm468, %v2064, %v2074
      %v2076 = vsel %vm468, %v2066, %v2070
      %2081 = vst [vmem:[#allocation3 + $0x48] sm:$0xff] %v2072
      %2082 = vst [vmem:[#allocation3 + $0x50] sm:$0xf] %v2073
      %2083 = vst [vmem:[#allocation3 + $0x54] sm:$0xff] %v2075
      %2084 = vst [vmem:[#allocation3 + $0x5c] sm:$0xf] %v2076
      %v2085 = vld [vmem:[#allocation2] sm:$0xff]
      %v2086 = vld [vmem:[#allocation2 + $0x8] sm:$0xff]
      %v2087 = vld [vmem:[#allocation2 + $0x14] sm:$0xff]
      %v2088 = vld [vmem:[#allocation2 + $0x1c] sm:$0xff]
      %2093 = vrot.lane.b32.xlu0 %v2085, 38
      %v2094 = vpop.permute.xlu0 %2093
      %2095 = vrot.lane.b32.xlu0 %v2086, 38
      %v2096 = vpop.permute.xlu0 %2095
      %2097 = vrot.lane.b32.xlu0 %v2087, 38
      %v2098 = vpop.permute.xlu0 %2097
      %2099 = vrot.lane.b32.xlu0 %v2088, 38
      %v2100 = vpop.permute.xlu0 %2099
      %v2101 = vrot.slane %v2094, 4
      %v2102 = vrot.slane %v2096, 4
      %v2103 = vrot.slane %v2098, 4
      %v2104 = vrot.slane %v2100, 4
      %v2105 = vsel %vm361, %v2101, %v2102
      %v2106 = vsel %vm503, %v2094, %v2105
      %v2107 = vsel %vm503, %v2096, %v2102
      %v2108 = vsel %vm361, %v2103, %v2104
      %v2109 = vsel %vm503, %v2098, %v2108
      %v2110 = vsel %vm503, %v2100, %v2104
      %2115 = vst [vmem:[#allocation3 + $0x60] sm:$0xff] %v2106
      %2116 = vst [vmem:[#allocation3 + $0x68] sm:$0xf] %v2107
      %2117 = vst [vmem:[#allocation3 + $0x6c] sm:$0xff] %v2109
      %2118 = vst [vmem:[#allocation3 + $0x74] sm:$0xf] %v2110
      %v2119 = vld [vmem:[#allocation2] sm:$0xff]
      %v2120 = vld [vmem:[#allocation2 + $0x8] sm:$0xff]
      %v2121 = vld [vmem:[#allocation2 + $0x14] sm:$0xff]
      %v2122 = vld [vmem:[#allocation2 + $0x1c] sm:$0xff]
      %2127 = vrot.lane.b32.xlu0 %v2119, 22
      %v2128 = vpop.permute.xlu0 %2127
      %2129 = vrot.lane.b32.xlu0 %v2120, 22
      %v2130 = vpop.permute.xlu0 %2129
      %2131 = vrot.lane.b32.xlu0 %v2121, 22
      %v2132 = vpop.permute.xlu0 %2131
      %2133 = vrot.lane.b32.xlu0 %v2122, 22
      %v2134 = vpop.permute.xlu0 %2133
      %v2135 = vrot.slane %v2128, 4
      %v2136 = vrot.slane %v2130, 4
      %v2137 = vrot.slane %v2132, 4
      %v2138 = vrot.slane %v2134, 4
      %v2139 = vsel %vm361, %v2135, %v2136
      %v2140 = vsel %vm538, %v2128, %v2139
      %v2141 = vsel %vm538, %v2130, %v2136
      %v2142 = vsel %vm361, %v2137, %v2138
      %v2143 = vsel %vm538, %v2132, %v2142
      %v2144 = vsel %vm538, %v2134, %v2138
      %2149 = vst [vmem:[#allocation3 + $0x78] sm:$0xff] %v2140
      %2150 = vst [vmem:[#allocation3 + $0x80] sm:$0xf] %v2141
      %2151 = vst [vmem:[#allocation3 + $0x84] sm:$0xff] %v2143
      %2152 = vst [vmem:[#allocation3 + $0x8c] sm:$0xf] %v2144
      %v2153 = vld [vmem:[#allocation2] sm:$0xff]
      %v2154 = vld [vmem:[#allocation2 + $0x8] sm:$0xff]
      %v2155 = vld [vmem:[#allocation2 + $0x14] sm:$0xff]
      %v2156 = vld [vmem:[#allocation2 + $0x1c] sm:$0xff]
      %2161 = vrot.lane.b32.xlu0 %v2153, 21
      %v2162 = vpop.permute.xlu0 %2161
      %2163 = vrot.lane.b32.xlu0 %v2154, 21
      %v2164 = vpop.permute.xlu0 %2163
      %2165 = vrot.lane.b32.xlu0 %v2155, 21
      %v2166 = vpop.permute.xlu0 %2165
      %2167 = vrot.lane.b32.xlu0 %v2156, 21
      %v2168 = vpop.permute.xlu0 %2167
      %v2169 = vrot.slane %v2162, 4
      %v2170 = vrot.slane %v2164, 4
      %v2171 = vrot.slane %v2166, 4
      %v2172 = vrot.slane %v2168, 4
      %v2173 = vsel %vm361, %v2169, %v2170
      %v2174 = vsel %vm573, %v2162, %v2173
      %v2175 = vsel %vm573, %v2164, %v2170
      %v2176 = vsel %vm361, %v2171, %v2172
      %v2177 = vsel %vm573, %v2166, %v2176
      %v2178 = vsel %vm573, %v2168, %v2172
      %2183 = vst [vmem:[#allocation3 + $0x90] sm:$0xff] %v2174
      %2184 = vst [vmem:[#allocation3 + $0x98] sm:$0xf] %v2175
      %2185 = vst [vmem:[#allocation3 + $0x9c] sm:$0xff] %v2177
      %2186 = vst [vmem:[#allocation3 + $0xa4] sm:$0xf] %v2178
      %v2187 = vld [vmem:[#allocation2] sm:$0xff]
      %v2188 = vld [vmem:[#allocation2 + $0x8] sm:$0xff]
      %v2189 = vld [vmem:[#allocation2 + $0x14] sm:$0xff]
      %v2190 = vld [vmem:[#allocation2 + $0x1c] sm:$0xff]
      %2195 = vrot.lane.b32.xlu0 %v2187, 20
      %v2196 = vpop.permute.xlu0 %2195
      %2197 = vrot.lane.b32.xlu0 %v2188, 20
      %v2198 = vpop.permute.xlu0 %2197
      %2199 = vrot.lane.b32.xlu0 %v2189, 20
      %v2200 = vpop.permute.xlu0 %2199
      %2201 = vrot.lane.b32.xlu0 %v2190, 20
      %v2202 = vpop.permute.xlu0 %2201
      %v2203 = vrot.slane %v2196, 4
      %v2204 = vrot.slane %v2198, 4
      %v2205 = vrot.slane %v2200, 4
      %v2206 = vrot.slane %v2202, 4
      %v2207 = vsel %vm361, %v2203, %v2204
      %v2208 = vsel %vm608, %v2196, %v2207
      %v2209 = vsel %vm608, %v2198, %v2204
      %v2210 = vsel %vm361, %v2205, %v2206
      %v2211 = vsel %vm608, %v2200, %v2210
      %v2212 = vsel %vm608, %v2202, %v2206
      %2217 = vst [vmem:[#allocation3 + $0xa8] sm:$0xff] %v2208
      %2218 = vst [vmem:[#allocation3 + $0xb0] sm:$0xf] %v2209
      %2219 = vst [vmem:[#allocation3 + $0xb4] sm:$0xff] %v2211
      %2220 = vst [vmem:[#allocation3 + $0xbc] sm:$0xf] %v2212
      %v2221 = vld [vmem:[#allocation2] sm:$0xff]
      %v2222 = vld [vmem:[#allocation2 + $0x8] sm:$0xff]
      %v2223 = vld [vmem:[#allocation2 + $0x14] sm:$0xff]
      %v2224 = vld [vmem:[#allocation2 + $0x1c] sm:$0xff]
      %2229 = vrot.lane.b32.xlu0 %v2221, 19
      %v2230 = vpop.permute.xlu0 %2229
      %2231 = vrot.lane.b32.xlu0 %v2222, 19
      %v2232 = vpop.permute.xlu0 %2231
      %2233 = vrot.lane.b32.xlu0 %v2223, 19
      %v2234 = vpop.permute.xlu0 %2233
      %2235 = vrot.lane.b32.xlu0 %v2224, 19
      %v2236 = vpop.permute.xlu0 %2235
      %v2237 = vrot.slane %v2230, 4
      %v2238 = vrot.slane %v2232, 4
      %v2239 = vrot.slane %v2234, 4
      %v2240 = vrot.slane %v2236, 4
      %v2241 = vsel %vm361, %v2237, %v2238
      %v2242 = vsel %vm643, %v2230, %v2241
      %v2243 = vsel %vm643, %v2232, %v2238
      %v2244 = vsel %vm361, %v2239, %v2240
      %v2245 = vsel %vm643, %v2234, %v2244
      %v2246 = vsel %vm643, %v2236, %v2240
      %2251 = vst [vmem:[#allocation3 + $0xc0] sm:$0xff] %v2242
      %2252 = vst [vmem:[#allocation3 + $0xc8] sm:$0xf] %v2243
      %2253 = vst [vmem:[#allocation3 + $0xcc] sm:$0xff] %v2245
      %2254 = vst [vmem:[#allocation3 + $0xd4] sm:$0xf] %v2246
      %v2255 = vld [vmem:[#allocation2] sm:$0xff]
      %v2256 = vld [vmem:[#allocation2 + $0x8] sm:$0xff]
      %v2257 = vld [vmem:[#allocation2 + $0x14] sm:$0xff]
      %v2258 = vld [vmem:[#allocation2 + $0x1c] sm:$0xff]
      %2263 = vrot.lane.b32.xlu0 %v2255, 18
      %v2264 = vpop.permute.xlu0 %2263
      %2265 = vrot.lane.b32.xlu0 %v2256, 18
      %v2266 = vpop.permute.xlu0 %2265
      %2267 = vrot.lane.b32.xlu0 %v2257, 18
      %v2268 = vpop.permute.xlu0 %2267
      %2269 = vrot.lane.b32.xlu0 %v2258, 18
      %v2270 = vpop.permute.xlu0 %2269
      %v2271 = vrot.slane %v2264, 4
      %v2272 = vrot.slane %v2266, 4
      %v2273 = vrot.slane %v2268, 4
      %v2274 = vrot.slane %v2270, 4
      %v2275 = vsel %vm361, %v2271, %v2272
      %v2276 = vsel %vm678, %v2264, %v2275
      %v2277 = vsel %vm678, %v2266, %v2272
      %v2278 = vsel %vm361, %v2273, %v2274
      %v2279 = vsel %vm678, %v2268, %v2278
      %v2280 = vsel %vm678, %v2270, %v2274
      %2285 = vst [vmem:[#allocation3 + $0xd8] sm:$0xff] %v2276
      %2286 = vst [vmem:[#allocation3 + $0xe0] sm:$0xf] %v2277
      %2287 = vst [vmem:[#allocation3 + $0xe4] sm:$0xff] %v2279
      %2288 = vst [vmem:[#allocation3 + $0xec] sm:$0xf] %v2280
      %v2289 = vld [vmem:[#allocation2] sm:$0xff]
      %v2290 = vld [vmem:[#allocation2 + $0x8] sm:$0xff]
      %v2291 = vld [vmem:[#allocation2 + $0x14] sm:$0xff]
      %v2292 = vld [vmem:[#allocation2 + $0x1c] sm:$0xff]
      %2297 = vrot.lane.b32.xlu0 %v2289, 2
      %v2298 = vpop.permute.xlu0 %2297
      %2299 = vrot.lane.b32.xlu0 %v2290, 2
      %v2300 = vpop.permute.xlu0 %2299
      %2301 = vrot.lane.b32.xlu0 %v2291, 2
      %v2302 = vpop.permute.xlu0 %2301
      %2303 = vrot.lane.b32.xlu0 %v2292, 2
      %v2304 = vpop.permute.xlu0 %2303
      %v2305 = vrot.slane %v2298, 4
      %v2306 = vrot.slane %v2300, 4
      %v2307 = vrot.slane %v2302, 4
      %v2308 = vrot.slane %v2304, 4
      %v2309 = vsel %vm361, %v2305, %v2306
      %v2310 = vsel %vm713, %v2298, %v2309
      %v2311 = vsel %vm713, %v2300, %v2306
      %v2312 = vsel %vm361, %v2307, %v2308
      %v2313 = vsel %vm713, %v2302, %v2312
      %v2314 = vsel %vm713, %v2304, %v2308
      %2319 = vst [vmem:[#allocation3 + $0xf0] sm:$0xff] %v2310
      %2320 = vst [vmem:[#allocation3 + $0xf8] sm:$0xf] %v2311
      %2321 = vst [vmem:[#allocation3 + $0xfc] sm:$0xff] %v2313
      %2322 = vst [vmem:[#allocation3 + $0x104] sm:$0xf] %v2314
      %v2323 = vld [vmem:[#allocation2] sm:$0xff]
      %v2324 = vld [vmem:[#allocation2 + $0x8] sm:$0xff]
      %v2325 = vld [vmem:[#allocation2 + $0x14] sm:$0xff]
      %v2326 = vld [vmem:[#allocation2 + $0x1c] sm:$0xff]
      %2331 = vrot.lane.b32.xlu0 %v2323, 1
      %v2332 = vpop.permute.xlu0 %2331
      %2333 = vrot.lane.b32.xlu0 %v2324, 1
      %v2334 = vpop.permute.xlu0 %2333
      %2335 = vrot.lane.b32.xlu0 %v2325, 1
      %v2336 = vpop.permute.xlu0 %2335
      %2337 = vrot.lane.b32.xlu0 %v2326, 1
      %v2338 = vpop.permute.xlu0 %2337
      %v2339 = vrot.slane %v2332, 4
      %v2340 = vrot.slane %v2334, 4
      %v2341 = vrot.slane %v2336, 4
      %v2342 = vrot.slane %v2338, 4
      %v2343 = vsel %vm361, %v2339, %v2340
      %v2344 = vsel %vm748, %v2332, %v2343
      %v2345 = vsel %vm748, %v2334, %v2340
      %v2346 = vsel %vm361, %v2341, %v2342
      %v2347 = vsel %vm748, %v2336, %v2346
      %v2348 = vsel %vm748, %v2338, %v2342
      %2353 = vst [vmem:[#allocation3 + $0x108] sm:$0xff] %v2344
      %2354 = vst [vmem:[#allocation3 + $0x110] sm:$0xf] %v2345
      %2355 = vst [vmem:[#allocation3 + $0x114] sm:$0xff] %v2347
      %2356 = vst [vmem:[#allocation3 + $0x11c] sm:$0xf] %v2348
      %v2357 = vld [vmem:[#allocation2 + $0x4] sm:$0xff]
      %v2358 = vld [vmem:[#allocation2 + $0xc] sm:$0xf]
      %v2359 = vld [vmem:[#allocation2 + $0x18] sm:$0xff]
      %v2360 = vld [vmem:[#allocation2 + $0x20] sm:$0xf]
      %2361 = vst [vmem:[#allocation3 + $0x120] sm:$0xff] %v2357
      %2362 = vst [vmem:[#allocation3 + $0x128] sm:$0xf] %v2358
      %2363 = vst [vmem:[#allocation3 + $0x12c] sm:$0xff] %v2359
      %2364 = vst [vmem:[#allocation3 + $0x134] sm:$0xf] %v2360
      %v2365 = vld [vmem:[#allocation2 + $0x4] sm:$0xff]
      %v2366 = vld [vmem:[#allocation2 + $0xc] sm:$0xff]
      %v2367 = vld [vmem:[#allocation2 + $0x18] sm:$0xff]
      %v2368 = vld [vmem:[#allocation2 + $0x20] sm:$0xff]
      %2373 = vrot.lane.b32.xlu0 %v2365, 127
      %v2374 = vpop.permute.xlu0 %2373
      %2375 = vrot.lane.b32.xlu0 %v2366, 127
      %v2376 = vpop.permute.xlu0 %2375
      %2377 = vrot.lane.b32.xlu0 %v2367, 127
      %v2378 = vpop.permute.xlu0 %2377
      %2379 = vrot.lane.b32.xlu0 %v2368, 127
      %v2380 = vpop.permute.xlu0 %2379
      %v2381 = vrot.slane %v2374, 4
      %v2382 = vrot.slane %v2376, 4
      %v2383 = vrot.slane %v2378, 4
      %v2384 = vrot.slane %v2380, 4
      %v2385 = vsel %vm361, %v2381, %v2382
      %v2386 = vsel %vm791, %v2374, %v2385
      %v2387 = vsel %vm791, %v2376, %v2382
      %v2388 = vsel %vm361, %v2383, %v2384
      %v2389 = vsel %vm791, %v2378, %v2388
      %v2390 = vsel %vm791, %v2380, %v2384
      %2395 = vst [vmem:[#allocation3 + $0x138] sm:$0xff] %v2386
      %2396 = vst [vmem:[#allocation3 + $0x140] sm:$0xf] %v2387
      %2397 = vst [vmem:[#allocation3 + $0x144] sm:$0xff] %v2389
      %2398 = vst [vmem:[#allocation3 + $0x14c] sm:$0xf] %v2390
      %v2399 = vld [vmem:[#allocation2 + $0x4] sm:$0xff]
      %v2400 = vld [vmem:[#allocation2 + $0xc] sm:$0xff]
      %v2401 = vld [vmem:[#allocation2 + $0x18] sm:$0xff]
      %v2402 = vld [vmem:[#allocation2 + $0x20] sm:$0xff]
      %2407 = vrot.lane.b32.xlu0 %v2399, 126
      %v2408 = vpop.permute.xlu0 %2407
      %2409 = vrot.lane.b32.xlu0 %v2400, 126
      %v2410 = vpop.permute.xlu0 %2409
      %2411 = vrot.lane.b32.xlu0 %v2401, 126
      %v2412 = vpop.permute.xlu0 %2411
      %2413 = vrot.lane.b32.xlu0 %v2402, 126
      %v2414 = vpop.permute.xlu0 %2413
      %v2415 = vrot.slane %v2408, 4
      %v2416 = vrot.slane %v2410, 4
      %v2417 = vrot.slane %v2412, 4
      %v2418 = vrot.slane %v2414, 4
      %v2419 = vsel %vm361, %v2415, %v2416
      %v2420 = vsel %vm826, %v2408, %v2419
      %v2421 = vsel %vm826, %v2410, %v2416
      %v2422 = vsel %vm361, %v2417, %v2418
      %v2423 = vsel %vm826, %v2412, %v2422
      %v2424 = vsel %vm826, %v2414, %v2418
      %2429 = vst [vmem:[#allocation3 + $0x150] sm:$0xff] %v2420
      %2430 = vst [vmem:[#allocation3 + $0x158] sm:$0xf] %v2421
      %2431 = vst [vmem:[#allocation3 + $0x15c] sm:$0xff] %v2423
      %2432 = vst [vmem:[#allocation3 + $0x164] sm:$0xf] %v2424
      %v2433 = vld [vmem:[#allocation2 + $0x4] sm:$0xff]
      %v2434 = vld [vmem:[#allocation2 + $0xc] sm:$0xff]
      %v2435 = vld [vmem:[#allocation2 + $0x18] sm:$0xff]
      %v2436 = vld [vmem:[#allocation2 + $0x20] sm:$0xff]
      %2441 = vrot.lane.b32.xlu0 %v2433, 110
      %v2442 = vpop.permute.xlu0 %2441
      %2443 = vrot.lane.b32.xlu0 %v2434, 110
      %v2444 = vpop.permute.xlu0 %2443
      %2445 = vrot.lane.b32.xlu0 %v2435, 110
      %v2446 = vpop.permute.xlu0 %2445
      %2447 = vrot.lane.b32.xlu0 %v2436, 110
      %v2448 = vpop.permute.xlu0 %2447
      %v2449 = vrot.slane %v2442, 4
      %v2450 = vrot.slane %v2444, 4
      %v2451 = vrot.slane %v2446, 4
      %v2452 = vrot.slane %v2448, 4
      %v2453 = vsel %vm361, %v2449, %v2450
      %v2454 = vsel %vm861, %v2442, %v2453
      %v2455 = vsel %vm861, %v2444, %v2450
      %v2456 = vsel %vm361, %v2451, %v2452
      %v2457 = vsel %vm861, %v2446, %v2456
      %v2458 = vsel %vm861, %v2448, %v2452
      %2463 = vst [vmem:[#allocation3 + $0x168] sm:$0xff] %v2454
      %2464 = vst [vmem:[#allocation3 + $0x170] sm:$0xf] %v2455
      %2465 = vst [vmem:[#allocation3 + $0x174] sm:$0xff] %v2457
      %2466 = vst [vmem:[#allocation3 + $0x17c] sm:$0xf] %v2458
      %v2467 = vld [vmem:[#allocation2 + $0x4] sm:$0xff]
      %v2468 = vld [vmem:[#allocation2 + $0xc] sm:$0xff]
      %v2469 = vld [vmem:[#allocation2 + $0x18] sm:$0xff]
      %v2470 = vld [vmem:[#allocation2 + $0x20] sm:$0xff]
      %2475 = vrot.lane.b32.xlu0 %v2467, 109
      %v2476 = vpop.permute.xlu0 %2475
      %2477 = vrot.lane.b32.xlu0 %v2468, 109
      %v2478 = vpop.permute.xlu0 %2477
      %2479 = vrot.lane.b32.xlu0 %v2469, 109
      %v2480 = vpop.permute.xlu0 %2479
      %2481 = vrot.lane.b32.xlu0 %v2470, 109
      %v2482 = vpop.permute.xlu0 %2481
      %v2483 = vrot.slane %v2476, 4
      %v2484 = vrot.slane %v2478, 4
      %v2485 = vrot.slane %v2480, 4
      %v2486 = vrot.slane %v2482, 4
      %v2487 = vsel %vm361, %v2483, %v2484
      %v2488 = vsel %vm896, %v2476, %v2487
      %v2489 = vsel %vm896, %v2478, %v2484
      %v2490 = vsel %vm361, %v2485, %v2486
      %v2491 = vsel %vm896, %v2480, %v2490
      %v2492 = vsel %vm896, %v2482, %v2486
      %2497 = vst [vmem:[#allocation3 + $0x180] sm:$0xff] %v2488
      %2498 = vst [vmem:[#allocation3 + $0x188] sm:$0xf] %v2489
      %2499 = vst [vmem:[#allocation3 + $0x18c] sm:$0xff] %v2491
      %2500 = vst [vmem:[#allocation3 + $0x194] sm:$0xf] %v2492
      %v2501 = vld [vmem:[#allocation2 + $0x4] sm:$0xff]
      %v2502 = vld [vmem:[#allocation2 + $0xc] sm:$0xff]
      %v2503 = vld [vmem:[#allocation2 + $0x18] sm:$0xff]
      %v2504 = vld [vmem:[#allocation2 + $0x20] sm:$0xff]
      %2509 = vrot.lane.b32.xlu0 %v2501, 108
      %v2510 = vpop.permute.xlu0 %2509
      %2511 = vrot.lane.b32.xlu0 %v2502, 108
      %v2512 = vpop.permute.xlu0 %2511
      %2513 = vrot.lane.b32.xlu0 %v2503, 108
      %v2514 = vpop.permute.xlu0 %2513
      %2515 = vrot.lane.b32.xlu0 %v2504, 108
      %v2516 = vpop.permute.xlu0 %2515
      %v2517 = vrot.slane %v2510, 4
      %v2518 = vrot.slane %v2512, 4
      %v2519 = vrot.slane %v2514, 4
      %v2520 = vrot.slane %v2516, 4
      %v2521 = vsel %vm361, %v2517, %v2518
      %v2522 = vsel %vm931, %v2510, %v2521
      %v2523 = vsel %vm931, %v2512, %v2518
      %v2524 = vsel %vm361, %v2519, %v2520
      %v2525 = vsel %vm931, %v2514, %v2524
      %v2526 = vsel %vm931, %v2516, %v2520
      %2531 = vst [vmem:[#allocation3 + $0x198] sm:$0xff] %v2522
      %2532 = vst [vmem:[#allocation3 + $0x1a0] sm:$0xf] %v2523
      %2533 = vst [vmem:[#allocation3 + $0x1a4] sm:$0xff] %v2525
      %2534 = vst [vmem:[#allocation3 + $0x1ac] sm:$0xf] %v2526
      %v2535 = vld [vmem:[#allocation2 + $0x4] sm:$0xff]
      %v2536 = vld [vmem:[#allocation2 + $0xc] sm:$0xff]
      %v2537 = vld [vmem:[#allocation2 + $0x18] sm:$0xff]
      %v2538 = vld [vmem:[#allocation2 + $0x20] sm:$0xff]
      %2543 = vrot.lane.b32.xlu0 %v2535, 107
      %v2544 = vpop.permute.xlu0 %2543
      %2545 = vrot.lane.b32.xlu0 %v2536, 107
      %v2546 = vpop.permute.xlu0 %2545
      %2547 = vrot.lane.b32.xlu0 %v2537, 107
      %v2548 = vpop.permute.xlu0 %2547
      %2549 = vrot.lane.b32.xlu0 %v2538, 107
      %v2550 = vpop.permute.xlu0 %2549
      %v2551 = vrot.slane %v2544, 4
      %v2552 = vrot.slane %v2546, 4
      %v2553 = vrot.slane %v2548, 4
      %v2554 = vrot.slane %v2550, 4
      %v2555 = vsel %vm361, %v2551, %v2552
      %v2556 = vsel %vm966, %v2544, %v2555
      %v2557 = vsel %vm966, %v2546, %v2552
      %v2558 = vsel %vm361, %v2553, %v2554
      %v2559 = vsel %vm966, %v2548, %v2558
      %v2560 = vsel %vm966, %v2550, %v2554
      %2565 = vst [vmem:[#allocation3 + $0x1b0] sm:$0xff] %v2556
      %2566 = vst [vmem:[#allocation3 + $0x1b8] sm:$0xf] %v2557
      %2567 = vst [vmem:[#allocation3 + $0x1bc] sm:$0xff] %v2559
      %2568 = vst [vmem:[#allocation3 + $0x1c4] sm:$0xf] %v2560
      %v2569 = vld [vmem:[#allocation2 + $0x4] sm:$0xff]
      %v2570 = vld [vmem:[#allocation2 + $0xc] sm:$0xff]
      %v2571 = vld [vmem:[#allocation2 + $0x18] sm:$0xff]
      %v2572 = vld [vmem:[#allocation2 + $0x20] sm:$0xff]
      %2577 = vrot.lane.b32.xlu0 %v2569, 106
      %v2578 = vpop.permute.xlu0 %2577
      %2579 = vrot.lane.b32.xlu0 %v2570, 106
      %v2580 = vpop.permute.xlu0 %2579
      %2581 = vrot.lane.b32.xlu0 %v2571, 106
      %v2582 = vpop.permute.xlu0 %2581
      %2583 = vrot.lane.b32.xlu0 %v2572, 106
      %v2584 = vpop.permute.xlu0 %2583
      %v2585 = vrot.slane %v2578, 4
      %v2586 = vrot.slane %v2580, 4
      %v2587 = vrot.slane %v2582, 4
      %v2588 = vrot.slane %v2584, 4
      %v2589 = vsel %vm361, %v2585, %v2586
      %v2590 = vsel %vm1001, %v2578, %v2589
      %v2591 = vsel %vm1001, %v2580, %v2586
      %v2592 = vsel %vm361, %v2587, %v2588
      %v2593 = vsel %vm1001, %v2582, %v2592
      %v2594 = vsel %vm1001, %v2584, %v2588
      %2599 = vst [vmem:[#allocation3 + $0x1c8] sm:$0xff] %v2590
      %2600 = vst [vmem:[#allocation3 + $0x1d0] sm:$0xf] %v2591
      %2601 = vst [vmem:[#allocation3 + $0x1d4] sm:$0xff] %v2593
      %2602 = vst [vmem:[#allocation3 + $0x1dc] sm:$0xf] %v2594
      %v2603 = vld [vmem:[#allocation2 + $0x4] sm:$0xff]
      %v2604 = vld [vmem:[#allocation2 + $0xc] sm:$0xff]
      %v2605 = vld [vmem:[#allocation2 + $0x18] sm:$0xff]
      %v2606 = vld [vmem:[#allocation2 + $0x20] sm:$0xff]
      %2611 = vrot.lane.b32.xlu0 %v2603, 90
      %v2612 = vpop.permute.xlu0 %2611
      %2613 = vrot.lane.b32.xlu0 %v2604, 90
      %v2614 = vpop.permute.xlu0 %2613
      %2615 = vrot.lane.b32.xlu0 %v2605, 90
      %v2616 = vpop.permute.xlu0 %2615
      %2617 = vrot.lane.b32.xlu0 %v2606, 90
      %v2618 = vpop.permute.xlu0 %2617
      %v2619 = vrot.slane %v2612, 4
      %v2620 = vrot.slane %v2614, 4
      %v2621 = vrot.slane %v2616, 4
      %v2622 = vrot.slane %v2618, 4
      %v2623 = vsel %vm361, %v2619, %v2620
      %v2624 = vsel %vm1036, %v2612, %v2623
      %v2625 = vsel %vm1036, %v2614, %v2620
      %v2626 = vsel %vm361, %v2621, %v2622
      %v2627 = vsel %vm1036, %v2616, %v2626
      %v2628 = vsel %vm1036, %v2618, %v2622
      %2633 = vst [vmem:[#allocation3 + $0x1e0] sm:$0xff] %v2624
      %2634 = vst [vmem:[#allocation3 + $0x1e8] sm:$0xf] %v2625
      %2635 = vst [vmem:[#allocation3 + $0x1ec] sm:$0xff] %v2627
      %2636 = vst [vmem:[#allocation3 + $0x1f4] sm:$0xf] %v2628
      %v2637 = vld [vmem:[#allocation2 + $0x4] sm:$0xff]
      %v2638 = vld [vmem:[#allocation2 + $0xc] sm:$0xff]
      %v2639 = vld [vmem:[#allocation2 + $0x18] sm:$0xff]
      %v2640 = vld [vmem:[#allocation2 + $0x20] sm:$0xff]
      %2645 = vrot.lane.b32.xlu0 %v2637, 89
      %v2646 = vpop.permute.xlu0 %2645
      %2647 = vrot.lane.b32.xlu0 %v2638, 89
      %v2648 = vpop.permute.xlu0 %2647
      %2649 = vrot.lane.b32.xlu0 %v2639, 89
      %v2650 = vpop.permute.xlu0 %2649
      %2651 = vrot.lane.b32.xlu0 %v2640, 89
      %v2652 = vpop.permute.xlu0 %2651
      %v2653 = vrot.slane %v2646, 4
      %v2654 = vrot.slane %v2648, 4
      %v2655 = vrot.slane %v2650, 4
      %v2656 = vrot.slane %v2652, 4
      %v2657 = vsel %vm361, %v2653, %v2654
      %v2658 = vsel %vm1071, %v2646, %v2657
      %v2659 = vsel %vm1071, %v2648, %v2654
      %v2660 = vsel %vm361, %v2655, %v2656
      %v2661 = vsel %vm1071, %v2650, %v2660
      %v2662 = vsel %vm1071, %v2652, %v2656
      %2667 = vst [vmem:[#allocation3 + $0x1f8] sm:$0xff] %v2658
      %2668 = vst [vmem:[#allocation3 + $0x200] sm:$0xf] %v2659
      %2669 = vst [vmem:[#allocation3 + $0x204] sm:$0xff] %v2661
      %2670 = vst [vmem:[#allocation3 + $0x20c] sm:$0xf] %v2662
      %v2671 = vld [vmem:[#allocation2 + $0x4] sm:$0xff]
      %v2672 = vld [vmem:[#allocation2 + $0xc] sm:$0xff]
      %v2673 = vld [vmem:[#allocation2 + $0x18] sm:$0xff]
      %v2674 = vld [vmem:[#allocation2 + $0x20] sm:$0xff]
      %2679 = vrot.lane.b32.xlu0 %v2671, 88
      %v2680 = vpop.permute.xlu0 %2679
      %2681 = vrot.lane.b32.xlu0 %v2672, 88
      %v2682 = vpop.permute.xlu0 %2681
      %2683 = vrot.lane.b32.xlu0 %v2673, 88
      %v2684 = vpop.permute.xlu0 %2683
      %2685 = vrot.lane.b32.xlu0 %v2674, 88
      %v2686 = vpop.permute.xlu0 %2685
      %v2687 = vrot.slane %v2680, 4
      %v2688 = vrot.slane %v2682, 4
      %v2689 = vrot.slane %v2684, 4
      %v2690 = vrot.slane %v2686, 4
      %v2691 = vsel %vm361, %v2687, %v2688
      %v2692 = vsel %vm1106, %v2680, %v2691
      %v2693 = vsel %vm1106, %v2682, %v2688
      %v2694 = vsel %vm361, %v2689, %v2690
      %v2695 = vsel %vm1106, %v2684, %v2694
      %v2696 = vsel %vm1106, %v2686, %v2690
      %2701 = vst [vmem:[#allocation3 + $0x210] sm:$0xff] %v2692
      %2702 = vst [vmem:[#allocation3 + $0x218] sm:$0xf] %v2693
      %2703 = vst [vmem:[#allocation3 + $0x21c] sm:$0xff] %v2695
      %2704 = vst [vmem:[#allocation3 + $0x224] sm:$0xf] %v2696
      %v2705 = vld [vmem:[#allocation2 + $0x4] sm:$0xff]
      %v2706 = vld [vmem:[#allocation2 + $0xc] sm:$0xff]
      %v2707 = vld [vmem:[#allocation2 + $0x18] sm:$0xff]
      %v2708 = vld [vmem:[#allocation2 + $0x20] sm:$0xff]
      %2713 = vrot.lane.b32.xlu0 %v2705, 87
      %v2714 = vpop.permute.xlu0 %2713
      %2715 = vrot.lane.b32.xlu0 %v2706, 87
      %v2716 = vpop.permute.xlu0 %2715
      %2717 = vrot.lane.b32.xlu0 %v2707, 87
      %v2718 = vpop.permute.xlu0 %2717
      %2719 = vrot.lane.b32.xlu0 %v2708, 87
      %v2720 = vpop.permute.xlu0 %2719
      %v2721 = vrot.slane %v2714, 4
      %v2722 = vrot.slane %v2716, 4
      %v2723 = vrot.slane %v2718, 4
      %v2724 = vrot.slane %v2720, 4
      %v2725 = vsel %vm361, %v2721, %v2722
      %v2726 = vsel %vm1141, %v2714, %v2725
      %v2727 = vsel %vm1141, %v2716, %v2722
      %v2728 = vsel %vm361, %v2723, %v2724
      %v2729 = vsel %vm1141, %v2718, %v2728
      %v2730 = vsel %vm1141, %v2720, %v2724
      %2735 = vst [vmem:[#allocation3 + $0x228] sm:$0xff] %v2726
      %2736 = vst [vmem:[#allocation3 + $0x230] sm:$0xf] %v2727
      %2737 = vst [vmem:[#allocation3 + $0x234] sm:$0xff] %v2729
      %2738 = vst [vmem:[#allocation3 + $0x23c] sm:$0xf] %v2730
      %v2739 = vld [vmem:[#allocation2 + $0x4] sm:$0xff]
      %v2740 = vld [vmem:[#allocation2 + $0xc] sm:$0xff]
      %v2741 = vld [vmem:[#allocation2 + $0x18] sm:$0xff]
      %v2742 = vld [vmem:[#allocation2 + $0x20] sm:$0xff]
      %2747 = vrot.lane.b32.xlu0 %v2739, 86
      %v2748 = vpop.permute.xlu0 %2747
      %2749 = vrot.lane.b32.xlu0 %v2740, 86
      %v2750 = vpop.permute.xlu0 %2749
      %2751 = vrot.lane.b32.xlu0 %v2741, 86
      %v2752 = vpop.permute.xlu0 %2751
      %2753 = vrot.lane.b32.xlu0 %v2742, 86
      %v2754 = vpop.permute.xlu0 %2753
      %v2755 = vrot.slane %v2748, 4
      %v2756 = vrot.slane %v2750, 4
      %v2757 = vrot.slane %v2752, 4
      %v2758 = vrot.slane %v2754, 4
      %v2759 = vsel %vm361, %v2755, %v2756
      %v2760 = vsel %vm1176, %v2748, %v2759
      %v2761 = vsel %vm1176, %v2750, %v2756
      %v2762 = vsel %vm361, %v2757, %v2758
      %v2763 = vsel %vm1176, %v2752, %v2762
      %v2764 = vsel %vm1176, %v2754, %v2758
      %2769 = vst [vmem:[#allocation3 + $0x240] sm:$0xff] %v2760
      %2770 = vst [vmem:[#allocation3 + $0x248] sm:$0xf] %v2761
      %2771 = vst [vmem:[#allocation3 + $0x24c] sm:$0xff] %v2763
      %2772 = vst [vmem:[#allocation3 + $0x254] sm:$0xf] %v2764
      %v2773 = vld [vmem:[%s3] sm:$0xff]
      %v2774 = vld [vmem:[%s3 + $0x8] sm:$0xff]
      %v2775 = vld [vmem:[%s3 + $0x10] sm:$0xff]
      %v2776 = vld [vmem:[%s3 + $0x18] sm:$0xff]
      %v2777 = vld [vmem:[#allocation3] sm:$0xff]
      %v2778 = vld [vmem:[#allocation3 + $0x8] sm:$0xf]
      %v2779 = vld [vmem:[#allocation3 + $0xc] sm:$0xff]
      %v2780 = vld [vmem:[#allocation3 + $0x14] sm:$0xf]
      %v2781 = vld [vmem:[#allocation3 + $0x18] sm:$0xff]
      %v2782 = vld [vmem:[#allocation3 + $0x20] sm:$0xf]
      %v2783 = vld [vmem:[#allocation3 + $0x24] sm:$0xff]
      %v2784 = vld [vmem:[#allocation3 + $0x2c] sm:$0xf]
      %v2785 = vld [vmem:[#allocation3 + $0x30] sm:$0xff]
      %v2786 = vld [vmem:[#allocation3 + $0x38] sm:$0xf]
      %v2787 = vld [vmem:[#allocation3 + $0x3c] sm:$0xff]
      %v2788 = vld [vmem:[#allocation3 + $0x44] sm:$0xf]
      %v2789 = vld [vmem:[#allocation3 + $0x48] sm:$0xff]
      %v2790 = vld [vmem:[#allocation3 + $0x50] sm:$0xf]
      %v2791 = vld [vmem:[#allocation3 + $0x54] sm:$0xff]
      %v2792 = vld [vmem:[#allocation3 + $0x5c] sm:$0xf]
      %v2793 = vld [vmem:[#allocation3 + $0x60] sm:$0xff]
      %v2794 = vld [vmem:[#allocation3 + $0x68] sm:$0xf]
      %v2795 = vld [vmem:[#allocation3 + $0x6c] sm:$0xff]
      %v2796 = vld [vmem:[#allocation3 + $0x74] sm:$0xf]
      %v2797 = vld [vmem:[#allocation3 + $0x78] sm:$0xff]
      %v2798 = vld [vmem:[#allocation3 + $0x80] sm:$0xf]
      %v2799 = vld [vmem:[#allocation3 + $0x84] sm:$0xff]
      %v2800 = vld [vmem:[#allocation3 + $0x8c] sm:$0xf]
      %v2801 = vld [vmem:[#allocation3 + $0x90] sm:$0xff]
      %v2802 = vld [vmem:[#allocation3 + $0x98] sm:$0xf]
      %v2803 = vld [vmem:[#allocation3 + $0x9c] sm:$0xff]
      %v2804 = vld [vmem:[#allocation3 + $0xa4] sm:$0xf]
      %v2805 = vld [vmem:[#allocation3 + $0xa8] sm:$0xff]
      %v2806 = vld [vmem:[#allocation3 + $0xb0] sm:$0xf]
      %v2807 = vld [vmem:[#allocation3 + $0xb4] sm:$0xff]
      %v2808 = vld [vmem:[#allocation3 + $0xbc] sm:$0xf]
      %v2809 = vld [vmem:[#allocation3 + $0xc0] sm:$0xff]
      %v2810 = vld [vmem:[#allocation3 + $0xc8] sm:$0xf]
      %v2811 = vld [vmem:[#allocation3 + $0xcc] sm:$0xff]
      %v2812 = vld [vmem:[#allocation3 + $0xd4] sm:$0xf]
      %v2813 = vld [vmem:[#allocation3 + $0xd8] sm:$0xff]
      %v2814 = vld [vmem:[#allocation3 + $0xe0] sm:$0xf]
      %v2815 = vld [vmem:[#allocation3 + $0xe4] sm:$0xff]
      %v2816 = vld [vmem:[#allocation3 + $0xec] sm:$0xf]
      %v2817 = vld [vmem:[#allocation3 + $0xf0] sm:$0xff]
      %v2818 = vld [vmem:[#allocation3 + $0xf8] sm:$0xf]
      %v2819 = vld [vmem:[#allocation3 + $0xfc] sm:$0xff]
      %v2820 = vld [vmem:[#allocation3 + $0x104] sm:$0xf]
      %v2821 = vld [vmem:[#allocation3 + $0x108] sm:$0xff]
      %v2822 = vld [vmem:[#allocation3 + $0x110] sm:$0xf]
      %v2823 = vld [vmem:[#allocation3 + $0x114] sm:$0xff]
      %v2824 = vld [vmem:[#allocation3 + $0x11c] sm:$0xf]
      %v2825 = vld [vmem:[#allocation3 + $0x120] sm:$0xff]
      %v2826 = vld [vmem:[#allocation3 + $0x128] sm:$0xf]
      %v2827 = vld [vmem:[#allocation3 + $0x12c] sm:$0xff]
      %v2828 = vld [vmem:[#allocation3 + $0x134] sm:$0xf]
      %v2829 = vld [vmem:[#allocation3 + $0x138] sm:$0xff]
      %v2830 = vld [vmem:[#allocation3 + $0x140] sm:$0xf]
      %v2831 = vld [vmem:[#allocation3 + $0x144] sm:$0xff]
      %v2832 = vld [vmem:[#allocation3 + $0x14c] sm:$0xf]
      %v2833 = vld [vmem:[#allocation3 + $0x150] sm:$0xff]
      %v2834 = vld [vmem:[#allocation3 + $0x158] sm:$0xf]
      %v2835 = vld [vmem:[#allocation3 + $0x15c] sm:$0xff]
      %v2836 = vld [vmem:[#allocation3 + $0x164] sm:$0xf]
      %v2837 = vld [vmem:[#allocation3 + $0x168] sm:$0xff]
      %v2838 = vld [vmem:[#allocation3 + $0x170] sm:$0xf]
      %v2839 = vld [vmem:[#allocation3 + $0x174] sm:$0xff]
      %v2840 = vld [vmem:[#allocation3 + $0x17c] sm:$0xf]
      %v2841 = vld [vmem:[#allocation3 + $0x180] sm:$0xff]
      %v2842 = vld [vmem:[#allocation3 + $0x188] sm:$0xf]
      %v2843 = vld [vmem:[#allocation3 + $0x18c] sm:$0xff]
      %v2844 = vld [vmem:[#allocation3 + $0x194] sm:$0xf]
      %v2845 = vld [vmem:[#allocation3 + $0x198] sm:$0xff]
      %v2846 = vld [vmem:[#allocation3 + $0x1a0] sm:$0xf]
      %v2847 = vld [vmem:[#allocation3 + $0x1a4] sm:$0xff]
      %v2848 = vld [vmem:[#allocation3 + $0x1ac] sm:$0xf]
      %v2849 = vld [vmem:[#allocation3 + $0x1b0] sm:$0xff]
      %v2850 = vld [vmem:[#allocation3 + $0x1b8] sm:$0xf]
      %v2851 = vld [vmem:[#allocation3 + $0x1bc] sm:$0xff]
      %v2852 = vld [vmem:[#allocation3 + $0x1c4] sm:$0xf]
      %v2853 = vld [vmem:[#allocation3 + $0x1c8] sm:$0xff]
      %v2854 = vld [vmem:[#allocation3 + $0x1d0] sm:$0xf]
      %v2855 = vld [vmem:[#allocation3 + $0x1d4] sm:$0xff]
      %v2856 = vld [vmem:[#allocation3 + $0x1dc] sm:$0xf]
      %v2857 = vld [vmem:[#allocation3 + $0x1e0] sm:$0xff]
      %v2858 = vld [vmem:[#allocation3 + $0x1e8] sm:$0xf]
      %v2859 = vld [vmem:[#allocation3 + $0x1ec] sm:$0xff]
      %v2860 = vld [vmem:[#allocation3 + $0x1f4] sm:$0xf]
      %v2861 = vld [vmem:[#allocation3 + $0x1f8] sm:$0xff]
      %v2862 = vld [vmem:[#allocation3 + $0x200] sm:$0xf]
      %v2863 = vld [vmem:[#allocation3 + $0x204] sm:$0xff]
      %v2864 = vld [vmem:[#allocation3 + $0x20c] sm:$0xf]
      %v2865 = vld [vmem:[#allocation3 + $0x210] sm:$0xff]
      %v2866 = vld [vmem:[#allocation3 + $0x218] sm:$0xf]
      %v2867 = vld [vmem:[#allocation3 + $0x21c] sm:$0xff]
      %v2868 = vld [vmem:[#allocation3 + $0x224] sm:$0xf]
      %v2869 = vld [vmem:[#allocation3 + $0x228] sm:$0xff]
      %v2870 = vld [vmem:[#allocation3 + $0x230] sm:$0xf]
      %v2871 = vld [vmem:[#allocation3 + $0x234] sm:$0xff]
      %v2872 = vld [vmem:[#allocation3 + $0x23c] sm:$0xf]
      %v2873 = vld [vmem:[#allocation3 + $0x240] sm:$0xff]
      %v2874 = vld [vmem:[#allocation3 + $0x248] sm:$0xf]
      %v2875 = vld [vmem:[#allocation3 + $0x24c] sm:$0xff]
      %v2876 = vld [vmem:[#allocation3 + $0x254] sm:$0xf]
      %v2877 = vld [vmem:[%s4] sm:$0xff]
      %v2878 = vld [vmem:[%s4 + $0x8] sm:$0xff]
      %2880 = vset.pattern.permute.xlu0 0
      %2881 = vperm.xlu0 %2880, %v2877
      %v2882 = vpop.permute.xlu0 %2881
      %2885 = vset.pattern.permute.xlu0 0
      %2886 = vperm.xlu0 %2885, %v2878
      %v2887 = vpop.permute.xlu0 %2886
      %v2893 = vunpack.c.l.b16 %v2773
      %v2894 = vunpack.c.h.b16 %v2773
      %v2895 = vunpack.c.l.b16 %v2774
      %v2896 = vunpack.c.h.b16 %v2774
      %v2897 = vunpack.c.l.b16 %v2775
      %v2898 = vunpack.c.h.b16 %v2775
      %v2899 = vunpack.c.l.b16 %v2776
      %v2900 = vunpack.c.h.b16 %v2776
      %v2901 = vpack.c.b16 %v2897, %v2893
      %v2902 = vpack.c.b16 %v2898, %v2894
      %v2903 = vpack.c.b16 %v2899, %v2895
      %v2904 = vpack.c.b16 %v2900, %v2896
      %v3008 = vunpack.c.l.b16 %v2777
      %v3009 = vunpack.c.h.b16 %v2777
      %v3010 = vunpack.c.l.b16 %v2778
      %v3011 = vunpack.c.l.b16 %v2779
      %v3012 = vunpack.c.h.b16 %v2779
      %v3013 = vunpack.c.l.b16 %v2780
      %v3014 = vunpack.c.l.b16 %v2781
      %v3015 = vunpack.c.h.b16 %v2781
      %v3016 = vunpack.c.l.b16 %v2782
      %v3017 = vunpack.c.l.b16 %v2783
      %v3018 = vunpack.c.h.b16 %v2783
      %v3019 = vunpack.c.l.b16 %v2784
      %v3020 = vunpack.c.l.b16 %v2785
      %v3021 = vunpack.c.h.b16 %v2785
      %v3022 = vunpack.c.l.b16 %v2786
      %v3023 = vunpack.c.l.b16 %v2787
      %v3024 = vunpack.c.h.b16 %v2787
      %v3025 = vunpack.c.l.b16 %v2788
      %v3026 = vunpack.c.l.b16 %v2789
      %v3027 = vunpack.c.h.b16 %v2789
      %v3028 = vunpack.c.l.b16 %v2790
      %v3029 = vunpack.c.l.b16 %v2791
      %v3030 = vunpack.c.h.b16 %v2791
      %v3031 = vunpack.c.l.b16 %v2792
      %v3032 = vunpack.c.l.b16 %v2793
      %v3033 = vunpack.c.h.b16 %v2793
      %v3034 = vunpack.c.l.b16 %v2794
      %v3035 = vunpack.c.l.b16 %v2795
      %v3036 = vunpack.c.h.b16 %v2795
      %v3037 = vunpack.c.l.b16 %v2796
      %v3038 = vunpack.c.l.b16 %v2797
      %v3039 = vunpack.c.h.b16 %v2797
      %v3040 = vunpack.c.l.b16 %v2798
      %v3041 = vunpack.c.l.b16 %v2799
      %v3042 = vunpack.c.h.b16 %v2799
      %v3043 = vunpack.c.l.b16 %v2800
      %v3044 = vunpack.c.l.b16 %v2801
      %v3045 = vunpack.c.h.b16 %v2801
      %v3046 = vunpack.c.l.b16 %v2802
      %v3047 = vunpack.c.l.b16 %v2803
      %v3048 = vunpack.c.h.b16 %v2803
      %v3049 = vunpack.c.l.b16 %v2804
      %v3050 = vunpack.c.l.b16 %v2805
      %v3051 = vunpack.c.h.b16 %v2805
      %v3052 = vunpack.c.l.b16 %v2806
      %v3053 = vunpack.c.l.b16 %v2807
      %v3054 = vunpack.c.h.b16 %v2807
      %v3055 = vunpack.c.l.b16 %v2808
      %v3056 = vunpack.c.l.b16 %v2809
      %v3057 = vunpack.c.h.b16 %v2809
      %v3058 = vunpack.c.l.b16 %v2810
      %v3059 = vunpack.c.l.b16 %v2811
      %v3060 = vunpack.c.h.b16 %v2811
      %v3061 = vunpack.c.l.b16 %v2812
      %v3062 = vunpack.c.l.b16 %v2813
      %v3063 = vunpack.c.h.b16 %v2813
      %v3064 = vunpack.c.l.b16 %v2814
      %v3065 = vunpack.c.l.b16 %v2815
      %v3066 = vunpack.c.h.b16 %v2815
      %v3067 = vunpack.c.l.b16 %v2816
      %v3068 = vunpack.c.l.b16 %v2817
      %v3069 = vunpack.c.h.b16 %v2817
      %v3070 = vunpack.c.l.b16 %v2818
      %v3071 = vunpack.c.l.b16 %v2819
      %v3072 = vunpack.c.h.b16 %v2819
      %v3073 = vunpack.c.l.b16 %v2820
      %v3074 = vunpack.c.l.b16 %v2821
      %v3075 = vunpack.c.h.b16 %v2821
      %v3076 = vunpack.c.l.b16 %v2822
      %v3077 = vunpack.c.l.b16 %v2823
      %v3078 = vunpack.c.h.b16 %v2823
      %v3079 = vunpack.c.l.b16 %v2824
      %v3080 = vunpack.c.l.b16 %v2825
      %v3081 = vunpack.c.h.b16 %v2825
      %v3082 = vunpack.c.l.b16 %v2826
      %v3083 = vunpack.c.l.b16 %v2827
      %v3084 = vunpack.c.h.b16 %v2827
      %v3085 = vunpack.c.l.b16 %v2828
      %v3086 = vunpack.c.l.b16 %v2829
      %v3087 = vunpack.c.h.b16 %v2829
      %v3088 = vunpack.c.l.b16 %v2830
      %v3089 = vunpack.c.l.b16 %v2831
      %v3090 = vunpack.c.h.b16 %v2831
      %v3091 = vunpack.c.l.b16 %v2832
      %v3092 = vunpack.c.l.b16 %v2833
      %v3093 = vunpack.c.h.b16 %v2833
      %v3094 = vunpack.c.l.b16 %v2834
      %v3095 = vunpack.c.l.b16 %v2835
      %v3096 = vunpack.c.h.b16 %v2835
      %v3097 = vunpack.c.l.b16 %v2836
      %v3098 = vunpack.c.l.b16 %v2837
      %v3099 = vunpack.c.h.b16 %v2837
      %v3100 = vunpack.c.l.b16 %v2838
      %v3101 = vunpack.c.l.b16 %v2839
      %v3102 = vunpack.c.h.b16 %v2839
      %v3103 = vunpack.c.l.b16 %v2840
      %v3104 = vunpack.c.l.b16 %v2841
      %v3105 = vunpack.c.h.b16 %v2841
      %v3106 = vunpack.c.l.b16 %v2842
      %v3107 = vunpack.c.l.b16 %v2843
      %v3108 = vunpack.c.h.b16 %v2843
      %v3109 = vunpack.c.l.b16 %v2844
      %v3110 = vunpack.c.l.b16 %v2845
      %v3111 = vunpack.c.h.b16 %v2845
      %v3112 = vunpack.c.l.b16 %v2846
      %v3113 = vunpack.c.l.b16 %v2847
      %v3114 = vunpack.c.h.b16 %v2847
      %v3115 = vunpack.c.l.b16 %v2848
      %v3116 = vunpack.c.l.b16 %v2849
      %v3117 = vunpack.c.h.b16 %v2849
      %v3118 = vunpack.c.l.b16 %v2850
      %v3119 = vunpack.c.l.b16 %v2851
      %v3120 = vunpack.c.h.b16 %v2851
      %v3121 = vunpack.c.l.b16 %v2852
      %v3122 = vunpack.c.l.b16 %v2853
      %v3123 = vunpack.c.h.b16 %v2853
      %v3124 = vunpack.c.l.b16 %v2854
      %v3125 = vunpack.c.l.b16 %v2855
      %v3126 = vunpack.c.h.b16 %v2855
      %v3127 = vunpack.c.l.b16 %v2856
      %v3128 = vunpack.c.l.b16 %v2857
      %v3129 = vunpack.c.h.b16 %v2857
      %v3130 = vunpack.c.l.b16 %v2858
      %v3131 = vunpack.c.l.b16 %v2859
      %v3132 = vunpack.c.h.b16 %v2859
      %v3133 = vunpack.c.l.b16 %v2860
      %v3134 = vunpack.c.l.b16 %v2861
      %v3135 = vunpack.c.h.b16 %v2861
      %v3136 = vunpack.c.l.b16 %v2862
      %v3137 = vunpack.c.l.b16 %v2863
      %v3138 = vunpack.c.h.b16 %v2863
      %v3139 = vunpack.c.l.b16 %v2864
      %v3140 = vunpack.c.l.b16 %v2865
      %v3141 = vunpack.c.h.b16 %v2865
      %v3142 = vunpack.c.l.b16 %v2866
      %v3143 = vunpack.c.l.b16 %v2867
      %v3144 = vunpack.c.h.b16 %v2867
      %v3145 = vunpack.c.l.b16 %v2868
      %v3146 = vunpack.c.l.b16 %v2869
      %v3147 = vunpack.c.h.b16 %v2869
      %v3148 = vunpack.c.l.b16 %v2870
      %v3149 = vunpack.c.l.b16 %v2871
      %v3150 = vunpack.c.h.b16 %v2871
      %v3151 = vunpack.c.l.b16 %v2872
      %v3152 = vunpack.c.l.b16 %v2873
      %v3153 = vunpack.c.h.b16 %v2873
      %v3154 = vunpack.c.l.b16 %v2874
      %v3155 = vunpack.c.l.b16 %v2875
      %v3156 = vunpack.c.h.b16 %v2875
      %v3157 = vunpack.c.l.b16 %v2876
      %v3158 = vpack.c.b16 %v3011, %v3008
      %v3159 = vpack.c.b16 %v3012, %v3009
      %v3160 = vpack.c.b16 %v3013, %v3010
      %v3161 = vpack.c.b16 %v3017, %v3014
      %v3162 = vpack.c.b16 %v3018, %v3015
      %v3163 = vpack.c.b16 %v3019, %v3016
      %v3164 = vpack.c.b16 %v3023, %v3020
      %v3165 = vpack.c.b16 %v3024, %v3021
      %v3166 = vpack.c.b16 %v3025, %v3022
      %v3167 = vpack.c.b16 %v3029, %v3026
      %v3168 = vpack.c.b16 %v3030, %v3027
      %v3169 = vpack.c.b16 %v3031, %v3028
      %v3170 = vpack.c.b16 %v3035, %v3032
      %v3171 = vpack.c.b16 %v3036, %v3033
      %v3172 = vpack.c.b16 %v3037, %v3034
      %v3173 = vpack.c.b16 %v3041, %v3038
      %v3174 = vpack.c.b16 %v3042, %v3039
      %v3175 = vpack.c.b16 %v3043, %v3040
      %v3176 = vpack.c.b16 %v3047, %v3044
      %v3177 = vpack.c.b16 %v3048, %v3045
      %v3178 = vpack.c.b16 %v3049, %v3046
      %v3179 = vpack.c.b16 %v3053, %v3050
      %v3180 = vpack.c.b16 %v3054, %v3051
      %v3181 = vpack.c.b16 %v3055, %v3052
      %v3182 = vpack.c.b16 %v3059, %v3056
      %v3183 = vpack.c.b16 %v3060, %v3057
      %v3184 = vpack.c.b16 %v3061, %v3058
      %v3185 = vpack.c.b16 %v3065, %v3062
      %v3186 = vpack.c.b16 %v3066, %v3063
      %v3187 = vpack.c.b16 %v3067, %v3064
      %v3188 = vpack.c.b16 %v3071, %v3068
      %v3189 = vpack.c.b16 %v3072, %v3069
      %v3190 = vpack.c.b16 %v3073, %v3070
      %v3191 = vpack.c.b16 %v3077, %v3074
      %v3192 = vpack.c.b16 %v3078, %v3075
      %v3193 = vpack.c.b16 %v3079, %v3076
      %v3194 = vpack.c.b16 %v3083, %v3080
      %v3195 = vpack.c.b16 %v3084, %v3081
      %v3196 = vpack.c.b16 %v3085, %v3082
      %v3197 = vpack.c.b16 %v3089, %v3086
      %v3198 = vpack.c.b16 %v3090, %v3087
      %v3199 = vpack.c.b16 %v3091, %v3088
      %v3200 = vpack.c.b16 %v3095, %v3092
      %v3201 = vpack.c.b16 %v3096, %v3093
      %v3202 = vpack.c.b16 %v3097, %v3094
      %v3203 = vpack.c.b16 %v3101, %v3098
      %v3204 = vpack.c.b16 %v3102, %v3099
      %v3205 = vpack.c.b16 %v3103, %v3100
      %v3206 = vpack.c.b16 %v3107, %v3104
      %v3207 = vpack.c.b16 %v3108, %v3105
      %v3208 = vpack.c.b16 %v3109, %v3106
      %v3209 = vpack.c.b16 %v3113, %v3110
      %v3210 = vpack.c.b16 %v3114, %v3111
      %v3211 = vpack.c.b16 %v3115, %v3112
      %v3212 = vpack.c.b16 %v3119, %v3116
      %v3213 = vpack.c.b16 %v3120, %v3117
      %v3214 = vpack.c.b16 %v3121, %v3118
      %v3215 = vpack.c.b16 %v3125, %v3122
      %v3216 = vpack.c.b16 %v3126, %v3123
      %v3217 = vpack.c.b16 %v3127, %v3124
      %v3218 = vpack.c.b16 %v3131, %v3128
      %v3219 = vpack.c.b16 %v3132, %v3129
      %v3220 = vpack.c.b16 %v3133, %v3130
      %v3221 = vpack.c.b16 %v3137, %v3134
      %v3222 = vpack.c.b16 %v3138, %v3135
      %v3223 = vpack.c.b16 %v3139, %v3136
      %v3224 = vpack.c.b16 %v3143, %v3140
      %v3225 = vpack.c.b16 %v3144, %v3141
      %v3226 = vpack.c.b16 %v3145, %v3142
      %v3227 = vpack.c.b16 %v3149, %v3146
      %v3228 = vpack.c.b16 %v3150, %v3147
      %v3229 = vpack.c.b16 %v3151, %v3148
      %v3230 = vpack.c.b16 %v3155, %v3152
      %v3231 = vpack.c.b16 %v3156, %v3153
      %v3232 = vpack.c.b16 %v3157, %v3154
      %v3309 = vsel %vm1725, %v2904, 0
      %3311 = vmatprep.subr.bf16.mxu0 %v3180
      %3312 = vmatpush1.bf16.msra.mxu0 %v3179
      %3313 = vmatprep.subr.bf16.mxu0 %v3177
      %3314 = vmatpush1.bf16.msra.mxu0 %v3176
      %3315 = vmatprep.subr.bf16.mxu0 %v3174
      %3316 = vmatpush1.bf16.msra.mxu0 %v3173
      %3317 = vmatprep.subr.bf16.mxu0 %v3171
      %3318 = vmatpush1.bf16.msra.mxu0 %v3170
      %3319 = vmatprep.subr.bf16.mxu0 %v3168
      %3320 = vmatpush1.bf16.msra.mxu0 %v3167
      %3321 = vmatprep.subr.bf16.mxu0 %v3165
      %3322 = vmatpush1.bf16.msra.mxu0 %v3164
      %3323 = vmatprep.subr.bf16.mxu0 %v3162
      %3324 = vmatpush1.bf16.msra.mxu0 %v3161
      %3325 = vmatprep.subr.bf16.mxu0 %v3159
      %3326 = vmatpush1.bf16.msra.mxu0 %v3158
      %3327 = vmatprep.subr.bf16.mxu0 %v3204
      %3328 = vmatpush2.bf16.msra.mxu0 %v3203
      %3329 = vmatprep.subr.bf16.mxu0 %v3201
      %3330 = vmatpush2.bf16.msra.mxu0 %v3200
      %3331 = vmatprep.subr.bf16.mxu0 %v3198
      %3332 = vmatpush2.bf16.msra.mxu0 %v3197
      %3333 = vmatprep.subr.bf16.mxu0 %v3195
      %3334 = vmatpush2.bf16.msra.mxu0 %v3194
      %3335 = vmatprep.subr.bf16.mxu0 %v3192
      %3336 = vmatpush2.bf16.msra.mxu0 %v3191
      %3337 = vmatprep.subr.bf16.mxu0 %v3189
      %3338 = vmatpush2.bf16.msra.mxu0 %v3188
      %3339 = vmatprep.subr.bf16.mxu0 %v3186
      %3340 = vmatpush2.bf16.msra.mxu0 %v3185
      %3341 = vmatprep.subr.bf16.mxu0 %v3183
      %3342 = vmatpush2.bf16.msra.mxu0 %v3182
      %3343 = vmatprep.mubr.bf16.mxu0 %v2902
      %3344 = vmatmul.mubr.bf16.gmra.mxu0 %v2901
      %v3345 = vpop.f32.mrf.mxu0
      %v3346 = vadd.f32 %v2882, %v3345
      %v3347 = vpop.f32.mrf.mxu0
      %v3348 = vadd.f32 %v2882, %v3347
      %v3349 = vpop.f32.mrf.mxu0
      %v3350 = vadd.f32 %v2887, %v3349
      %v3351 = vpop.f32.mrf.mxu0
      %v3352 = vadd.f32 %v2887, %v3351
      %3353 = vdwg.mxu0
      %3354 = vmatprep.subr.bf16.mxu0 %v3228
      %3355 = vmatpush1.bf16.msra.mxu0 %v3227
      %3356 = vmatprep.subr.bf16.mxu0 %v3225
      %3357 = vmatpush1.bf16.msra.mxu0 %v3224
      %3358 = vmatprep.subr.bf16.mxu0 %v3222
      %3359 = vmatpush1.bf16.msra.mxu0 %v3221
      %3360 = vmatprep.subr.bf16.mxu0 %v3219
      %3361 = vmatpush1.bf16.msra.mxu0 %v3218
      %3362 = vmatprep.subr.bf16.mxu0 %v3216
      %3363 = vmatpush1.bf16.msra.mxu0 %v3215
      %3364 = vmatprep.subr.bf16.mxu0 %v3213
      %3365 = vmatpush1.bf16.msra.mxu0 %v3212
      %3366 = vmatprep.subr.bf16.mxu0 %v3210
      %3367 = vmatpush1.bf16.msra.mxu0 %v3209
      %3368 = vmatprep.subr.bf16.mxu0 %v3207
      %3369 = vmatpush1.bf16.msra.mxu0 %v3206
      %3370 = vmatprep.subr.bf16.mxu0 0
      %3371 = vmatpush2.bf16.msra.mxu0 0
      %3372 = vmatprep.subr.bf16.mxu0 0
      %3373 = vmatpush2.bf16.msra.mxu0 0
      %3374 = vmatprep.subr.bf16.mxu0 0
      %3375 = vmatpush2.bf16.msra.mxu0 0
      %3376 = vmatprep.subr.bf16.mxu0 0
      %3377 = vmatpush2.bf16.msra.mxu0 0
      %3378 = vmatprep.subr.bf16.mxu0 0
      %3379 = vmatpush2.bf16.msra.mxu0 0
      %3380 = vmatprep.subr.bf16.mxu0 0
      %3381 = vmatpush2.bf16.msra.mxu0 0
      %3382 = vmatprep.subr.bf16.mxu0 0
      %3383 = vmatpush2.bf16.msra.mxu0 0
      %3384 = vmatprep.subr.bf16.mxu0 %v3231
      %3385 = vmatpush2.bf16.msra.mxu0 %v3230
      %3386 = vmatprep.mubr.bf16.mxu0 %v3309
      %3387 = vmatmul.mubr.bf16.gmra.mxu0 %v2903
      %v3388 = vpop.f32.mrf.mxu0
      %v3389 = vadd.f32 %v3346, %v3388
      %v3390 = vpop.f32.mrf.mxu0
      %v3391 = vadd.f32 %v3348, %v3390
      %v3392 = vpop.f32.mrf.mxu0
      %v3393 = vadd.f32 %v3350, %v3392
      %v3394 = vpop.f32.mrf.mxu0
      %v3395 = vadd.f32 %v3352, %v3394
      %3396 = vdwg.mxu0
      %3397 = vmatprep.subr.bf16.mxu0 0
      %3398 = vmatpush1.bf16.msra.mxu0 %v3181
      %3399 = vmatprep.subr.bf16.mxu0 0
      %3400 = vmatpush1.bf16.msra.mxu0 %v3178
      %3401 = vmatprep.subr.bf16.mxu0 0
      %3402 = vmatpush1.bf16.msra.mxu0 %v3175
      %3403 = vmatprep.subr.bf16.mxu0 0
      %3404 = vmatpush1.bf16.msra.mxu0 %v3172
      %3405 = vmatprep.subr.bf16.mxu0 0
      %3406 = vmatpush1.bf16.msra.mxu0 %v3169
      %3407 = vmatprep.subr.bf16.mxu0 0
      %3408 = vmatpush1.bf16.msra.mxu0 %v3166
      %3409 = vmatprep.subr.bf16.mxu0 0
      %3410 = vmatpush1.bf16.msra.mxu0 %v3163
      %3411 = vmatprep.subr.bf16.mxu0 0
      %3412 = vmatpush1.bf16.msra.mxu0 %v3160
      %3413 = vmatprep.subr.bf16.mxu0 0
      %3414 = vmatpush2.bf16.msra.mxu0 %v3205
      %3415 = vmatprep.subr.bf16.mxu0 0
      %3416 = vmatpush2.bf16.msra.mxu0 %v3202
      %3417 = vmatprep.subr.bf16.mxu0 0
      %3418 = vmatpush2.bf16.msra.mxu0 %v3199
      %3419 = vmatprep.subr.bf16.mxu0 0
      %3420 = vmatpush2.bf16.msra.mxu0 %v3196
      %3421 = vmatprep.subr.bf16.mxu0 0
      %3422 = vmatpush2.bf16.msra.mxu0 %v3193
      %3423 = vmatprep.subr.bf16.mxu0 0
      %3424 = vmatpush2.bf16.msra.mxu0 %v3190
      %3425 = vmatprep.subr.bf16.mxu0 0
      %3426 = vmatpush2.bf16.msra.mxu0 %v3187
      %3427 = vmatprep.subr.bf16.mxu0 0
      %3428 = vmatpush2.bf16.msra.mxu0 %v3184
      %3429 = vmatprep.mubr.bf16.mxu0 %v2902
      %3430 = vmatmul.mubr.bf16.gmra.mxu0 %v2901
      %v3431 = vpop.f32.mrf.mxu0
      %v3432 = vadd.f32 %v2882, %v3431
      %v3433 = vpop.f32.mrf.mxu0
      %v3434 = vpop.f32.mrf.mxu0
      %v3435 = vadd.f32 %v2887, %v3434
      %v3436 = vpop.f32.mrf.mxu0
      %3437 = vdwg.mxu0
      %3438 = vmatprep.subr.bf16.mxu0 0
      %3439 = vmatpush1.bf16.msra.mxu0 %v3229
      %3440 = vmatprep.subr.bf16.mxu0 0
      %3441 = vmatpush1.bf16.msra.mxu0 %v3226
      %3442 = vmatprep.subr.bf16.mxu0 0
      %3443 = vmatpush1.bf16.msra.mxu0 %v3223
      %3444 = vmatprep.subr.bf16.mxu0 0
      %3445 = vmatpush1.bf16.msra.mxu0 %v3220
      %3446 = vmatprep.subr.bf16.mxu0 0
      %3447 = vmatpush1.bf16.msra.mxu0 %v3217
      %3448 = vmatprep.subr.bf16.mxu0 0
      %3449 = vmatpush1.bf16.msra.mxu0 %v3214
      %3450 = vmatprep.subr.bf16.mxu0 0
      %3451 = vmatpush1.bf16.msra.mxu0 %v3211
      %3452 = vmatprep.subr.bf16.mxu0 0
      %3453 = vmatpush1.bf16.msra.mxu0 %v3208
      %3454 = vmatprep.subr.bf16.mxu0 0
      %3455 = vmatpush2.bf16.msra.mxu0 0
      %3456 = vmatprep.subr.bf16.mxu0 0
      %3457 = vmatpush2.bf16.msra.mxu0 0
      %3458 = vmatprep.subr.bf16.mxu0 0
      %3459 = vmatpush2.bf16.msra.mxu0 0
      %3460 = vmatprep.subr.bf16.mxu0 0
      %3461 = vmatpush2.bf16.msra.mxu0 0
      %3462 = vmatprep.subr.bf16.mxu0 0
      %3463 = vmatpush2.bf16.msra.mxu0 0
      %3464 = vmatprep.subr.bf16.mxu0 0
      %3465 = vmatpush2.bf16.msra.mxu0 0
      %3466 = vmatprep.subr.bf16.mxu0 0
      %3467 = vmatpush2.bf16.msra.mxu0 0
      %3468 = vmatprep.subr.bf16.mxu0 0
      %3469 = vmatpush2.bf16.msra.mxu0 %v3232
      %3470 = vmatprep.mubr.bf16.mxu0 %v3309
      %3471 = vmatmul.mubr.bf16.gmra.mxu0 %v2903
      %v3472 = vpop.f32.mrf.mxu0
      %v3473 = vadd.f32 %v3432, %v3472
      %v3474 = vpop.f32.mrf.mxu0
      %v3475 = vpop.f32.mrf.mxu0
      %v3476 = vadd.f32 %v3435, %v3475
      %v3477 = vpop.f32.mrf.mxu0
      %3478 = vdwg.mxu0
      %v3479 = vmax.f32 %v3389, 0.0
      %v3480 = vmax.f32 %v3391, 0.0
      %v3481 = vmax.f32 %v3473, 0.0
      %v3482 = vmax.f32 %v3393, 0.0
      %v3483 = vmax.f32 %v3395, 0.0
      %v3484 = vmax.f32 %v3476, 0.0
      %v3485 = vadd.f32 %v3479, %v310
      %v3486 = vadd.f32 %v3480, %v311
      %v3487 = vadd.f32 %v3481, %v312
      %v3488 = vadd.f32 %v3482, %v313
      %v3489 = vadd.f32 %v3483, %v314
      %v3490 = vadd.f32 %v3484, %v315
      %v3491 = vmax.f32 %v3485, 0.0
      %v3492 = vmax.f32 %v3486, 0.0
      %v3493 = vmax.f32 %v3487, 0.0
      %v3494 = vmax.f32 %v3488, 0.0
      %v3495 = vmax.f32 %v3489, 0.0
      %v3496 = vmax.f32 %v3490, 0.0
      %3497 = vst [vmem:[%s304] sm:$0xff] %v3491
      %3498 = vst [vmem:[%s304 + $0x8] sm:$0xff] %v3492
      %3499 = vst [vmem:[%s304 + $0x10] sm:$0xff] %v3493
      %3500 = vst [vmem:[%s304 + $0x18] sm:$0xff] %v3494
      %3501 = vst [vmem:[%s304 + $0x20] sm:$0xff] %v3495
      %3502 = vst [vmem:[%s304 + $0x28] sm:$0xff] %v3496
      %p3503 = scmp.lt.s32.totalorder %s21, 1
      %s3504 = scalar_select %p3503, %s21, 1
      %p3505 = scmp.lt.s32.totalorder %s22, 2
      %s3506 = scalar_select %p3505, %s22, 2
      %s3507 = smul.addr %s3506, 6
      %s3508 = smul.addr %s3504, 18
      %s3509 = sadd.s32 %s3507, %s3508
      %s3510 = smul.addr %s3509, 8
      %s3511 = scalar_lea.vmem %s6, %s3510
      // Predicated region
      $region45: #{conv2d_resblock.1} parent=43 // pred_check
        %p3512 = pneg %p187
      $region46: #{conv2d_resblock.1} parent=43 // pred_check_branch
        %3514 = sbr.rel (%p3512) target = $region48
      $region47: #{conv2d_resblock.1} parent=43 // pred_region
        _
      $region48: #{conv2d_resblock.1} parent=43 // pred_fallthru
        _
    $region44: #{conv2d_resblock.1} parent=5 // pred_fallthru
      _
    %p3515 = scmp.le.s32.totalorder 2, %s12
    // Predicated region
    $region49: #{conv2d_resblock.1} parent=5 // pred_check
      %p3516 = pneg %p3515
    $region50: #{conv2d_resblock.1} parent=5 // pred_check_branch
      %3518 = sbr.rel (%p3516) target = $region52
    $region51: #{conv2d_resblock.1} parent=5 // pred_region
      %s3519 = ssub.s32 %s12, 2
      // Predicated region
      $region53: #{conv2d_resblock.1} parent=51 // pred_check
        %p3520 = pneg %p193
      $region54: #{conv2d_resblock.1} parent=51 // pred_check_branch
        %3522 = sbr.rel (%p3520) target = $region56
      $region55: #{conv2d_resblock.1} parent=51 // pred_region
        %p3523 = scmp.lt.s32.totalorder %s23, 1
        %s3524 = scalar_select %p3523, %s23, 1
        %p3525 = scmp.lt.s32.totalorder %s24, 2
        %s3526 = scalar_select %p3525, %s24, 2
        %s3527 = smul.addr %s3526, 6
        %s3528 = smul.addr %s3524, 18
        %s3529 = sadd.s32 %s3527, %s3528
        %s3530 = smul.addr %s3529, 8
        %s3531 = scalar_lea.vmem %s6, %s3530
      $region56: #{conv2d_resblock.1} parent=51 // pred_fallthru
        _
    $region52: #{conv2d_resblock.1} parent=5 // pred_fallthru
      _
  $region6: #{conv2d_resblock.1} parent=0 // loop_footer
    %s16 = sadd.s32 1, %s12
  $region7: #{conv2d_resblock.1} parent=0 // loop_footer_branch
    %11 = sbr.rel target = $region3
  $region8: #{conv2d_resblock.1} parent=0 // loop_exit
    _

</llo_original>
